<compile_context>
chip_gen: v7x
topology: tpu7x:2x2x1
jax: 0.10.0
libtpu: 0.0.40
codegen_flags: <defaults>
</compile_context>

<pallas_src>
import jax
import jax.numpy as jnp
from jax.experimental import pallas as pl
from jax.experimental.pallas import tpu as pltpu

TEMP = 0.66  # digit temperature from the module; not used in the decoder math

_S = 49          # 7*7 spatial positions of the conv-stage grid
_W = 7           # grid width
_L = 128         # padded lane extent holding the 49 spatial positions
_SHIFTS = tuple((dm, dn) for dm in (-1, 0, 1) for dn in (-1, 0, 1))


# ------------------------- sub-pixel weight folding -------------------------
# ConvTranspose2d(k=4, s=2, p=1): output pixel (2*m + p) reads input m + d with
# kernel tap kh = -2*d + p + 1 (valid taps only).  Folding the tap selection
# into per-shift weight matrices turns each transposed conv into
#   out = sum_{(dm,dn)} shift(x, dm*7+dn) @ W[(dm,dn)]

def _tap_index(parity, d):
    if d == 0:
        return parity + 1
    if d == -1:
        return 3 if parity == 0 else None
    if d == 1:
        return 0 if parity == 1 else None
    return None


def _build_conv1_weights(ct1):
    """ct1: (Cin=32, Cout=64, 4, 4) -> (9, 32, 4*64) per-shift matrices.

    Output channel layout: (py*2 + px)*64 + co  (parity-packed 14x14 map).
    """
    cin, cout = ct1.shape[0], ct1.shape[1]
    mats = []
    for (dm, dn) in _SHIFTS:
        blocks = []
        for py in (0, 1):
            kh = _tap_index(py, dm)
            for px in (0, 1):
                kw = _tap_index(px, dn)
                if kh is None or kw is None:
                    blocks.append(jnp.zeros((cin, cout), jnp.float32))
                else:
                    blocks.append(ct1[:, :, kh, kw].astype(jnp.float32))
        mats.append(jnp.concatenate(blocks, axis=1))          # (32, 256)
    return jnp.stack(mats, axis=0)                            # (9, 32, 256)


def _build_conv2_weights(ct2):
    """ct2: (Cin=64, 1, 4, 4) -> (9, 4*64, 16) per-shift matrices.

    Input channel layout : (py*2 + px)*64 + ci   (conv1's parity packing)
    Output channel layout: ry*4 + rx             (28x28 packed as 7x7 x 4x4)
    """
    cin = ct2.shape[0]
    contrib = {0: [(0, 1, 0), (1, 3, -1)],
               1: [(0, 2, 0), (1, 0, 0)],
               2: [(0, 3, 0), (1, 1, 0)],
               3: [(1, 2, 0), (0, 0, 1)]}
    mats = []
    for (dm, dn) in _SHIFTS:
        w = jnp.zeros((4 * cin, 16), jnp.float32)
        for ry in range(4):
            for (py, kh, dy) in contrib[ry]:
                if dy != dm:
                    continue
                for rx in range(4):
                    for (px, kw, dx) in contrib[rx]:
                        if dx != dn:
                            continue
                        pp = py * 2 + px
                        col = ry * 4 + rx
                        w = w.at[pp * cin:(pp + 1) * cin, col].set(
                            ct2[:, 0, kh, kw].astype(jnp.float32))
        mats.append(w)
    return jnp.stack(mats, axis=0)                            # (9, 256, 16)


# ------------------------------ Pallas kernel -------------------------------

def _decoder_kernel(z_ref, targ_ref, w1_ref, w2_ref, wc1_ref, wc2_ref,
                    img_ref, sse_ref):
    f32 = jnp.float32

    # ---- dense stack: Linear(60->256)+ReLU, Linear(256->32*128)+ReLU -------
    z = z_ref[0]                                                      # (1, 60)
    h1 = jnp.maximum(jnp.dot(z, w1_ref[...], preferred_element_type=f32), 0.0)
    h2 = jnp.maximum(jnp.dot(h1, w2_ref[...], preferred_element_type=f32), 0.0)
    # h2: (1, 4096) with lane index = channel*128 + spatial; the padded
    # columns of w2 are zero, so lanes 49..127 of every channel are zero.

    # bulk relayout: channels on rows, padded spatial grid on lanes
    x1 = h2.reshape(32, _L)                                           # (32, 128)

    # ---- lane masks for the flattened 7x7 grid ------------------------------
    lane = jax.lax.broadcasted_iota(jnp.int32, (1, _L), 1)
    col = lane % _W
    keep_m1 = col != (_W - 1)   # source mask for dn == -1 shifts (drop col 6)
    keep_p1 = col != 0          # source mask for dn == +1 shifts (drop col 0)
    lane_ok = lane < _S         # real spatial lanes

    def conv_stage(x, w_ref):
        """x: (C, 128) channels x padded-spatial, lanes >= 49 are zero."""
        x_m = jnp.where(keep_m1, x, 0.0)
        x_p = jnp.where(keep_p1, x, 0.0)
        slabs = []
        for (dm, dn) in _SHIFTS:
            src = x_m if dn == -1 else (x_p if dn == 1 else x)
            delta = dm * _W + dn
            if delta == 0:
                slabs.append(src)
            else:
                # slab[:, s] = src[:, (s + delta) % 128]; out-of-grid reads
                # land on the zero lanes 49..127 (or the masked column).
                slabs.append(pltpu.roll(src, shift=(-delta) % _L, axis=1))
        lhs_k = jnp.concatenate(slabs, axis=0)            # (9*C, 128)
        return jnp.dot(w_ref[...], lhs_k, preferred_element_type=f32)

    # ---- ConvTranspose2d(32->64, 4, 2, 1) + ReLU (parity-packed 14x14) ------
    o1 = conv_stage(x1, wc1_ref)                                      # (256, 128)
    o1 = jnp.where(lane_ok, jnp.maximum(o1, 0.0), 0.0)

    # ---- ConvTranspose2d(64->1, 4, 2, 1) (sub-parity-packed 28x28) ----------
    o2 = conv_stage(o1, wc2_ref)                                      # (16, 128)
    img_ref[0] = o2

    # ---- fused reconstruction loss ((x - x_hat)^2).sum() --------------------
    d = jnp.where(lane_ok, targ_ref[0] - o2, 0.0)
    part = jnp.sum(d * d, axis=1, keepdims=True)                      # (16, 1)
    sse_ref[0] = jnp.sum(part, axis=0, keepdims=True)                 # (1, 1)


# ------------------------------- parameters ---------------------------------

def init_params(seed=0, z_private_dim=50, z_shared_dim=10):
    key = jax.random.PRNGKey(seed)
    k1, k2, k3, k4 = jax.random.split(key, 4)
    d_in = z_private_dim + z_shared_dim
    w1 = jax.random.normal(k1, (d_in, 256), jnp.float32) * jnp.sqrt(2.0 / d_in)
    w2 = jax.random.normal(k2, (256, 7 * 7 * 32), jnp.float32) * jnp.sqrt(2.0 / 256.0)
    ct1 = jax.random.normal(k3, (32, 64, 4, 4), jnp.float32) * jnp.sqrt(2.0 / (32 * 16))
    ct2 = jax.random.normal(k4, (64, 1, 4, 4), jnp.float32) * jnp.sqrt(2.0 / (64 * 16))
    return {"w1": w1, "w2": w2, "ct1": ct1, "ct2": ct2}


def prepare_params(raw):
    """One-time re-layout of the PyTorch-shaped weights into kernel layout."""
    # Second Linear: PyTorch column index is c*49 + s; pad spatial 49 -> 128
    # per channel so the dense output reshapes directly to (32, 128).
    w2r = raw["w2"].astype(jnp.float32).reshape(256, 32, _S)
    w2pad = jnp.pad(w2r, ((0, 0), (0, 0), (0, _L - _S))).reshape(256, 32 * _L)

    w1g = _build_conv1_weights(raw["ct1"])                # (9, 32, 256)
    w2g = _build_conv2_weights(raw["ct2"])                # (9, 256, 16)
    # K-concatenate the 9 shift matrices: wc[out_ch, i*C + in_ch]
    wc1 = jnp.transpose(w1g, (2, 0, 1)).reshape(256, 9 * 32)     # (256, 288)
    wc2 = jnp.transpose(w2g, (2, 0, 1)).reshape(16, 9 * 256)     # (16, 2304)
    return {
        "w1": raw["w1"].astype(jnp.float32),
        "w2pad": w2pad,
        "wc1": wc1,
        "wc2": wc2,
    }


# -------------------------------- forward -----------------------------------

def decoder_a_forward(params, images, z_private, z_shared):
    """One iteration of DecoderA.forward's loop body (single shared modality).

    Returns (images_mean as (B,1,28,28), per-sample loss ((x - x_hat)**2).sum(-1)).
    """
    # TODO(synk): probtorch Trace bookkeeping (p.normal log-prob of z under
    # N(0,1)) is distribution-record glue, not kernelized here.
    z = jnp.concatenate([z_private, z_shared], axis=-1).astype(jnp.float32)
    B, zdim = z.shape

    # target image rearranged to the kernel's packed layout (16, 128):
    # targ[b, ry*4+rx, M*7+N] = images[b, 0, 4M+ry, 4N+rx], lanes >= 49 zero
    t = (images.astype(jnp.float32)
         .reshape(B, 7, 4, 7, 4).transpose(0, 2, 4, 1, 3).reshape(B, 16, _S))
    targ = jnp.pad(t, ((0, 0), (0, 0), (0, _L - _S)))

    img_pk, sse = pl.pallas_call(
        _decoder_kernel,
        out_shape=(jax.ShapeDtypeStruct((B, 16, _L), jnp.float32),
                   jax.ShapeDtypeStruct((B, 1, 1), jnp.float32)),
        grid=(B,),
        in_specs=[
            pl.BlockSpec((1, 1, zdim), lambda i: (i, 0, 0)),      # z
            pl.BlockSpec((1, 16, _L), lambda i: (i, 0, 0)),       # packed target
            pl.BlockSpec((zdim, 256), lambda i: (0, 0)),          # w1 (resident)
            pl.BlockSpec((256, 32 * _L), lambda i: (0, 0)),       # w2pad (resident)
            pl.BlockSpec((256, 9 * 32), lambda i: (0, 0)),        # conv1 K-cat weight
            pl.BlockSpec((16, 9 * 256), lambda i: (0, 0)),        # conv2 K-cat weight
        ],
        out_specs=(
            pl.BlockSpec((1, 16, _L), lambda i: (i, 0, 0)),       # packed image
            pl.BlockSpec((1, 1, 1), lambda i: (i, 0, 0)),         # sse
        ),
        compiler_params=pltpu.CompilerParams(
            dimension_semantics=("parallel",),
            vmem_limit_bytes=48 * 1024 * 1024),
    )(z[:, None, :], targ, params["w1"], params["w2pad"],
      params["wc1"], params["wc2"])

    # unpack (16, 128) -> (1, 28, 28):
    # img[b, 0, 4M+ry, 4N+rx] = img_pk[b, ry*4+rx, M*7+N]
    images_mean = (img_pk[:, :, :_S].reshape(B, 4, 4, 7, 7)
                   .transpose(0, 3, 1, 4, 2).reshape(B, 1, 28, 28))
    loss = sse.reshape(B)
    return images_mean, loss


# ----------------------------- pure-JAX reference ---------------------------

def _ref_conv_transpose(x, w):
    B, Cin, H, W = x.shape
    Cout = w.shape[1]
    out = jnp.zeros((B, Cout, 2 * H + 2, 2 * W + 2), jnp.float32)
    for kh in range(4):
        for kw in range(4):
            contrib = jnp.einsum("bihw,io->bohw", x, w[:, :, kh, kw])
            out = out.at[:, :, kh:kh + 2 * H:2, kw:kw + 2 * W:2].add(contrib)
    return out[:, :, 1:1 + 2 * H, 1:1 + 2 * W]


def _ref_forward(params, images, zp, zs):
    z = jnp.concatenate([zp, zs], -1)
    h1 = jnp.maximum(z @ params["w1"], 0.0)
    h2 = jnp.maximum(h1 @ params["w2"], 0.0)
    hid = h2.reshape(-1, 32, 7, 7)
    y1 = jnp.maximum(_ref_conv_transpose(hid, params["ct1"]), 0.0)
    ym = _ref_conv_transpose(y1, params["ct2"])
    B = ym.shape[0]
    loss = jnp.sum((images.reshape(images.shape[0], -1) - ym.reshape(B, -1)) ** 2, -1)
    return ym, loss


# --------------------------------- main -------------------------------------

if __name__ == "__main__":
    B, Z_PRIV, Z_SHARED = 2, 50, 10

    raw = init_params(seed=0, z_private_dim=Z_PRIV, z_shared_dim=Z_SHARED)
    params = prepare_params(raw)

    key = jax.random.PRNGKey(0)
    k_img, k_zp, k_zs = jax.random.split(key, 3)
    images = jax.random.normal(k_img, (B, 1, 28, 28), jnp.float32)
    z_private = jax.random.normal(k_zp, (B, Z_PRIV), jnp.float32)
    z_shared = jax.random.normal(k_zs, (B, Z_SHARED), jnp.float32)

    fwd = jax.jit(decoder_a_forward)
    images_mean, loss = fwd(params, images, z_private, z_shared)
    images_mean = jax.block_until_ready(images_mean)
    loss = jax.block_until_ready(loss)

    ref_mean, ref_loss = _ref_forward(raw, images, z_private, z_shared)
    assert images_mean.shape == (B, 1, 28, 28)
    assert loss.shape == (B,)
    assert jnp.allclose(images_mean, ref_mean, rtol=2e-3, atol=2e-3), "images_mean mismatch"
    assert jnp.allclose(loss, ref_loss, rtol=2e-3, atol=2e-3), "loss mismatch"

    print("KERNEL_OK")
</pallas_src>

<mosaic_0001>
module attributes {stable_mosaic.version = 11 : i64} {
  func.func @_decoder_kernel(%arg0: i32, %arg1: memref<1x1x60xf32, #tpu.memory_space<vmem>>, %arg2: memref<1x16x128xf32, #tpu.memory_space<vmem>>, %arg3: memref<60x256xf32, #tpu.memory_space<vmem>>, %arg4: memref<256x4096xf32, #tpu.memory_space<vmem>>, %arg5: memref<256x288xf32, #tpu.memory_space<vmem>>, %arg6: memref<16x2304xf32, #tpu.memory_space<vmem>>, %arg7: memref<1x16x128xf32, #tpu.memory_space<vmem>>, %arg8: memref<1x1x1xf32, #tpu.memory_space<vmem>>) attributes {dimension_semantics = [#tpu.dimension_semantics<parallel>], iteration_bounds = array<i64: 2>, scalar_prefetch = 0 : i64, scratch_operands = 0 : i64, tpu.core_type = #tpu.core_type<tc>, window_params = [{transform_indices = @transform_0, window_bounds = array<i64: 1, 1, 60>}, {transform_indices = @transform_1, window_bounds = array<i64: 1, 16, 128>}, {pipeline_mode = #tpu.pipeline_mode<synchronous>, transform_indices = @transform_2, window_bounds = array<i64: 60, 256>}, {pipeline_mode = #tpu.pipeline_mode<synchronous>, transform_indices = @transform_3, window_bounds = array<i64: 256, 4096>}, {pipeline_mode = #tpu.pipeline_mode<synchronous>, transform_indices = @transform_4, window_bounds = array<i64: 256, 288>}, {pipeline_mode = #tpu.pipeline_mode<synchronous>, transform_indices = @transform_5, window_bounds = array<i64: 16, 2304>}, {transform_indices = @transform_6, window_bounds = array<i64: 1, 16, 128>}, {transform_indices = @transform_7, window_bounds = array<i64: 1, 1, 1>}]} {
    %c0 = arith.constant 0 : index
    %c0_0 = arith.constant 0 : index
    %c0_1 = arith.constant 0 : index
    %0 = vector.load %arg1[%c0, %c0_0, %c0_1] : memref<1x1x60xf32, #tpu.memory_space<vmem>>, vector<1x1x60xf32>
    %1 = vector.shape_cast %0 : vector<1x1x60xf32> to vector<1x60xf32>
    %c0_2 = arith.constant 0 : index
    %c0_3 = arith.constant 0 : index
    %2 = vector.load %arg3[%c0_2, %c0_3] : memref<60x256xf32, #tpu.memory_space<vmem>>, vector<60x256xf32>
    %cst = arith.constant dense<0.000000e+00> : vector<1x256xf32>
    %3 = tpu.matmul %1, %2, %cst {dimension_numbers = #tpu.dot_dimension_numbers<[1], [0], [0], [1], [0, 0, 1, 1], [], []>} : vector<1x60xf32>, vector<60x256xf32>, vector<1x256xf32> -> vector<1x256xf32>
    %cst_4 = arith.constant 0.000000e+00 : f32
    %4 = vector.broadcast %cst_4 : f32 to vector<1x256xf32>
    %5 = arith.maximumf %3, %4 : vector<1x256xf32>
    %c0_5 = arith.constant 0 : index
    %c0_6 = arith.constant 0 : index
    %6 = vector.load %arg4[%c0_5, %c0_6] : memref<256x4096xf32, #tpu.memory_space<vmem>>, vector<256x4096xf32>
    %cst_7 = arith.constant dense<0.000000e+00> : vector<1x4096xf32>
    %7 = tpu.matmul %5, %6, %cst_7 {dimension_numbers = #tpu.dot_dimension_numbers<[1], [0], [0], [1], [0, 0, 1, 1], [], []>} : vector<1x256xf32>, vector<256x4096xf32>, vector<1x4096xf32> -> vector<1x4096xf32>
    %cst_8 = arith.constant 0.000000e+00 : f32
    %8 = vector.broadcast %cst_8 : f32 to vector<1x4096xf32>
    %9 = arith.maximumf %7, %8 : vector<1x4096xf32>
    %10 = vector.shape_cast %9 : vector<1x4096xf32> to vector<32x128xf32>
    %11 = tpu.iota {dimensions = array<i32: 1>} : vector<1x128xi32>
    %c7_i32 = arith.constant 7 : i32
    %c0_i32 = arith.constant 0 : i32
    %12 = arith.cmpi eq, %c7_i32, %c0_i32 : i32
    %c1_i32 = arith.constant 1 : i32
    %13 = arith.select %12, %c1_i32, %c7_i32 : i32
    %14 = vector.broadcast %13 : i32 to vector<1x128xi32>
    %15 = arith.remsi %11, %14 : vector<1x128xi32>
    %c0_i32_9 = arith.constant 0 : i32
    %16 = vector.broadcast %c0_i32_9 : i32 to vector<1x128xi32>
    %17 = arith.cmpi ne, %15, %16 : vector<1x128xi32>
    %c0_i32_10 = arith.constant 0 : i32
    %18 = vector.broadcast %c0_i32_10 : i32 to vector<1x128xi32>
    %19 = arith.cmpi slt, %15, %18 : vector<1x128xi32>
    %c0_i32_11 = arith.constant 0 : i32
    %20 = arith.cmpi slt, %13, %c0_i32_11 : i32
    %21 = vector.broadcast %20 : i1 to vector<1x128xi1>
    %22 = vector.broadcast %21 : vector<1x128xi1> to vector<1x128xi1>
    %23 = arith.xori %19, %22 : vector<1x128xi1>
    %24 = arith.andi %23, %17 : vector<1x128xi1>
    %25 = vector.broadcast %13 : i32 to vector<1x128xi32>
    %26 = arith.addi %15, %25 : vector<1x128xi32>
    %27 = arith.select %24, %26, %15 : vector<1x128xi1>, vector<1x128xi32>
    %c6_i32 = arith.constant 6 : i32
    %28 = vector.broadcast %c6_i32 : i32 to vector<1x128xi32>
    %29 = arith.cmpi ne, %27, %28 : vector<1x128xi32>
    %c0_i32_12 = arith.constant 0 : i32
    %30 = vector.broadcast %c0_i32_12 : i32 to vector<1x128xi32>
    %31 = arith.cmpi ne, %27, %30 : vector<1x128xi32>
    %c49_i32 = arith.constant 49 : i32
    %32 = vector.broadcast %c49_i32 : i32 to vector<1x128xi32>
    %33 = arith.cmpi slt, %11, %32 : vector<1x128xi32>
    %cst_13 = arith.constant 0.000000e+00 : f32
    %34 = vector.shape_cast %29 : vector<1x128xi1> to vector<1x128xi1>
    %35 = vector.broadcast %34 : vector<1x128xi1> to vector<32x128xi1>
    %36 = vector.broadcast %cst_13 : f32 to vector<32x128xf32>
    %37 = arith.select %35, %10, %36 : vector<32x128xi1>, vector<32x128xf32>
    %cst_14 = arith.constant 0.000000e+00 : f32
    %38 = vector.shape_cast %31 : vector<1x128xi1> to vector<1x128xi1>
    %39 = vector.broadcast %38 : vector<1x128xi1> to vector<32x128xi1>
    %40 = vector.broadcast %cst_14 : f32 to vector<32x128xf32>
    %41 = arith.select %39, %10, %40 : vector<32x128xi1>, vector<32x128xf32>
    %c8_i32 = arith.constant 8 : i32
    %42 = tpu.dynamic_rotate %37 by %c8_i32 dim 1 : vector<32x128xf32>, i32 -> vector<32x128xf32>
    %c7_i32_15 = arith.constant 7 : i32
    %43 = tpu.dynamic_rotate %10 by %c7_i32_15 dim 1 : vector<32x128xf32>, i32 -> vector<32x128xf32>
    %c6_i32_16 = arith.constant 6 : i32
    %44 = tpu.dynamic_rotate %41 by %c6_i32_16 dim 1 : vector<32x128xf32>, i32 -> vector<32x128xf32>
    %c1_i32_17 = arith.constant 1 : i32
    %45 = tpu.dynamic_rotate %37 by %c1_i32_17 dim 1 : vector<32x128xf32>, i32 -> vector<32x128xf32>
    %c127_i32 = arith.constant 127 : i32
    %46 = tpu.dynamic_rotate %41 by %c127_i32 dim 1 : vector<32x128xf32>, i32 -> vector<32x128xf32>
    %c122_i32 = arith.constant 122 : i32
    %47 = tpu.dynamic_rotate %37 by %c122_i32 dim 1 : vector<32x128xf32>, i32 -> vector<32x128xf32>
    %c121_i32 = arith.constant 121 : i32
    %48 = tpu.dynamic_rotate %10 by %c121_i32 dim 1 : vector<32x128xf32>, i32 -> vector<32x128xf32>
    %c120_i32 = arith.constant 120 : i32
    %49 = tpu.dynamic_rotate %41 by %c120_i32 dim 1 : vector<32x128xf32>, i32 -> vector<32x128xf32>
    %50 = tpu.concatenate %42, %43, %44, %45, %10, %46, %47, %48, %49 in 0 : vector<32x128xf32>, vector<32x128xf32>, vector<32x128xf32>, vector<32x128xf32>, vector<32x128xf32>, vector<32x128xf32>, vector<32x128xf32>, vector<32x128xf32>, vector<32x128xf32> -> vector<288x128xf32>
    %c0_18 = arith.constant 0 : index
    %c0_19 = arith.constant 0 : index
    %51 = vector.load %arg5[%c0_18, %c0_19] : memref<256x288xf32, #tpu.memory_space<vmem>>, vector<256x288xf32>
    %cst_20 = arith.constant dense<0.000000e+00> : vector<256x128xf32>
    %52 = tpu.matmul %51, %50, %cst_20 {dimension_numbers = #tpu.dot_dimension_numbers<[1], [0], [0], [1], [0, 0, 1, 1], [], []>} : vector<256x288xf32>, vector<288x128xf32>, vector<256x128xf32> -> vector<256x128xf32>
    %cst_21 = arith.constant 0.000000e+00 : f32
    %53 = vector.broadcast %cst_21 : f32 to vector<256x128xf32>
    %54 = arith.maximumf %52, %53 : vector<256x128xf32>
    %cst_22 = arith.constant 0.000000e+00 : f32
    %55 = vector.shape_cast %33 : vector<1x128xi1> to vector<1x128xi1>
    %56 = vector.broadcast %55 : vector<1x128xi1> to vector<256x128xi1>
    %57 = vector.broadcast %cst_22 : f32 to vector<256x128xf32>
    %58 = arith.select %56, %54, %57 : vector<256x128xi1>, vector<256x128xf32>
    %cst_23 = arith.constant 0.000000e+00 : f32
    %59 = vector.shape_cast %29 : vector<1x128xi1> to vector<1x128xi1>
    %60 = vector.broadcast %59 : vector<1x128xi1> to vector<256x128xi1>
    %61 = vector.broadcast %cst_23 : f32 to vector<256x128xf32>
    %62 = arith.select %60, %58, %61 : vector<256x128xi1>, vector<256x128xf32>
    %cst_24 = arith.constant 0.000000e+00 : f32
    %63 = vector.shape_cast %31 : vector<1x128xi1> to vector<1x128xi1>
    %64 = vector.broadcast %63 : vector<1x128xi1> to vector<256x128xi1>
    %65 = vector.broadcast %cst_24 : f32 to vector<256x128xf32>
    %66 = arith.select %64, %58, %65 : vector<256x128xi1>, vector<256x128xf32>
    %c8_i32_25 = arith.constant 8 : i32
    %67 = tpu.dynamic_rotate %62 by %c8_i32_25 dim 1 : vector<256x128xf32>, i32 -> vector<256x128xf32>
    %c7_i32_26 = arith.constant 7 : i32
    %68 = tpu.dynamic_rotate %58 by %c7_i32_26 dim 1 : vector<256x128xf32>, i32 -> vector<256x128xf32>
    %c6_i32_27 = arith.constant 6 : i32
    %69 = tpu.dynamic_rotate %66 by %c6_i32_27 dim 1 : vector<256x128xf32>, i32 -> vector<256x128xf32>
    %c1_i32_28 = arith.constant 1 : i32
    %70 = tpu.dynamic_rotate %62 by %c1_i32_28 dim 1 : vector<256x128xf32>, i32 -> vector<256x128xf32>
    %c127_i32_29 = arith.constant 127 : i32
    %71 = tpu.dynamic_rotate %66 by %c127_i32_29 dim 1 : vector<256x128xf32>, i32 -> vector<256x128xf32>
    %c122_i32_30 = arith.constant 122 : i32
    %72 = tpu.dynamic_rotate %62 by %c122_i32_30 dim 1 : vector<256x128xf32>, i32 -> vector<256x128xf32>
    %c121_i32_31 = arith.constant 121 : i32
    %73 = tpu.dynamic_rotate %58 by %c121_i32_31 dim 1 : vector<256x128xf32>, i32 -> vector<256x128xf32>
    %c120_i32_32 = arith.constant 120 : i32
    %74 = tpu.dynamic_rotate %66 by %c120_i32_32 dim 1 : vector<256x128xf32>, i32 -> vector<256x128xf32>
    %75 = tpu.concatenate %67, %68, %69, %70, %58, %71, %72, %73, %74 in 0 : vector<256x128xf32>, vector<256x128xf32>, vector<256x128xf32>, vector<256x128xf32>, vector<256x128xf32>, vector<256x128xf32>, vector<256x128xf32>, vector<256x128xf32>, vector<256x128xf32> -> vector<2304x128xf32>
    %c0_33 = arith.constant 0 : index
    %c0_34 = arith.constant 0 : index
    %76 = vector.load %arg6[%c0_33, %c0_34] : memref<16x2304xf32, #tpu.memory_space<vmem>>, vector<16x2304xf32>
    %cst_35 = arith.constant dense<0.000000e+00> : vector<16x128xf32>
    %77 = tpu.matmul %76, %75, %cst_35 {dimension_numbers = #tpu.dot_dimension_numbers<[1], [0], [0], [1], [0, 0, 1, 1], [], []>} : vector<16x2304xf32>, vector<2304x128xf32>, vector<16x128xf32> -> vector<16x128xf32>
    %c0_36 = arith.constant 0 : index
    %c0_37 = arith.constant 0 : index
    %c0_38 = arith.constant 0 : index
    %78 = vector.load %arg7[%c0_36, %c0_37, %c0_38] : memref<1x16x128xf32, #tpu.memory_space<vmem>>, vector<1x16x128xf32>
    %79 = vector.shape_cast %78 : vector<1x16x128xf32> to vector<16x128xf32>
    %80 = vector.shape_cast %77 : vector<16x128xf32> to vector<1x16x128xf32>
    tpu.vector_store %arg7[%c0_36, %c0_37, %c0_38], %80 {strides = array<i32>} : memref<1x16x128xf32, #tpu.memory_space<vmem>>, vector<1x16x128xf32>,
    %c0_39 = arith.constant 0 : index
    %c0_40 = arith.constant 0 : index
    %c0_41 = arith.constant 0 : index
    %81 = vector.load %arg2[%c0_39, %c0_40, %c0_41] : memref<1x16x128xf32, #tpu.memory_space<vmem>>, vector<1x16x128xf32>
    %82 = vector.shape_cast %81 : vector<1x16x128xf32> to vector<16x128xf32>
    %83 = arith.subf %82, %77 : vector<16x128xf32>
    %cst_42 = arith.constant 0.000000e+00 : f32
    %84 = vector.shape_cast %33 : vector<1x128xi1> to vector<1x128xi1>
    %85 = vector.broadcast %84 : vector<1x128xi1> to vector<16x128xi1>
    %86 = vector.broadcast %cst_42 : f32 to vector<16x128xf32>
    %87 = arith.select %85, %83, %86 : vector<16x128xi1>, vector<16x128xf32>
    %88 = arith.mulf %87, %87 : vector<16x128xf32>
    %cst_43 = arith.constant dense<0.000000e+00> : vector<16xf32>
    %89 = vector.multi_reduction <add>, %88, %cst_43 [1] : vector<16x128xf32> to vector<16xf32>
    %90 = vector.shape_cast %89 : vector<16xf32> to vector<16x1xf32>
    %cst_44 = arith.constant dense<0.000000e+00> : vector<1xf32>
    %91 = vector.multi_reduction <add>, %90, %cst_44 [0] : vector<16x1xf32> to vector<1xf32>
    %92 = vector.shape_cast %91 : vector<1xf32> to vector<1x1xf32>
    %c0_45 = arith.constant 0 : index
    %c0_46 = arith.constant 0 : index
    %c0_47 = arith.constant 0 : index
    %93 = vector.load %arg8[%c0_45, %c0_46, %c0_47] : memref<1x1x1xf32, #tpu.memory_space<vmem>>, vector<1x1x1xf32>
    %94 = vector.shape_cast %93 : vector<1x1x1xf32> to vector<1x1xf32>
    %95 = vector.shape_cast %92 : vector<1x1xf32> to vector<1x1x1xf32>
    tpu.vector_store %arg8[%c0_45, %c0_46, %c0_47], %95 {strides = array<i32>} : memref<1x1x1xf32, #tpu.memory_space<vmem>>, vector<1x1x1xf32>,
    return
  }
  func.func @transform_0(%arg0: i32) -> (i32, i32, i32) {
    %c0_i32 = arith.constant 0 : i32
    %c0_i32_0 = arith.constant 0 : i32
    %c0_i32_1 = arith.constant 0 : i32
    return %arg0, %c0_i32, %c0_i32_0 : i32, i32, i32
  }
  func.func @transform_1(%arg0: i32) -> (i32, i32, i32) {
    %c0_i32 = arith.constant 0 : i32
    %c0_i32_0 = arith.constant 0 : i32
    %c0_i32_1 = arith.constant 0 : i32
    return %arg0, %c0_i32, %c0_i32_0 : i32, i32, i32
  }
  func.func @transform_2(%arg0: i32) -> (i32, i32) {
    %c0_i32 = arith.constant 0 : i32
    %c0_i32_0 = arith.constant 0 : i32
    %c0_i32_1 = arith.constant 0 : i32
    return %c0_i32, %c0_i32_0 : i32, i32
  }
  func.func @transform_3(%arg0: i32) -> (i32, i32) {
    %c0_i32 = arith.constant 0 : i32
    %c0_i32_0 = arith.constant 0 : i32
    %c0_i32_1 = arith.constant 0 : i32
    return %c0_i32, %c0_i32_0 : i32, i32
  }
  func.func @transform_4(%arg0: i32) -> (i32, i32) {
    %c0_i32 = arith.constant 0 : i32
    %c0_i32_0 = arith.constant 0 : i32
    %c0_i32_1 = arith.constant 0 : i32
    return %c0_i32, %c0_i32_0 : i32, i32
  }
  func.func @transform_5(%arg0: i32) -> (i32, i32) {
    %c0_i32 = arith.constant 0 : i32
    %c0_i32_0 = arith.constant 0 : i32
    %c0_i32_1 = arith.constant 0 : i32
    return %c0_i32, %c0_i32_0 : i32, i32
  }
  func.func @transform_6(%arg0: i32) -> (i32, i32, i32) {
    %c0_i32 = arith.constant 0 : i32
    %c0_i32_0 = arith.constant 0 : i32
    %c0_i32_1 = arith.constant 0 : i32
    return %arg0, %c0_i32, %c0_i32_0 : i32, i32, i32
  }
  func.func @transform_7(%arg0: i32) -> (i32, i32, i32) {
    %c0_i32 = arith.constant 0 : i32
    %c0_i32_0 = arith.constant 0 : i32
    %c0_i32_1 = arith.constant 0 : i32
    return %arg0, %c0_i32, %c0_i32_0 : i32, i32, i32
  }
}

</mosaic_0001>

<llo_original>
// kernel: decoder_a_forward.1
$region0: #{decoder_a_forward.1}
  #allocation0 [shape = 'u32[]', space=smem, size = 0x4, offset = 0x4, fixed_abs, tag = 'smem constant byte address 0x4 - core index']
  #allocation1 [shape = 'u32[144,128]{1,0:T(1,128)}', space=vmem, size = 0x12000, scoped, tag = 'internal scratch']
  %s0 = inlined_call_operand.vmem [shape: f32[2,1,60], index: 0, kind: input, shape index: {}]
  %s1 = inlined_call_operand.vmem [shape: f32[2,16,128], index: 1, kind: input, shape index: {}]
  %s2 = inlined_call_operand.hbm [shape: f32[60,256], index: 2, kind: input, shape index: {}]
  %s3 = inlined_call_operand.hbm [shape: f32[256,4096], index: 3, kind: input, shape index: {}]
  %s4 = inlined_call_operand.vmem [shape: f32[256,288], index: 4, kind: input, shape index: {}]
  %s5 = inlined_call_operand.hbm [shape: f32[16,2304], index: 5, kind: input, shape index: {}]
  %s6 = inlined_call_operand.vmem [shape: f32[2,16,128], index: 6, kind: output, shape index: {0}]
  %s7 = inlined_call_operand.vmem [shape: f32[2,1,1], index: 7, kind: output, shape index: {1}]
  %8 = xla_tuple %s6, %s7
  %s9 = sld [smem:[#allocation0]]
  $region77: #{decoder_a_forward.1} parent=0
    _
  %s11 = ssub.s32 1, %s9
  %s12 = scalar_select 0, %s11, %s9
  $region1: #{decoder_a_forward.1} parent=0
    #allocation2 [shape = 'u8[65536]{0}', space=vmem, size = 0x10000, scoped, tag = 'input window, operand 2, single buffered']
    #allocation3 [shape = 's32[2]{0}', space=sflag, size = 0x8, scoped, tag = 'scoped memory for decoder_a_forward.1']
    #allocation4 [shape = 'u8[4194304]{0}', space=vmem, size = 0x400000, scoped, tag = 'input window, operand 3, single buffered']
    #allocation5 [shape = 's32[1]{0}', space=sflag, size = 0x4, scoped, tag = 'scoped memory for decoder_a_forward.1']
    #allocation6 [shape = 'u8[147456]{0}', space=vmem, size = 0x24000, scoped, tag = 'input window, operand 5, single buffered']
    %13 = vsyncpa [#allocation3], 0
    %14 = vsyncpa [#allocation5], 0
    loop: start=0, step=1, limit=4
    $region2: #{decoder_a_forward.1} parent=1 // loop_pre_header
      _
    $region3: #{decoder_a_forward.1} parent=1 // loop_header
      %s16 = sphi 0, %s20
      %p17 = scmp.ge.s32.totalorder %s16, 4
      %s26 = sphi 0, %s28
      %s29 = sphi 0, %s26
      %s30 = sphi 0, %s29
      %s46 = sphi 0, %s30
      %s52 = sphi 0, %s54
      %s55 = sphi 0, %s52
      %s56 = sphi 0, %s55
      %s72 = sphi 0, %s56
      %s76 = sphi 0, %s76
      %s78 = sphi 0, %s76
      %s79 = sphi 0, %s78
      %s93 = sphi 0, %s79
      %s97 = sphi 0, %s97
      %s99 = sphi 0, %s97
      %s100 = sphi 0, %s99
      %s114 = sphi 0, %s100
      %s118 = sphi 0, %s118
      %s120 = sphi 0, %s118
      %s121 = sphi 0, %s120
      %s135 = sphi 0, %s121
      %s139 = sphi 0, %s139
      %s141 = sphi 0, %s139
      %s142 = sphi 0, %s141
      %s156 = sphi 0, %s142
      %s162 = sphi 0, %s164
      %s165 = sphi 0, %s162
      %s166 = sphi 0, %s165
      %s182 = sphi 0, %s166
      %s188 = sphi 0, %s190
      %s191 = sphi 0, %s188
      %s192 = sphi 0, %s191
      %s208 = sphi 0, %s192
    $region4: #{decoder_a_forward.1} parent=1 // loop_header_branch
      %19 = sbr.rel (%p17) target = $region8
    $region5: #{decoder_a_forward.1} parent=1 // loop_body
      %s21 = ssub.s32 %s16, 1
      %s22 = ssub.s32 %s16, 2
      %s23 = sadd.s32 %s16, 1
      %s24 = ssub.s32 %s16, %s23
      %p25 = scmp.eq.s32.totalorder %s24, 0
      %s27 = sadd.s32 %s26, 1
      %s28 = scalar_select %p25, %s26, %s27
      %p31 = pneg %p25
      %p32 = scmp.eq.s32.totalorder %s16, 1
      %p33 = por %p31, %p32
      %p34 = scmp.ne.s32.totalorder %s26, %s29
      %p35 = scmp.eq.s32.totalorder %s16, 0
      %p36 = por %p34, %p35
      %p37 = scmp.ne.s32.totalorder %s26, %s29
      %p38 = scmp.eq.s32.totalorder %s21, 1
      %p39 = por %p37, %p38
      %p40 = scmp.ne.s32.totalorder %s29, %s30
      %p41 = scmp.eq.s32.totalorder %s21, 0
      %p42 = por %p40, %p41
      %p43 = scmp.ne.s32.totalorder %s29, %s30
      %p44 = scmp.eq.s32.totalorder %s22, 1
      %p45 = por %p43, %p44
      %p47 = scmp.ne.s32.totalorder %s30, %s46
      %p48 = scmp.eq.s32.totalorder %s22, 0
      %p49 = por %p47, %p48
      %s50 = ssub.s32 %s16, %s23
      %p51 = scmp.eq.s32.totalorder %s50, 0
      %s53 = sadd.s32 %s52, 1
      %s54 = scalar_select %p51, %s52, %s53
      %p57 = pneg %p51
      %p58 = scmp.eq.s32.totalorder %s16, 1
      %p59 = por %p57, %p58
      %p60 = scmp.ne.s32.totalorder %s52, %s55
      %p61 = scmp.eq.s32.totalorder %s16, 0
      %p62 = por %p60, %p61
      %p63 = scmp.ne.s32.totalorder %s52, %s55
      %p64 = scmp.eq.s32.totalorder %s21, 1
      %p65 = por %p63, %p64
      %p66 = scmp.ne.s32.totalorder %s55, %s56
      %p67 = scmp.eq.s32.totalorder %s21, 0
      %p68 = por %p66, %p67
      %p69 = scmp.ne.s32.totalorder %s55, %s56
      %p70 = scmp.eq.s32.totalorder %s22, 1
      %p71 = por %p69, %p70
      %p73 = scmp.ne.s32.totalorder %s56, %s72
      %p74 = scmp.eq.s32.totalorder %s22, 0
      %p75 = por %p73, %p74
      %s77 = sadd.s32 %s76, 1
      %p80 = scmp.eq.s32.totalorder %s16, 1
      %p81 = scmp.ne.s32.totalorder %s76, %s78
      %p82 = scmp.eq.s32.totalorder %s16, 0
      %p83 = por %p81, %p82
      %p84 = scmp.ne.s32.totalorder %s76, %s78
      %p85 = scmp.eq.s32.totalorder %s21, 1
      %p86 = por %p84, %p85
      %p87 = scmp.ne.s32.totalorder %s78, %s79
      %p88 = scmp.eq.s32.totalorder %s21, 0
      %p89 = por %p87, %p88
      %p90 = scmp.ne.s32.totalorder %s78, %s79
      %p91 = scmp.eq.s32.totalorder %s22, 1
      %p92 = por %p90, %p91
      %p94 = scmp.ne.s32.totalorder %s79, %s93
      %p95 = scmp.eq.s32.totalorder %s22, 0
      %p96 = por %p94, %p95
      %s98 = sadd.s32 %s97, 1
      %p101 = scmp.eq.s32.totalorder %s16, 1
      %p102 = scmp.ne.s32.totalorder %s97, %s99
      %p103 = scmp.eq.s32.totalorder %s16, 0
      %p104 = por %p102, %p103
      %p105 = scmp.ne.s32.totalorder %s97, %s99
      %p106 = scmp.eq.s32.totalorder %s21, 1
      %p107 = por %p105, %p106
      %p108 = scmp.ne.s32.totalorder %s99, %s100
      %p109 = scmp.eq.s32.totalorder %s21, 0
      %p110 = por %p108, %p109
      %p111 = scmp.ne.s32.totalorder %s99, %s100
      %p112 = scmp.eq.s32.totalorder %s22, 1
      %p113 = por %p111, %p112
      %p115 = scmp.ne.s32.totalorder %s100, %s114
      %p116 = scmp.eq.s32.totalorder %s22, 0
      %p117 = por %p115, %p116
      %s119 = sadd.s32 %s118, 1
      %p122 = scmp.eq.s32.totalorder %s16, 1
      %p123 = scmp.ne.s32.totalorder %s118, %s120
      %p124 = scmp.eq.s32.totalorder %s16, 0
      %p125 = por %p123, %p124
      %p126 = scmp.ne.s32.totalorder %s118, %s120
      %p127 = scmp.eq.s32.totalorder %s21, 1
      %p128 = por %p126, %p127
      %p129 = scmp.ne.s32.totalorder %s120, %s121
      %p130 = scmp.eq.s32.totalorder %s21, 0
      %p131 = por %p129, %p130
      %p132 = scmp.ne.s32.totalorder %s120, %s121
      %p133 = scmp.eq.s32.totalorder %s22, 1
      %p134 = por %p132, %p133
      %p136 = scmp.ne.s32.totalorder %s121, %s135
      %p137 = scmp.eq.s32.totalorder %s22, 0
      %p138 = por %p136, %p137
      %s140 = sadd.s32 %s139, 1
      %p143 = scmp.eq.s32.totalorder %s16, 1
      %p144 = scmp.ne.s32.totalorder %s139, %s141
      %p145 = scmp.eq.s32.totalorder %s16, 0
      %p146 = por %p144, %p145
      %p147 = scmp.ne.s32.totalorder %s139, %s141
      %p148 = scmp.eq.s32.totalorder %s21, 1
      %p149 = por %p147, %p148
      %p150 = scmp.ne.s32.totalorder %s141, %s142
      %p151 = scmp.eq.s32.totalorder %s21, 0
      %p152 = por %p150, %p151
      %p153 = scmp.ne.s32.totalorder %s141, %s142
      %p154 = scmp.eq.s32.totalorder %s22, 1
      %p155 = por %p153, %p154
      %p157 = scmp.ne.s32.totalorder %s142, %s156
      %p158 = scmp.eq.s32.totalorder %s22, 0
      %p159 = por %p157, %p158
      %s160 = ssub.s32 %s16, %s23
      %p161 = scmp.eq.s32.totalorder %s160, 0
      %s163 = sadd.s32 %s162, 1
      %s164 = scalar_select %p161, %s162, %s163
      %p167 = pneg %p161
      %p168 = scmp.eq.s32.totalorder %s16, 1
      %p169 = por %p167, %p168
      %p170 = scmp.ne.s32.totalorder %s162, %s165
      %p171 = scmp.eq.s32.totalorder %s16, 0
      %p172 = por %p170, %p171
      %p173 = scmp.ne.s32.totalorder %s162, %s165
      %p174 = scmp.eq.s32.totalorder %s21, 1
      %p175 = por %p173, %p174
      %p176 = scmp.ne.s32.totalorder %s165, %s166
      %p177 = scmp.eq.s32.totalorder %s21, 0
      %p178 = por %p176, %p177
      %p179 = scmp.ne.s32.totalorder %s165, %s166
      %p180 = scmp.eq.s32.totalorder %s22, 1
      %p181 = por %p179, %p180
      %p183 = scmp.ne.s32.totalorder %s166, %s182
      %p184 = scmp.eq.s32.totalorder %s22, 0
      %p185 = por %p183, %p184
      %s186 = ssub.s32 %s16, %s23
      %p187 = scmp.eq.s32.totalorder %s186, 0
      %s189 = sadd.s32 %s188, 1
      %s190 = scalar_select %p187, %s188, %s189
      %p193 = pneg %p187
      %p194 = scmp.eq.s32.totalorder %s16, 1
      %p195 = por %p193, %p194
      %p196 = scmp.ne.s32.totalorder %s188, %s191
      %p197 = scmp.eq.s32.totalorder %s16, 0
      %p198 = por %p196, %p197
      %p199 = scmp.ne.s32.totalorder %s188, %s191
      %p200 = scmp.eq.s32.totalorder %s21, 1
      %p201 = por %p199, %p200
      %p202 = scmp.ne.s32.totalorder %s191, %s192
      %p203 = scmp.eq.s32.totalorder %s21, 0
      %p204 = por %p202, %p203
      %p205 = scmp.ne.s32.totalorder %s191, %s192
      %p206 = scmp.eq.s32.totalorder %s22, 1
      %p207 = por %p205, %p206
      %p209 = scmp.ne.s32.totalorder %s192, %s208
      %p210 = scmp.eq.s32.totalorder %s22, 0
      %p211 = por %p209, %p210
      %p212 = scmp.le.s32.totalorder 1, %s16
      %p213 = scmp.lt.s32.totalorder %s16, 3
      %p214 = pnand %p212, %p213
      %p215 = pneg %p214
      // Predicated region
      $region9: #{decoder_a_forward.1} parent=5 // pred_check
        _
      $region10: #{decoder_a_forward.1} parent=5 // pred_check_branch
        %217 = sbr.rel (%p214) target = $region12
      $region11: #{decoder_a_forward.1} parent=5 // pred_region
        %s218 = ssub.s32 %s16, 1
        // Predicated region
        $region13: #{decoder_a_forward.1} parent=11 // pred_check
          %p219 = pneg %p89
        $region14: #{decoder_a_forward.1} parent=11 // pred_check_branch
          %221 = sbr.rel (%p219) target = $region16
        $region15: #{decoder_a_forward.1} parent=11 // pred_region
          %s223 = ssub.s32 2048, 2048
          %224 = vsyncadd [#allocation3], %s223
          %s225 = sshll.u32 [#allocation2], 4
          %s226 = int_to_ptr.vmem [resolvable:$true] %s225
          %231 = dma.hbm_to_vmem [thread:$0]  %s2, 2048, %s226, [#allocation3], 256, 256, 16
        $region16: #{decoder_a_forward.1} parent=11 // pred_fallthru
          _
        // Predicated region
        $region17: #{decoder_a_forward.1} parent=11 // pred_check
          %p232 = pneg %p110
        $region18: #{decoder_a_forward.1} parent=11 // pred_check_branch
          %234 = sbr.rel (%p232) target = $region20
        $region19: #{decoder_a_forward.1} parent=11 // pred_region
          %s236 = ssub.s32 131072, 131072
          %237 = vsyncadd [#allocation5], %s236
          %s238 = sshll.u32 [#allocation4], 4
          %s239 = int_to_ptr.vmem [resolvable:$true] %s238
          %244 = dma.hbm_to_vmem [thread:$0]  %s3, 131072, %s239, [#allocation5], 4096, 4096, 256
        $region20: #{decoder_a_forward.1} parent=11 // pred_fallthru
          _
        // Predicated region
        $region21: #{decoder_a_forward.1} parent=11 // pred_check
          %p245 = pneg %p131
        $region22: #{decoder_a_forward.1} parent=11 // pred_check_branch
          %247 = sbr.rel (%p245) target = $region24
        $region23: #{decoder_a_forward.1} parent=11 // pred_region
          _
        $region24: #{decoder_a_forward.1} parent=11 // pred_fallthru
          _
        // Predicated region
        $region25: #{decoder_a_forward.1} parent=11 // pred_check
          %p248 = pneg %p152
        $region26: #{decoder_a_forward.1} parent=11 // pred_check_branch
          %250 = sbr.rel (%p248) target = $region28
        $region27: #{decoder_a_forward.1} parent=11 // pred_region
          %s252 = ssub.s32 4608, 4608
          %253 = vsyncadd [#allocation5], %s252
          %s254 = sshll.u32 [#allocation6], 4
          %s255 = int_to_ptr.vmem [resolvable:$true] %s254
          %260 = dma.hbm_to_vmem [thread:$0]  %s5, 4608, %s255, [#allocation5], 2304, 2304, 144
        $region28: #{decoder_a_forward.1} parent=11 // pred_fallthru
          _
      $region12: #{decoder_a_forward.1} parent=5 // pred_fallthru
        _
      %p261 = scmp.lt.s32.totalorder %s16, 2
      // Predicated region
      $region29: #{decoder_a_forward.1} parent=5 // pred_check
        %p262 = pneg %p261
      $region30: #{decoder_a_forward.1} parent=5 // pred_check_branch
        %264 = sbr.rel (%p262) target = $region32
      $region31: #{decoder_a_forward.1} parent=5 // pred_region
        // Predicated region
        $region33: #{decoder_a_forward.1} parent=31 // pred_check
          %p265 = pneg %p36
        $region34: #{decoder_a_forward.1} parent=31 // pred_check_branch
          %267 = sbr.rel (%p265) target = $region36
        $region35: #{decoder_a_forward.1} parent=31 // pred_region
          %p268 = scmp.lt.s32.totalorder %s16, 1
          %s269 = scalar_select %p268, %s16, 1
          %s270 = scalar_lea.vmem %s0, %s269
        $region36: #{decoder_a_forward.1} parent=31 // pred_fallthru
          _
        // Predicated region
        $region37: #{decoder_a_forward.1} parent=31 // pred_check
          %p271 = pneg %p62
        $region38: #{decoder_a_forward.1} parent=31 // pred_check_branch
          %273 = sbr.rel (%p271) target = $region40
        $region39: #{decoder_a_forward.1} parent=31 // pred_region
          %p274 = scmp.lt.s32.totalorder %s16, 1
          %s275 = scalar_select %p274, %s16, 1
          %s276 = smul.addr %s275, 2
          %s277 = smul.addr %s276, 8
          %s278 = scalar_lea.vmem %s1, %s277
        $region40: #{decoder_a_forward.1} parent=31 // pred_fallthru
          _
      $region32: #{decoder_a_forward.1} parent=5 // pred_fallthru
        _
      %p279 = scmp.le.s32.totalorder 1, %s16
      %p280 = scmp.lt.s32.totalorder %s16, 3
      %p281 = pnand %p279, %p280
      %p282 = pneg %p281
      // Predicated region
      $region41: #{decoder_a_forward.1} parent=5 // pred_check
        _
      $region42: #{decoder_a_forward.1} parent=5 // pred_check_branch
        %284 = sbr.rel (%p281) target = $region44
      $region43: #{decoder_a_forward.1} parent=5 // pred_region
        %s285 = ssub.s32 %s16, 1
        // Predicated region
        $region45: #{decoder_a_forward.1} parent=43 // pred_check
          %p286 = pneg %p89
        $region46: #{decoder_a_forward.1} parent=43 // pred_check_branch
          %288 = sbr.rel (%p286) target = $region48
        $region47: #{decoder_a_forward.1} parent=43 // pred_region
          %289 = dma.done [#allocation3], 2048
        $region48: #{decoder_a_forward.1} parent=43 // pred_fallthru
          _
        // Predicated region
        $region49: #{decoder_a_forward.1} parent=43 // pred_check
          %p290 = pneg %p110
        $region50: #{decoder_a_forward.1} parent=43 // pred_check_branch
          %292 = sbr.rel (%p290) target = $region52
        $region51: #{decoder_a_forward.1} parent=43 // pred_region
          %293 = dma.done [#allocation5], 131072
        $region52: #{decoder_a_forward.1} parent=43 // pred_fallthru
          _
        // Predicated region
        $region53: #{decoder_a_forward.1} parent=43 // pred_check
          %p294 = pneg %p152
        $region54: #{decoder_a_forward.1} parent=43 // pred_check_branch
          %296 = sbr.rel (%p294) target = $region56
        $region55: #{decoder_a_forward.1} parent=43 // pred_region
          %297 = dma.done [#allocation5], 4608
        $region56: #{decoder_a_forward.1} parent=43 // pred_fallthru
          _
        %p298 = scmp.lt.s32.totalorder %s21, 1
        %s299 = scalar_select %p298, %s21, 1
        %s300 = scalar_lea.vmem %s0, %s299
        %p301 = pneg %p42
        %p302 = pneg %p39
        %p303 = scmp.lt.s32.totalorder %s21, 1
        %s304 = scalar_select %p303, %s21, 1
        %s305 = smul.addr %s304, 2
        %s306 = smul.addr %s305, 8
        %s307 = scalar_lea.vmem %s1, %s306
        %p308 = pneg %p68
        %p309 = pneg %p65
        %p310 = pneg %p89
        %p311 = pneg %p86
        %p312 = pneg %p110
        %p313 = pneg %p107
        %p314 = pneg %p131
        %p315 = pneg %p128
        %p316 = pneg %p152
        %p317 = pneg %p149
        %p318 = pneg %p178
        %p319 = pneg %p175
        %p320 = scmp.lt.s32.totalorder %s21, 1
        %s321 = scalar_select %p320, %s21, 1
        %s322 = smul.addr %s321, 2
        %s323 = smul.addr %s322, 8
        %s324 = scalar_lea.vmem %s6, %s323
        %p325 = pneg %p204
        %p326 = pneg %p201
        %p327 = scmp.lt.s32.totalorder %s21, 1
        %s328 = scalar_select %p327, %s21, 1
        %s329 = scalar_lea.vmem %s7, %s328
        %p330 = scmp.lt.s32.totalorder %s21, 1
        %s331 = scalar_select %p330, %s21, 1
        %s332 = scalar_lea.vmem %s0, %s331
        %p333 = scmp.lt.s32.totalorder %s21, 1
        %s334 = scalar_select %p333, %s21, 1
        %s335 = smul.addr %s334, 2
        %s336 = smul.addr %s335, 8
        %s337 = scalar_lea.vmem %s1, %s336
        %p338 = scmp.lt.s32.totalorder %s21, 1
        %s339 = scalar_select %p338, %s21, 1
        %s340 = smul.addr %s339, 2
        %s341 = smul.addr %s340, 8
        %s342 = scalar_lea.vmem %s6, %s341
        %p343 = scmp.lt.s32.totalorder %s21, 1
        %s344 = scalar_select %p343, %s21, 1
        %s345 = scalar_lea.vmem %s7, %s344
        %v346 = vld [vmem:[%s332] sm:$0x1]
        %v347 = vld [vmem:[#allocation2] sm:$0xff]
        %v348 = vld [vmem:[#allocation2 + $0x8] sm:$0xff]
        %v349 = vld [vmem:[#allocation2 + $0x10] sm:$0xff]
        %v350 = vld [vmem:[#allocation2 + $0x18] sm:$0xff]
        %v351 = vld [vmem:[#allocation2 + $0x20] sm:$0xff]
        %v352 = vld [vmem:[#allocation2 + $0x28] sm:$0xff]
        %v353 = vld [vmem:[#allocation2 + $0x30] sm:$0xff]
        %v354 = vld [vmem:[#allocation2 + $0x38] sm:$0xff]
        %v355 = vld [vmem:[#allocation2 + $0x40] sm:$0xff]
        %v356 = vld [vmem:[#allocation2 + $0x48] sm:$0xff]
        %v357 = vld [vmem:[#allocation2 + $0x50] sm:$0xff]
        %v358 = vld [vmem:[#allocation2 + $0x58] sm:$0xff]
        %v359 = vld [vmem:[#allocation2 + $0x60] sm:$0xff]
        %v360 = vld [vmem:[#allocation2 + $0x68] sm:$0xff]
        %v361 = vld [vmem:[#allocation2 + $0x70] sm:$0xf]
        %v362 = vld [vmem:[#allocation2 + $0x78] sm:$0xf]
        %vm363 = vcmask 490496
        %v365 = vsel %vm363, %v346, 0
        %vm367 = vcmask 1043456
        %v369 = vsel %vm367, %v361, 0
        %v372 = vsel %vm367, %v362, 0
        %374 = vmatprep.subr.mxu0 %v348
        %375 = vmatpush1.msra.mxu0 %v347
        %376 = vmatprep.subr.mxu0 %v350
        %377 = vmatpush1.msra.mxu0 %v349
        %378 = vmatprep.subr.mxu0 %v352
        %379 = vmatpush1.msra.mxu0 %v351
        %380 = vmatprep.subr.mxu0 %v354
        %381 = vmatpush1.msra.mxu0 %v353
        %382 = vmatprep.subr.mxu0 %v356
        %383 = vmatpush1.msra.mxu0 %v355
        %384 = vmatprep.subr.mxu0 %v358
        %385 = vmatpush1.msra.mxu0 %v357
        %386 = vmatprep.subr.mxu0 %v360
        %387 = vmatpush1.msra.mxu0 %v359
        %388 = vmatprep.subr.mxu0 %v372
        %389 = vmatpush1.msra.mxu0 %v369
        %390 = vmatprep.subr.mxu0 0.0
        %391 = vmatpush1.msra.mxu0 0.0
        %392 = vmatprep.subr.mxu0 0.0
        %393 = vmatpush1.msra.mxu0 0.0
        %394 = vmatprep.subr.mxu0 0.0
        %395 = vmatpush1.msra.mxu0 0.0
        %396 = vmatprep.subr.mxu0 0.0
        %397 = vmatpush1.msra.mxu0 0.0
        %398 = vmatprep.subr.mxu0 0.0
        %399 = vmatpush1.msra.mxu0 0.0
        %400 = vmatprep.subr.mxu0 0.0
        %401 = vmatpush1.msra.mxu0 0.0
        %402 = vmatprep.subr.mxu0 0.0
        %403 = vmatpush1.msra.mxu0 0.0
        %404 = vmatprep.subr.mxu0 0.0
        %405 = vmatpush1.msra.mxu0 0.0
        %406 = vmatprep.subr.mxu0 0.0
        %407 = vmatpush1.msra.mxu0 0.0
        %408 = vmatprep.subr.mxu0 0.0
        %409 = vmatpush1.msra.mxu0 0.0
        %410 = vmatprep.subr.mxu0 0.0
        %411 = vmatpush1.msra.mxu0 0.0
        %412 = vmatprep.subr.mxu0 0.0
        %413 = vmatpush1.msra.mxu0 0.0
        %414 = vmatprep.subr.mxu0 0.0
        %415 = vmatpush1.msra.mxu0 0.0
        %416 = vmatprep.subr.mxu0 0.0
        %417 = vmatpush1.msra.mxu0 0.0
        %418 = vmatprep.subr.mxu0 0.0
        %419 = vmatpush1.msra.mxu0 0.0
        %420 = vmatprep.subr.mxu0 0.0
        %421 = vmatpush1.msra.mxu0 0.0
        %422 = vmatprep.subr.mxu0 0.0
        %423 = vmatpush1.msra.mxu0 0.0
        %424 = vmatprep.subr.mxu0 0.0
        %425 = vmatpush1.msra.mxu0 0.0
        %426 = vmatprep.subr.mxu0 0.0
        %427 = vmatpush1.msra.mxu0 0.0
        %428 = vmatprep.subr.mxu0 0.0
        %429 = vmatpush1.msra.mxu0 0.0
        %430 = vmatprep.subr.mxu0 0.0
        %431 = vmatpush1.msra.mxu0 0.0
        %432 = vmatprep.subr.mxu0 0.0
        %433 = vmatpush1.msra.mxu0 0.0
        %434 = vmatprep.subr.mxu0 0.0
        %435 = vmatpush1.msra.mxu0 0.0
        %436 = vmatprep.subr.mxu0 0.0
        %437 = vmatpush1.msra.mxu0 0.0
        %438 = vmatprep.mubr.f32.mxu0 0.0
        %439 = vmatmul.mubr.f32.gmra.mrb[0].mxu0 %v365
        %v440 = vpop.f32.mrb[0].mxu0
        %v441 = vadd.f32 0.0, %v440
        %v442 = vpop.f32.mrb[0].mxu0
        %v443 = vadd.f32 0.0, %v442
        %444 = vdwg.mxu0
        %v445 = vmax.f32 %v441, 0.0
        %v446 = vmax.f32 %v443, 0.0
        %v447 = vld [vmem:[#allocation4] sm:$0xff]
        %v448 = vld [vmem:[#allocation4 + $0x8] sm:$0xff]
        %v449 = vld [vmem:[#allocation4 + $0x10] sm:$0xff]
        %v450 = vld [vmem:[#allocation4 + $0x18] sm:$0xff]
        %v451 = vld [vmem:[#allocation4 + $0x20] sm:$0xff]
        %v452 = vld [vmem:[#allocation4 + $0x28] sm:$0xff]
        %v453 = vld [vmem:[#allocation4 + $0x30] sm:$0xff]
        %v454 = vld [vmem:[#allocation4 + $0x38] sm:$0xff]
        %v455 = vld [vmem:[#allocation4 + $0x40] sm:$0xff]
        %v456 = vld [vmem:[#allocation4 + $0x48] sm:$0xff]
        %v457 = vld [vmem:[#allocation4 + $0x50] sm:$0xff]
        %v458 = vld [vmem:[#allocation4 + $0x58] sm:$0xff]
        %v459 = vld [vmem:[#allocation4 + $0x60] sm:$0xff]
        %v460 = vld [vmem:[#allocation4 + $0x68] sm:$0xff]
        %v461 = vld [vmem:[#allocation4 + $0x70] sm:$0xff]
        %v462 = vld [vmem:[#allocation4 + $0x78] sm:$0xff]
        %v463 = vld [vmem:[#allocation4 + $0x80] sm:$0xff]
        %v464 = vld [vmem:[#allocation4 + $0x88] sm:$0xff]
        %v465 = vld [vmem:[#allocation4 + $0x90] sm:$0xff]
        %v466 = vld [vmem:[#allocation4 + $0x98] sm:$0xff]
        %v467 = vld [vmem:[#allocation4 + $0xa0] sm:$0xff]
        %v468 = vld [vmem:[#allocation4 + $0xa8] sm:$0xff]
        %v469 = vld [vmem:[#allocation4 + $0xb0] sm:$0xff]
        %v470 = vld [vmem:[#allocation4 + $0xb8] sm:$0xff]
        %v471 = vld [vmem:[#allocation4 + $0xc0] sm:$0xff]
        %v472 = vld [vmem:[#allocation4 + $0xc8] sm:$0xff]
        %v473 = vld [vmem:[#allocation4 + $0xd0] sm:$0xff]
        %v474 = vld [vmem:[#allocation4 + $0xd8] sm:$0xff]
        %v475 = vld [vmem:[#allocation4 + $0xe0] sm:$0xff]
        %v476 = vld [vmem:[#allocation4 + $0xe8] sm:$0xff]
        %v477 = vld [vmem:[#allocation4 + $0xf0] sm:$0xff]
        %v478 = vld [vmem:[#allocation4 + $0xf8] sm:$0xff]
        %v479 = vld [vmem:[#allocation4 + $0x100] sm:$0xff]
        %v480 = vld [vmem:[#allocation4 + $0x108] sm:$0xff]
        %v481 = vld [vmem:[#allocation4 + $0x110] sm:$0xff]
        %v482 = vld [vmem:[#allocation4 + $0x118] sm:$0xff]
        %v483 = vld [vmem:[#allocation4 + $0x120] sm:$0xff]
        %v484 = vld [vmem:[#allocation4 + $0x128] sm:$0xff]
        %v485 = vld [vmem:[#allocation4 + $0x130] sm:$0xff]
        %v486 = vld [vmem:[#allocation4 + $0x138] sm:$0xff]
        %v487 = vld [vmem:[#allocation4 + $0x140] sm:$0xff]
        %v488 = vld [vmem:[#allocation4 + $0x148] sm:$0xff]
        %v489 = vld [vmem:[#allocation4 + $0x150] sm:$0xff]
        %v490 = vld [vmem:[#allocation4 + $0x158] sm:$0xff]
        %v491 = vld [vmem:[#allocation4 + $0x160] sm:$0xff]
        %v492 = vld [vmem:[#allocation4 + $0x168] sm:$0xff]
        %v493 = vld [vmem:[#allocation4 + $0x170] sm:$0xff]
        %v494 = vld [vmem:[#allocation4 + $0x178] sm:$0xff]
        %v495 = vld [vmem:[#allocation4 + $0x180] sm:$0xff]
        %v496 = vld [vmem:[#allocation4 + $0x188] sm:$0xff]
        %v497 = vld [vmem:[#allocation4 + $0x190] sm:$0xff]
        %v498 = vld [vmem:[#allocation4 + $0x198] sm:$0xff]
        %v499 = vld [vmem:[#allocation4 + $0x1a0] sm:$0xff]
        %v500 = vld [vmem:[#allocation4 + $0x1a8] sm:$0xff]
        %v501 = vld [vmem:[#allocation4 + $0x1b0] sm:$0xff]
        %v502 = vld [vmem:[#allocation4 + $0x1b8] sm:$0xff]
        %v503 = vld [vmem:[#allocation4 + $0x1c0] sm:$0xff]
        %v504 = vld [vmem:[#allocation4 + $0x1c8] sm:$0xff]
        %v505 = vld [vmem:[#allocation4 + $0x1d0] sm:$0xff]
        %v506 = vld [vmem:[#allocation4 + $0x1d8] sm:$0xff]
        %v507 = vld [vmem:[#allocation4 + $0x1e0] sm:$0xff]
        %v508 = vld [vmem:[#allocation4 + $0x1e8] sm:$0xff]
        %v509 = vld [vmem:[#allocation4 + $0x1f0] sm:$0xff]
        %v510 = vld [vmem:[#allocation4 + $0x1f8] sm:$0xff]
        %v511 = vld [vmem:[#allocation4 + $0x200] sm:$0xff]
        %v512 = vld [vmem:[#allocation4 + $0x208] sm:$0xff]
        %v513 = vld [vmem:[#allocation4 + $0x210] sm:$0xff]
        %v514 = vld [vmem:[#allocation4 + $0x218] sm:$0xff]
        %v515 = vld [vmem:[#allocation4 + $0x220] sm:$0xff]
        %v516 = vld [vmem:[#allocation4 + $0x228] sm:$0xff]
        %v517 = vld [vmem:[#allocation4 + $0x230] sm:$0xff]
        %v518 = vld [vmem:[#allocation4 + $0x238] sm:$0xff]
        %v519 = vld [vmem:[#allocation4 + $0x240] sm:$0xff]
        %v520 = vld [vmem:[#allocation4 + $0x248] sm:$0xff]
        %v521 = vld [vmem:[#allocation4 + $0x250] sm:$0xff]
        %v522 = vld [vmem:[#allocation4 + $0x258] sm:$0xff]
        %v523 = vld [vmem:[#allocation4 + $0x260] sm:$0xff]
        %v524 = vld [vmem:[#allocation4 + $0x268] sm:$0xff]
        %v525 = vld [vmem:[#allocation4 + $0x270] sm:$0xff]
        %v526 = vld [vmem:[#allocation4 + $0x278] sm:$0xff]
        %v527 = vld [vmem:[#allocation4 + $0x280] sm:$0xff]
        %v528 = vld [vmem:[#allocation4 + $0x288] sm:$0xff]
        %v529 = vld [vmem:[#allocation4 + $0x290] sm:$0xff]
        %v530 = vld [vmem:[#allocation4 + $0x298] sm:$0xff]
        %v531 = vld [vmem:[#allocation4 + $0x2a0] sm:$0xff]
        %v532 = vld [vmem:[#allocation4 + $0x2a8] sm:$0xff]
        %v533 = vld [vmem:[#allocation4 + $0x2b0] sm:$0xff]
        %v534 = vld [vmem:[#allocation4 + $0x2b8] sm:$0xff]
        %v535 = vld [vmem:[#allocation4 + $0x2c0] sm:$0xff]
        %v536 = vld [vmem:[#allocation4 + $0x2c8] sm:$0xff]
        %v537 = vld [vmem:[#allocation4 + $0x2d0] sm:$0xff]
        %v538 = vld [vmem:[#allocation4 + $0x2d8] sm:$0xff]
        %v539 = vld [vmem:[#allocation4 + $0x2e0] sm:$0xff]
        %v540 = vld [vmem:[#allocation4 + $0x2e8] sm:$0xff]
        %v541 = vld [vmem:[#allocation4 + $0x2f0] sm:$0xff]
        %v542 = vld [vmem:[#allocation4 + $0x2f8] sm:$0xff]
        %v543 = vld [vmem:[#allocation4 + $0x300] sm:$0xff]
        %v544 = vld [vmem:[#allocation4 + $0x308] sm:$0xff]
        %v545 = vld [vmem:[#allocation4 + $0x310] sm:$0xff]
        %v546 = vld [vmem:[#allocation4 + $0x318] sm:$0xff]
        %v547 = vld [vmem:[#allocation4 + $0x320] sm:$0xff]
        %v548 = vld [vmem:[#allocation4 + $0x328] sm:$0xff]
        %v549 = vld [vmem:[#allocation4 + $0x330] sm:$0xff]
        %v550 = vld [vmem:[#allocation4 + $0x338] sm:$0xff]
        %v551 = vld [vmem:[#allocation4 + $0x340] sm:$0xff]
        %v552 = vld [vmem:[#allocation4 + $0x348] sm:$0xff]
        %v553 = vld [vmem:[#allocation4 + $0x350] sm:$0xff]
        %v554 = vld [vmem:[#allocation4 + $0x358] sm:$0xff]
        %v555 = vld [vmem:[#allocation4 + $0x360] sm:$0xff]
        %v556 = vld [vmem:[#allocation4 + $0x368] sm:$0xff]
        %v557 = vld [vmem:[#allocation4 + $0x370] sm:$0xff]
        %v558 = vld [vmem:[#allocation4 + $0x378] sm:$0xff]
        %v559 = vld [vmem:[#allocation4 + $0x380] sm:$0xff]
        %v560 = vld [vmem:[#allocation4 + $0x388] sm:$0xff]
        %v561 = vld [vmem:[#allocation4 + $0x390] sm:$0xff]
        %v562 = vld [vmem:[#allocation4 + $0x398] sm:$0xff]
        %v563 = vld [vmem:[#allocation4 + $0x3a0] sm:$0xff]
        %v564 = vld [vmem:[#allocation4 + $0x3a8] sm:$0xff]
        %v565 = vld [vmem:[#allocation4 + $0x3b0] sm:$0xff]
        %v566 = vld [vmem:[#allocation4 + $0x3b8] sm:$0xff]
        %v567 = vld [vmem:[#allocation4 + $0x3c0] sm:$0xff]
        %v568 = vld [vmem:[#allocation4 + $0x3c8] sm:$0xff]
        %v569 = vld [vmem:[#allocation4 + $0x3d0] sm:$0xff]
        %v570 = vld [vmem:[#allocation4 + $0x3d8] sm:$0xff]
        %v571 = vld [vmem:[#allocation4 + $0x3e0] sm:$0xff]
        %v572 = vld [vmem:[#allocation4 + $0x3e8] sm:$0xff]
        %v573 = vld [vmem:[#allocation4 + $0x3f0] sm:$0xff]
        %v574 = vld [vmem:[#allocation4 + $0x3f8] sm:$0xff]
        %v575 = vld [vmem:[#allocation4 + $0x400] sm:$0xff]
        %v576 = vld [vmem:[#allocation4 + $0x408] sm:$0xff]
        %v577 = vld [vmem:[#allocation4 + $0x410] sm:$0xff]
        %v578 = vld [vmem:[#allocation4 + $0x418] sm:$0xff]
        %v579 = vld [vmem:[#allocation4 + $0x420] sm:$0xff]
        %v580 = vld [vmem:[#allocation4 + $0x428] sm:$0xff]
        %v581 = vld [vmem:[#allocation4 + $0x430] sm:$0xff]
        %v582 = vld [vmem:[#allocation4 + $0x438] sm:$0xff]
        %v583 = vld [vmem:[#allocation4 + $0x440] sm:$0xff]
        %v584 = vld [vmem:[#allocation4 + $0x448] sm:$0xff]
        %v585 = vld [vmem:[#allocation4 + $0x450] sm:$0xff]
        %v586 = vld [vmem:[#allocation4 + $0x458] sm:$0xff]
        %v587 = vld [vmem:[#allocation4 + $0x460] sm:$0xff]
        %v588 = vld [vmem:[#allocation4 + $0x468] sm:$0xff]
        %v589 = vld [vmem:[#allocation4 + $0x470] sm:$0xff]
        %v590 = vld [vmem:[#allocation4 + $0x478] sm:$0xff]
        %v591 = vld [vmem:[#allocation4 + $0x480] sm:$0xff]
        %v592 = vld [vmem:[#allocation4 + $0x488] sm:$0xff]
        %v593 = vld [vmem:[#allocation4 + $0x490] sm:$0xff]
        %v594 = vld [vmem:[#allocation4 + $0x498] sm:$0xff]
        %v595 = vld [vmem:[#allocation4 + $0x4a0] sm:$0xff]
        %v596 = vld [vmem:[#allocation4 + $0x4a8] sm:$0xff]
        %v597 = vld [vmem:[#allocation4 + $0x4b0] sm:$0xff]
        %v598 = vld [vmem:[#allocation4 + $0x4b8] sm:$0xff]
        %v599 = vld [vmem:[#allocation4 + $0x4c0] sm:$0xff]
        %v600 = vld [vmem:[#allocation4 + $0x4c8] sm:$0xff]
        %v601 = vld [vmem:[#allocation4 + $0x4d0] sm:$0xff]
        %v602 = vld [vmem:[#allocation4 + $0x4d8] sm:$0xff]
        %v603 = vld [vmem:[#allocation4 + $0x4e0] sm:$0xff]
        %v604 = vld [vmem:[#allocation4 + $0x4e8] sm:$0xff]
        %v605 = vld [vmem:[#allocation4 + $0x4f0] sm:$0xff]
        %v606 = vld [vmem:[#allocation4 + $0x4f8] sm:$0xff]
        %v607 = vld [vmem:[#allocation4 + $0x500] sm:$0xff]
        %v608 = vld [vmem:[#allocation4 + $0x508] sm:$0xff]
        %v609 = vld [vmem:[#allocation4 + $0x510] sm:$0xff]
        %v610 = vld [vmem:[#allocation4 + $0x518] sm:$0xff]
        %v611 = vld [vmem:[#allocation4 + $0x520] sm:$0xff]
        %v612 = vld [vmem:[#allocation4 + $0x528] sm:$0xff]
        %v613 = vld [vmem:[#allocation4 + $0x530] sm:$0xff]
        %v614 = vld [vmem:[#allocation4 + $0x538] sm:$0xff]
        %v615 = vld [vmem:[#allocation4 + $0x540] sm:$0xff]
        %v616 = vld [vmem:[#allocation4 + $0x548] sm:$0xff]
        %v617 = vld [vmem:[#allocation4 + $0x550] sm:$0xff]
        %v618 = vld [vmem:[#allocation4 + $0x558] sm:$0xff]
        %v619 = vld [vmem:[#allocation4 + $0x560] sm:$0xff]
        %v620 = vld [vmem:[#allocation4 + $0x568] sm:$0xff]
        %v621 = vld [vmem:[#allocation4 + $0x570] sm:$0xff]
        %v622 = vld [vmem:[#allocation4 + $0x578] sm:$0xff]
        %v623 = vld [vmem:[#allocation4 + $0x580] sm:$0xff]
        %v624 = vld [vmem:[#allocation4 + $0x588] sm:$0xff]
        %v625 = vld [vmem:[#allocation4 + $0x590] sm:$0xff]
        %v626 = vld [vmem:[#allocation4 + $0x598] sm:$0xff]
        %v627 = vld [vmem:[#allocation4 + $0x5a0] sm:$0xff]
        %v628 = vld [vmem:[#allocation4 + $0x5a8] sm:$0xff]
        %v629 = vld [vmem:[#allocation4 + $0x5b0] sm:$0xff]
        %v630 = vld [vmem:[#allocation4 + $0x5b8] sm:$0xff]
        %v631 = vld [vmem:[#allocation4 + $0x5c0] sm:$0xff]
        %v632 = vld [vmem:[#allocation4 + $0x5c8] sm:$0xff]
        %v633 = vld [vmem:[#allocation4 + $0x5d0] sm:$0xff]
        %v634 = vld [vmem:[#allocation4 + $0x5d8] sm:$0xff]
        %v635 = vld [vmem:[#allocation4 + $0x5e0] sm:$0xff]
        %v636 = vld [vmem:[#allocation4 + $0x5e8] sm:$0xff]
        %v637 = vld [vmem:[#allocation4 + $0x5f0] sm:$0xff]
        %v638 = vld [vmem:[#allocation4 + $0x5f8] sm:$0xff]
        %v639 = vld [vmem:[#allocation4 + $0x600] sm:$0xff]
        %v640 = vld [vmem:[#allocation4 + $0x608] sm:$0xff]
        %v641 = vld [vmem:[#allocation4 + $0x610] sm:$0xff]
        %v642 = vld [vmem:[#allocation4 + $0x618] sm:$0xff]
        %v643 = vld [vmem:[#allocation4 + $0x620] sm:$0xff]
        %v644 = vld [vmem:[#allocation4 + $0x628] sm:$0xff]
        %v645 = vld [vmem:[#allocation4 + $0x630] sm:$0xff]
        %v646 = vld [vmem:[#allocation4 + $0x638] sm:$0xff]
        %v647 = vld [vmem:[#allocation4 + $0x640] sm:$0xff]
        %v648 = vld [vmem:[#allocation4 + $0x648] sm:$0xff]
        %v649 = vld [vmem:[#allocation4 + $0x650] sm:$0xff]
        %v650 = vld [vmem:[#allocation4 + $0x658] sm:$0xff]
        %v651 = vld [vmem:[#allocation4 + $0x660] sm:$0xff]
        %v652 = vld [vmem:[#allocation4 + $0x668] sm:$0xff]
        %v653 = vld [vmem:[#allocation4 + $0x670] sm:$0xff]
        %v654 = vld [vmem:[#allocation4 + $0x678] sm:$0xff]
        %v655 = vld [vmem:[#allocation4 + $0x680] sm:$0xff]
        %v656 = vld [vmem:[#allocation4 + $0x688] sm:$0xff]
        %v657 = vld [vmem:[#allocation4 + $0x690] sm:$0xff]
        %v658 = vld [vmem:[#allocation4 + $0x698] sm:$0xff]
        %v659 = vld [vmem:[#allocation4 + $0x6a0] sm:$0xff]
        %v660 = vld [vmem:[#allocation4 + $0x6a8] sm:$0xff]
        %v661 = vld [vmem:[#allocation4 + $0x6b0] sm:$0xff]
        %v662 = vld [vmem:[#allocation4 + $0x6b8] sm:$0xff]
        %v663 = vld [vmem:[#allocation4 + $0x6c0] sm:$0xff]
        %v664 = vld [vmem:[#allocation4 + $0x6c8] sm:$0xff]
        %v665 = vld [vmem:[#allocation4 + $0x6d0] sm:$0xff]
        %v666 = vld [vmem:[#allocation4 + $0x6d8] sm:$0xff]
        %v667 = vld [vmem:[#allocation4 + $0x6e0] sm:$0xff]
        %v668 = vld [vmem:[#allocation4 + $0x6e8] sm:$0xff]
        %v669 = vld [vmem:[#allocation4 + $0x6f0] sm:$0xff]
        %v670 = vld [vmem:[#allocation4 + $0x6f8] sm:$0xff]
        %v671 = vld [vmem:[#allocation4 + $0x700] sm:$0xff]
        %v672 = vld [vmem:[#allocation4 + $0x708] sm:$0xff]
        %v673 = vld [vmem:[#allocation4 + $0x710] sm:$0xff]
        %v674 = vld [vmem:[#allocation4 + $0x718] sm:$0xff]
        %v675 = vld [vmem:[#allocation4 + $0x720] sm:$0xff]
        %v676 = vld [vmem:[#allocation4 + $0x728] sm:$0xff]
        %v677 = vld [vmem:[#allocation4 + $0x730] sm:$0xff]
        %v678 = vld [vmem:[#allocation4 + $0x738] sm:$0xff]
        %v679 = vld [vmem:[#allocation4 + $0x740] sm:$0xff]
        %v680 = vld [vmem:[#allocation4 + $0x748] sm:$0xff]
        %v681 = vld [vmem:[#allocation4 + $0x750] sm:$0xff]
        %v682 = vld [vmem:[#allocation4 + $0x758] sm:$0xff]
        %v683 = vld [vmem:[#allocation4 + $0x760] sm:$0xff]
        %v684 = vld [vmem:[#allocation4 + $0x768] sm:$0xff]
        %v685 = vld [vmem:[#allocation4 + $0x770] sm:$0xff]
        %v686 = vld [vmem:[#allocation4 + $0x778] sm:$0xff]
        %v687 = vld [vmem:[#allocation4 + $0x780] sm:$0xff]
        %v688 = vld [vmem:[#allocation4 + $0x788] sm:$0xff]
        %v689 = vld [vmem:[#allocation4 + $0x790] sm:$0xff]
        %v690 = vld [vmem:[#allocation4 + $0x798] sm:$0xff]
        %v691 = vld [vmem:[#allocation4 + $0x7a0] sm:$0xff]
        %v692 = vld [vmem:[#allocation4 + $0x7a8] sm:$0xff]
        %v693 = vld [vmem:[#allocation4 + $0x7b0] sm:$0xff]
        %v694 = vld [vmem:[#allocation4 + $0x7b8] sm:$0xff]
        %v695 = vld [vmem:[#allocation4 + $0x7c0] sm:$0xff]
        %v696 = vld [vmem:[#allocation4 + $0x7c8] sm:$0xff]
        %v697 = vld [vmem:[#allocation4 + $0x7d0] sm:$0xff]
        %v698 = vld [vmem:[#allocation4 + $0x7d8] sm:$0xff]
        %v699 = vld [vmem:[#allocation4 + $0x7e0] sm:$0xff]
        %v700 = vld [vmem:[#allocation4 + $0x7e8] sm:$0xff]
        %v701 = vld [vmem:[#allocation4 + $0x7f0] sm:$0xff]
        %v702 = vld [vmem:[#allocation4 + $0x7f8] sm:$0xff]
        %v703 = vld [vmem:[#allocation4 + $0x800] sm:$0xff]
        %v704 = vld [vmem:[#allocation4 + $0x808] sm:$0xff]
        %v705 = vld [vmem:[#allocation4 + $0x810] sm:$0xff]
        %v706 = vld [vmem:[#allocation4 + $0x818] sm:$0xff]
        %v707 = vld [vmem:[#allocation4 + $0x820] sm:$0xff]
        %v708 = vld [vmem:[#allocation4 + $0x828] sm:$0xff]
        %v709 = vld [vmem:[#allocation4 + $0x830] sm:$0xff]
        %v710 = vld [vmem:[#allocation4 + $0x838] sm:$0xff]
        %v711 = vld [vmem:[#allocation4 + $0x840] sm:$0xff]
        %v712 = vld [vmem:[#allocation4 + $0x848] sm:$0xff]
        %v713 = vld [vmem:[#allocation4 + $0x850] sm:$0xff]
        %v714 = vld [vmem:[#allocation4 + $0x858] sm:$0xff]
        %v715 = vld [vmem:[#allocation4 + $0x860] sm:$0xff]
        %v716 = vld [vmem:[#allocation4 + $0x868] sm:$0xff]
        %v717 = vld [vmem:[#allocation4 + $0x870] sm:$0xff]
        %v718 = vld [vmem:[#allocation4 + $0x878] sm:$0xff]
        %v719 = vld [vmem:[#allocation4 + $0x880] sm:$0xff]
        %v720 = vld [vmem:[#allocation4 + $0x888] sm:$0xff]
        %v721 = vld [vmem:[#allocation4 + $0x890] sm:$0xff]
        %v722 = vld [vmem:[#allocation4 + $0x898] sm:$0xff]
        %v723 = vld [vmem:[#allocation4 + $0x8a0] sm:$0xff]
        %v724 = vld [vmem:[#allocation4 + $0x8a8] sm:$0xff]
        %v725 = vld [vmem:[#allocation4 + $0x8b0] sm:$0xff]
        %v726 = vld [vmem:[#allocation4 + $0x8b8] sm:$0xff]
        %v727 = vld [vmem:[#allocation4 + $0x8c0] sm:$0xff]
        %v728 = vld [vmem:[#allocation4 + $0x8c8] sm:$0xff]
        %v729 = vld [vmem:[#allocation4 + $0x8d0] sm:$0xff]
        %v730 = vld [vmem:[#allocation4 + $0x8d8] sm:$0xff]
        %v731 = vld [vmem:[#allocation4 + $0x8e0] sm:$0xff]
        %v732 = vld [vmem:[#allocation4 + $0x8e8] sm:$0xff]
        %v733 = vld [vmem:[#allocation4 + $0x8f0] sm:$0xff]
        %v734 = vld [vmem:[#allocation4 + $0x8f8] sm:$0xff]
        %v735 = vld [vmem:[#allocation4 + $0x900] sm:$0xff]
        %v736 = vld [vmem:[#allocation4 + $0x908] sm:$0xff]
        %v737 = vld [vmem:[#allocation4 + $0x910] sm:$0xff]
        %v738 = vld [vmem:[#allocation4 + $0x918] sm:$0xff]
        %v739 = vld [vmem:[#allocation4 + $0x920] sm:$0xff]
        %v740 = vld [vmem:[#allocation4 + $0x928] sm:$0xff]
        %v741 = vld [vmem:[#allocation4 + $0x930] sm:$0xff]
        %v742 = vld [vmem:[#allocation4 + $0x938] sm:$0xff]
        %v743 = vld [vmem:[#allocation4 + $0x940] sm:$0xff]
        %v744 = vld [vmem:[#allocation4 + $0x948] sm:$0xff]
        %v745 = vld [vmem:[#allocation4 + $0x950] sm:$0xff]
        %v746 = vld [vmem:[#allocation4 + $0x958] sm:$0xff]
        %v747 = vld [vmem:[#allocation4 + $0x960] sm:$0xff]
        %v748 = vld [vmem:[#allocation4 + $0x968] sm:$0xff]
        %v749 = vld [vmem:[#allocation4 + $0x970] sm:$0xff]
        %v750 = vld [vmem:[#allocation4 + $0x978] sm:$0xff]
        %v751 = vld [vmem:[#allocation4 + $0x980] sm:$0xff]
        %v752 = vld [vmem:[#allocation4 + $0x988] sm:$0xff]
        %v753 = vld [vmem:[#allocation4 + $0x990] sm:$0xff]
        %v754 = vld [vmem:[#allocation4 + $0x998] sm:$0xff]
        %v755 = vld [vmem:[#allocation4 + $0x9a0] sm:$0xff]
        %v756 = vld [vmem:[#allocation4 + $0x9a8] sm:$0xff]
        %v757 = vld [vmem:[#allocation4 + $0x9b0] sm:$0xff]
        %v758 = vld [vmem:[#allocation4 + $0x9b8] sm:$0xff]
        %v759 = vld [vmem:[#allocation4 + $0x9c0] sm:$0xff]
        %v760 = vld [vmem:[#allocation4 + $0x9c8] sm:$0xff]
        %v761 = vld [vmem:[#allocation4 + $0x9d0] sm:$0xff]
        %v762 = vld [vmem:[#allocation4 + $0x9d8] sm:$0xff]
        %v763 = vld [vmem:[#allocation4 + $0x9e0] sm:$0xff]
        %v764 = vld [vmem:[#allocation4 + $0x9e8] sm:$0xff]
        %v765 = vld [vmem:[#allocation4 + $0x9f0] sm:$0xff]
        %v766 = vld [vmem:[#allocation4 + $0x9f8] sm:$0xff]
        %v767 = vld [vmem:[#allocation4 + $0xa00] sm:$0xff]
        %v768 = vld [vmem:[#allocation4 + $0xa08] sm:$0xff]
        %v769 = vld [vmem:[#allocation4 + $0xa10] sm:$0xff]
        %v770 = vld [vmem:[#allocation4 + $0xa18] sm:$0xff]
        %v771 = vld [vmem:[#allocation4 + $0xa20] sm:$0xff]
        %v772 = vld [vmem:[#allocation4 + $0xa28] sm:$0xff]
        %v773 = vld [vmem:[#allocation4 + $0xa30] sm:$0xff]
        %v774 = vld [vmem:[#allocation4 + $0xa38] sm:$0xff]
        %v775 = vld [vmem:[#allocation4 + $0xa40] sm:$0xff]
        %v776 = vld [vmem:[#allocation4 + $0xa48] sm:$0xff]
        %v777 = vld [vmem:[#allocation4 + $0xa50] sm:$0xff]
        %v778 = vld [vmem:[#allocation4 + $0xa58] sm:$0xff]
        %v779 = vld [vmem:[#allocation4 + $0xa60] sm:$0xff]
        %v780 = vld [vmem:[#allocation4 + $0xa68] sm:$0xff]
        %v781 = vld [vmem:[#allocation4 + $0xa70] sm:$0xff]
        %v782 = vld [vmem:[#allocation4 + $0xa78] sm:$0xff]
        %v783 = vld [vmem:[#allocation4 + $0xa80] sm:$0xff]
        %v784 = vld [vmem:[#allocation4 + $0xa88] sm:$0xff]
        %v785 = vld [vmem:[#allocation4 + $0xa90] sm:$0xff]
        %v786 = vld [vmem:[#allocation4 + $0xa98] sm:$0xff]
        %v787 = vld [vmem:[#allocation4 + $0xaa0] sm:$0xff]
        %v788 = vld [vmem:[#allocation4 + $0xaa8] sm:$0xff]
        %v789 = vld [vmem:[#allocation4 + $0xab0] sm:$0xff]
        %v790 = vld [vmem:[#allocation4 + $0xab8] sm:$0xff]
        %v791 = vld [vmem:[#allocation4 + $0xac0] sm:$0xff]
        %v792 = vld [vmem:[#allocation4 + $0xac8] sm:$0xff]
        %v793 = vld [vmem:[#allocation4 + $0xad0] sm:$0xff]
        %v794 = vld [vmem:[#allocation4 + $0xad8] sm:$0xff]
        %v795 = vld [vmem:[#allocation4 + $0xae0] sm:$0xff]
        %v796 = vld [vmem:[#allocation4 + $0xae8] sm:$0xff]
        %v797 = vld [vmem:[#allocation4 + $0xaf0] sm:$0xff]
        %v798 = vld [vmem:[#allocation4 + $0xaf8] sm:$0xff]
        %v799 = vld [vmem:[#allocation4 + $0xb00] sm:$0xff]
        %v800 = vld [vmem:[#allocation4 + $0xb08] sm:$0xff]
        %v801 = vld [vmem:[#allocation4 + $0xb10] sm:$0xff]
        %v802 = vld [vmem:[#allocation4 + $0xb18] sm:$0xff]
        %v803 = vld [vmem:[#allocation4 + $0xb20] sm:$0xff]
        %v804 = vld [vmem:[#allocation4 + $0xb28] sm:$0xff]
        %v805 = vld [vmem:[#allocation4 + $0xb30] sm:$0xff]
        %v806 = vld [vmem:[#allocation4 + $0xb38] sm:$0xff]
        %v807 = vld [vmem:[#allocation4 + $0xb40] sm:$0xff]
        %v808 = vld [vmem:[#allocation4 + $0xb48] sm:$0xff]
        %v809 = vld [vmem:[#allocation4 + $0xb50] sm:$0xff]
        %v810 = vld [vmem:[#allocation4 + $0xb58] sm:$0xff]
        %v811 = vld [vmem:[#allocation4 + $0xb60] sm:$0xff]
        %v812 = vld [vmem:[#allocation4 + $0xb68] sm:$0xff]
        %v813 = vld [vmem:[#allocation4 + $0xb70] sm:$0xff]
        %v814 = vld [vmem:[#allocation4 + $0xb78] sm:$0xff]
        %v815 = vld [vmem:[#allocation4 + $0xb80] sm:$0xff]
        %v816 = vld [vmem:[#allocation4 + $0xb88] sm:$0xff]
        %v817 = vld [vmem:[#allocation4 + $0xb90] sm:$0xff]
        %v818 = vld [vmem:[#allocation4 + $0xb98] sm:$0xff]
        %v819 = vld [vmem:[#allocation4 + $0xba0] sm:$0xff]
        %v820 = vld [vmem:[#allocation4 + $0xba8] sm:$0xff]
        %v821 = vld [vmem:[#allocation4 + $0xbb0] sm:$0xff]
        %v822 = vld [vmem:[#allocation4 + $0xbb8] sm:$0xff]
        %v823 = vld [vmem:[#allocation4 + $0xbc0] sm:$0xff]
        %v824 = vld [vmem:[#allocation4 + $0xbc8] sm:$0xff]
        %v825 = vld [vmem:[#allocation4 + $0xbd0] sm:$0xff]
        %v826 = vld [vmem:[#allocation4 + $0xbd8] sm:$0xff]
        %v827 = vld [vmem:[#allocation4 + $0xbe0] sm:$0xff]
        %v828 = vld [vmem:[#allocation4 + $0xbe8] sm:$0xff]
        %v829 = vld [vmem:[#allocation4 + $0xbf0] sm:$0xff]
        %v830 = vld [vmem:[#allocation4 + $0xbf8] sm:$0xff]
        %v831 = vld [vmem:[#allocation4 + $0xc00] sm:$0xff]
        %v832 = vld [vmem:[#allocation4 + $0xc08] sm:$0xff]
        %v833 = vld [vmem:[#allocation4 + $0xc10] sm:$0xff]
        %v834 = vld [vmem:[#allocation4 + $0xc18] sm:$0xff]
        %v835 = vld [vmem:[#allocation4 + $0xc20] sm:$0xff]
        %v836 = vld [vmem:[#allocation4 + $0xc28] sm:$0xff]
        %v837 = vld [vmem:[#allocation4 + $0xc30] sm:$0xff]
        %v838 = vld [vmem:[#allocation4 + $0xc38] sm:$0xff]
        %v839 = vld [vmem:[#allocation4 + $0xc40] sm:$0xff]
        %v840 = vld [vmem:[#allocation4 + $0xc48] sm:$0xff]
        %v841 = vld [vmem:[#allocation4 + $0xc50] sm:$0xff]
        %v842 = vld [vmem:[#allocation4 + $0xc58] sm:$0xff]
        %v843 = vld [vmem:[#allocation4 + $0xc60] sm:$0xff]
        %v844 = vld [vmem:[#allocation4 + $0xc68] sm:$0xff]
        %v845 = vld [vmem:[#allocation4 + $0xc70] sm:$0xff]
        %v846 = vld [vmem:[#allocation4 + $0xc78] sm:$0xff]
        %v847 = vld [vmem:[#allocation4 + $0xc80] sm:$0xff]
        %v848 = vld [vmem:[#allocation4 + $0xc88] sm:$0xff]
        %v849 = vld [vmem:[#allocation4 + $0xc90] sm:$0xff]
        %v850 = vld [vmem:[#allocation4 + $0xc98] sm:$0xff]
        %v851 = vld [vmem:[#allocation4 + $0xca0] sm:$0xff]
        %v852 = vld [vmem:[#allocation4 + $0xca8] sm:$0xff]
        %v853 = vld [vmem:[#allocation4 + $0xcb0] sm:$0xff]
        %v854 = vld [vmem:[#allocation4 + $0xcb8] sm:$0xff]
        %v855 = vld [vmem:[#allocation4 + $0xcc0] sm:$0xff]
        %v856 = vld [vmem:[#allocation4 + $0xcc8] sm:$0xff]
        %v857 = vld [vmem:[#allocation4 + $0xcd0] sm:$0xff]
        %v858 = vld [vmem:[#allocation4 + $0xcd8] sm:$0xff]
        %v859 = vld [vmem:[#allocation4 + $0xce0] sm:$0xff]
        %v860 = vld [vmem:[#allocation4 + $0xce8] sm:$0xff]
        %v861 = vld [vmem:[#allocation4 + $0xcf0] sm:$0xff]
        %v862 = vld [vmem:[#allocation4 + $0xcf8] sm:$0xff]
        %v863 = vld [vmem:[#allocation4 + $0xd00] sm:$0xff]
        %v864 = vld [vmem:[#allocation4 + $0xd08] sm:$0xff]
        %v865 = vld [vmem:[#allocation4 + $0xd10] sm:$0xff]
        %v866 = vld [vmem:[#allocation4 + $0xd18] sm:$0xff]
        %v867 = vld [vmem:[#allocation4 + $0xd20] sm:$0xff]
        %v868 = vld [vmem:[#allocation4 + $0xd28] sm:$0xff]
        %v869 = vld [vmem:[#allocation4 + $0xd30] sm:$0xff]
        %v870 = vld [vmem:[#allocation4 + $0xd38] sm:$0xff]
        %v871 = vld [vmem:[#allocation4 + $0xd40] sm:$0xff]
        %v872 = vld [vmem:[#allocation4 + $0xd48] sm:$0xff]
        %v873 = vld [vmem:[#allocation4 + $0xd50] sm:$0xff]
        %v874 = vld [vmem:[#allocation4 + $0xd58] sm:$0xff]
        %v875 = vld [vmem:[#allocation4 + $0xd60] sm:$0xff]
        %v876 = vld [vmem:[#allocation4 + $0xd68] sm:$0xff]
        %v877 = vld [vmem:[#allocation4 + $0xd70] sm:$0xff]
        %v878 = vld [vmem:[#allocation4 + $0xd78] sm:$0xff]
        %v879 = vld [vmem:[#allocation4 + $0xd80] sm:$0xff]
        %v880 = vld [vmem:[#allocation4 + $0xd88] sm:$0xff]
        %v881 = vld [vmem:[#allocation4 + $0xd90] sm:$0xff]
        %v882 = vld [vmem:[#allocation4 + $0xd98] sm:$0xff]
        %v883 = vld [vmem:[#allocation4 + $0xda0] sm:$0xff]
        %v884 = vld [vmem:[#allocation4 + $0xda8] sm:$0xff]
        %v885 = vld [vmem:[#allocation4 + $0xdb0] sm:$0xff]
        %v886 = vld [vmem:[#allocation4 + $0xdb8] sm:$0xff]
        %v887 = vld [vmem:[#allocation4 + $0xdc0] sm:$0xff]
        %v888 = vld [vmem:[#allocation4 + $0xdc8] sm:$0xff]
        %v889 = vld [vmem:[#allocation4 + $0xdd0] sm:$0xff]
        %v890 = vld [vmem:[#allocation4 + $0xdd8] sm:$0xff]
        %v891 = vld [vmem:[#allocation4 + $0xde0] sm:$0xff]
        %v892 = vld [vmem:[#allocation4 + $0xde8] sm:$0xff]
        %v893 = vld [vmem:[#allocation4 + $0xdf0] sm:$0xff]
        %v894 = vld [vmem:[#allocation4 + $0xdf8] sm:$0xff]
        %v895 = vld [vmem:[#allocation4 + $0xe00] sm:$0xff]
        %v896 = vld [vmem:[#allocation4 + $0xe08] sm:$0xff]
        %v897 = vld [vmem:[#allocation4 + $0xe10] sm:$0xff]
        %v898 = vld [vmem:[#allocation4 + $0xe18] sm:$0xff]
        %v899 = vld [vmem:[#allocation4 + $0xe20] sm:$0xff]
        %v900 = vld [vmem:[#allocation4 + $0xe28] sm:$0xff]
        %v901 = vld [vmem:[#allocation4 + $0xe30] sm:$0xff]
        %v902 = vld [vmem:[#allocation4 + $0xe38] sm:$0xff]
        %v903 = vld [vmem:[#allocation4 + $0xe40] sm:$0xff]
        %v904 = vld [vmem:[#allocation4 + $0xe48] sm:$0xff]
        %v905 = vld [vmem:[#allocation4 + $0xe50] sm:$0xff]
        %v906 = vld [vmem:[#allocation4 + $0xe58] sm:$0xff]
        %v907 = vld [vmem:[#allocation4 + $0xe60] sm:$0xff]
        %v908 = vld [vmem:[#allocation4 + $0xe68] sm:$0xff]
        %v909 = vld [vmem:[#allocation4 + $0xe70] sm:$0xff]
        %v910 = vld [vmem:[#allocation4 + $0xe78] sm:$0xff]
        %v911 = vld [vmem:[#allocation4 + $0xe80] sm:$0xff]
        %v912 = vld [vmem:[#allocation4 + $0xe88] sm:$0xff]
        %v913 = vld [vmem:[#allocation4 + $0xe90] sm:$0xff]
        %v914 = vld [vmem:[#allocation4 + $0xe98] sm:$0xff]
        %v915 = vld [vmem:[#allocation4 + $0xea0] sm:$0xff]
        %v916 = vld [vmem:[#allocation4 + $0xea8] sm:$0xff]
        %v917 = vld [vmem:[#allocation4 + $0xeb0] sm:$0xff]
        %v918 = vld [vmem:[#allocation4 + $0xeb8] sm:$0xff]
        %v919 = vld [vmem:[#allocation4 + $0xec0] sm:$0xff]
        %v920 = vld [vmem:[#allocation4 + $0xec8] sm:$0xff]
        %v921 = vld [vmem:[#allocation4 + $0xed0] sm:$0xff]
        %v922 = vld [vmem:[#allocation4 + $0xed8] sm:$0xff]
        %v923 = vld [vmem:[#allocation4 + $0xee0] sm:$0xff]
        %v924 = vld [vmem:[#allocation4 + $0xee8] sm:$0xff]
        %v925 = vld [vmem:[#allocation4 + $0xef0] sm:$0xff]
        %v926 = vld [vmem:[#allocation4 + $0xef8] sm:$0xff]
        %v927 = vld [vmem:[#allocation4 + $0xf00] sm:$0xff]
        %v928 = vld [vmem:[#allocation4 + $0xf08] sm:$0xff]
        %v929 = vld [vmem:[#allocation4 + $0xf10] sm:$0xff]
        %v930 = vld [vmem:[#allocation4 + $0xf18] sm:$0xff]
        %v931 = vld [vmem:[#allocation4 + $0xf20] sm:$0xff]
        %v932 = vld [vmem:[#allocation4 + $0xf28] sm:$0xff]
        %v933 = vld [vmem:[#allocation4 + $0xf30] sm:$0xff]
        %v934 = vld [vmem:[#allocation4 + $0xf38] sm:$0xff]
        %v935 = vld [vmem:[#allocation4 + $0xf40] sm:$0xff]
        %v936 = vld [vmem:[#allocation4 + $0xf48] sm:$0xff]
        %v937 = vld [vmem:[#allocation4 + $0xf50] sm:$0xff]
        %v938 = vld [vmem:[#allocation4 + $0xf58] sm:$0xff]
        %v939 = vld [vmem:[#allocation4 + $0xf60] sm:$0xff]
        %v940 = vld [vmem:[#allocation4 + $0xf68] sm:$0xff]
        %v941 = vld [vmem:[#allocation4 + $0xf70] sm:$0xff]
        %v942 = vld [vmem:[#allocation4 + $0xf78] sm:$0xff]
        %v943 = vld [vmem:[#allocation4 + $0xf80] sm:$0xff]
        %v944 = vld [vmem:[#allocation4 + $0xf88] sm:$0xff]
        %v945 = vld [vmem:[#allocation4 + $0xf90] sm:$0xff]
        %v946 = vld [vmem:[#allocation4 + $0xf98] sm:$0xff]
        %v947 = vld [vmem:[#allocation4 + $0xfa0] sm:$0xff]
        %v948 = vld [vmem:[#allocation4 + $0xfa8] sm:$0xff]
        %v949 = vld [vmem:[#allocation4 + $0xfb0] sm:$0xff]
        %v950 = vld [vmem:[#allocation4 + $0xfb8] sm:$0xff]
        %v951 = vld [vmem:[#allocation4 + $0xfc0] sm:$0xff]
        %v952 = vld [vmem:[#allocation4 + $0xfc8] sm:$0xff]
        %v953 = vld [vmem:[#allocation4 + $0xfd0] sm:$0xff]
        %v954 = vld [vmem:[#allocation4 + $0xfd8] sm:$0xff]
        %v955 = vld [vmem:[#allocation4 + $0xfe0] sm:$0xff]
        %v956 = vld [vmem:[#allocation4 + $0xfe8] sm:$0xff]
        %v957 = vld [vmem:[#allocation4 + $0xff0] sm:$0xff]
        %v958 = vld [vmem:[#allocation4 + $0xff8] sm:$0xff]
        %v959 = vld [vmem:[#allocation4 + $0x1000] sm:$0xff]
        %v960 = vld [vmem:[#allocation4 + $0x1008] sm:$0xff]
        %v961 = vld [vmem:[#allocation4 + $0x1010] sm:$0xff]
        %v962 = vld [vmem:[#allocation4 + $0x1018] sm:$0xff]
        %v963 = vld [vmem:[#allocation4 + $0x1020] sm:$0xff]
        %v964 = vld [vmem:[#allocation4 + $0x1028] sm:$0xff]
        %v965 = vld [vmem:[#allocation4 + $0x1030] sm:$0xff]
        %v966 = vld [vmem:[#allocation4 + $0x1038] sm:$0xff]
        %v967 = vld [vmem:[#allocation4 + $0x1040] sm:$0xff]
        %v968 = vld [vmem:[#allocation4 + $0x1048] sm:$0xff]
        %v969 = vld [vmem:[#allocation4 + $0x1050] sm:$0xff]
        %v970 = vld [vmem:[#allocation4 + $0x1058] sm:$0xff]
        %v971 = vld [vmem:[#allocation4 + $0x1060] sm:$0xff]
        %v972 = vld [vmem:[#allocation4 + $0x1068] sm:$0xff]
        %v973 = vld [vmem:[#allocation4 + $0x1070] sm:$0xff]
        %v974 = vld [vmem:[#allocation4 + $0x1078] sm:$0xff]
        %v975 = vld [vmem:[#allocation4 + $0x1080] sm:$0xff]
        %v976 = vld [vmem:[#allocation4 + $0x1088] sm:$0xff]
        %v977 = vld [vmem:[#allocation4 + $0x1090] sm:$0xff]
        %v978 = vld [vmem:[#allocation4 + $0x1098] sm:$0xff]
        %v979 = vld [vmem:[#allocation4 + $0x10a0] sm:$0xff]
        %v980 = vld [vmem:[#allocation4 + $0x10a8] sm:$0xff]
        %v981 = vld [vmem:[#allocation4 + $0x10b0] sm:$0xff]
        %v982 = vld [vmem:[#allocation4 + $0x10b8] sm:$0xff]
        %v983 = vld [vmem:[#allocation4 + $0x10c0] sm:$0xff]
        %v984 = vld [vmem:[#allocation4 + $0x10c8] sm:$0xff]
        %v985 = vld [vmem:[#allocation4 + $0x10d0] sm:$0xff]
        %v986 = vld [vmem:[#allocation4 + $0x10d8] sm:$0xff]
        %v987 = vld [vmem:[#allocation4 + $0x10e0] sm:$0xff]
        %v988 = vld [vmem:[#allocation4 + $0x10e8] sm:$0xff]
        %v989 = vld [vmem:[#allocation4 + $0x10f0] sm:$0xff]
        %v990 = vld [vmem:[#allocation4 + $0x10f8] sm:$0xff]
        %v991 = vld [vmem:[#allocation4 + $0x1100] sm:$0xff]
        %v992 = vld [vmem:[#allocation4 + $0x1108] sm:$0xff]
        %v993 = vld [vmem:[#allocation4 + $0x1110] sm:$0xff]
        %v994 = vld [vmem:[#allocation4 + $0x1118] sm:$0xff]
        %v995 = vld [vmem:[#allocation4 + $0x1120] sm:$0xff]
        %v996 = vld [vmem:[#allocation4 + $0x1128] sm:$0xff]
        %v997 = vld [vmem:[#allocation4 + $0x1130] sm:$0xff]
        %v998 = vld [vmem:[#allocation4 + $0x1138] sm:$0xff]
        %v999 = vld [vmem:[#allocation4 + $0x1140] sm:$0xff]
        %v1000 = vld [vmem:[#allocation4 + $0x1148] sm:$0xff]
        %v1001 = vld [vmem:[#allocation4 + $0x1150] sm:$0xff]
        %v1002 = vld [vmem:[#allocation4 + $0x1158] sm:$0xff]
        %v1003 = vld [vmem:[#allocation4 + $0x1160] sm:$0xff]
        %v1004 = vld [vmem:[#allocation4 + $0x1168] sm:$0xff]
        %v1005 = vld [vmem:[#allocation4 + $0x1170] sm:$0xff]
        %v1006 = vld [vmem:[#allocation4 + $0x1178] sm:$0xff]
        %v1007 = vld [vmem:[#allocation4 + $0x1180] sm:$0xff]
        %v1008 = vld [vmem:[#allocation4 + $0x1188] sm:$0xff]
        %v1009 = vld [vmem:[#allocation4 + $0x1190] sm:$0xff]
        %v1010 = vld [vmem:[#allocation4 + $0x1198] sm:$0xff]
        %v1011 = vld [vmem:[#allocation4 + $0x11a0] sm:$0xff]
        %v1012 = vld [vmem:[#allocation4 + $0x11a8] sm:$0xff]
        %v1013 = vld [vmem:[#allocation4 + $0x11b0] sm:$0xff]
        %v1014 = vld [vmem:[#allocation4 + $0x11b8] sm:$0xff]
        %v1015 = vld [vmem:[#allocation4 + $0x11c0] sm:$0xff]
        %v1016 = vld [vmem:[#allocation4 + $0x11c8] sm:$0xff]
        %v1017 = vld [vmem:[#allocation4 + $0x11d0] sm:$0xff]
        %v1018 = vld [vmem:[#allocation4 + $0x11d8] sm:$0xff]
        %v1019 = vld [vmem:[#allocation4 + $0x11e0] sm:$0xff]
        %v1020 = vld [vmem:[#allocation4 + $0x11e8] sm:$0xff]
        %v1021 = vld [vmem:[#allocation4 + $0x11f0] sm:$0xff]
        %v1022 = vld [vmem:[#allocation4 + $0x11f8] sm:$0xff]
        %v1023 = vld [vmem:[#allocation4 + $0x1200] sm:$0xff]
        %v1024 = vld [vmem:[#allocation4 + $0x1208] sm:$0xff]
        %v1025 = vld [vmem:[#allocation4 + $0x1210] sm:$0xff]
        %v1026 = vld [vmem:[#allocation4 + $0x1218] sm:$0xff]
        %v1027 = vld [vmem:[#allocation4 + $0x1220] sm:$0xff]
        %v1028 = vld [vmem:[#allocation4 + $0x1228] sm:$0xff]
        %v1029 = vld [vmem:[#allocation4 + $0x1230] sm:$0xff]
        %v1030 = vld [vmem:[#allocation4 + $0x1238] sm:$0xff]
        %v1031 = vld [vmem:[#allocation4 + $0x1240] sm:$0xff]
        %v1032 = vld [vmem:[#allocation4 + $0x1248] sm:$0xff]
        %v1033 = vld [vmem:[#allocation4 + $0x1250] sm:$0xff]
        %v1034 = vld [vmem:[#allocation4 + $0x1258] sm:$0xff]
        %v1035 = vld [vmem:[#allocation4 + $0x1260] sm:$0xff]
        %v1036 = vld [vmem:[#allocation4 + $0x1268] sm:$0xff]
        %v1037 = vld [vmem:[#allocation4 + $0x1270] sm:$0xff]
        %v1038 = vld [vmem:[#allocation4 + $0x1278] sm:$0xff]
        %v1039 = vld [vmem:[#allocation4 + $0x1280] sm:$0xff]
        %v1040 = vld [vmem:[#allocation4 + $0x1288] sm:$0xff]
        %v1041 = vld [vmem:[#allocation4 + $0x1290] sm:$0xff]
        %v1042 = vld [vmem:[#allocation4 + $0x1298] sm:$0xff]
        %v1043 = vld [vmem:[#allocation4 + $0x12a0] sm:$0xff]
        %v1044 = vld [vmem:[#allocation4 + $0x12a8] sm:$0xff]
        %v1045 = vld [vmem:[#allocation4 + $0x12b0] sm:$0xff]
        %v1046 = vld [vmem:[#allocation4 + $0x12b8] sm:$0xff]
        %v1047 = vld [vmem:[#allocation4 + $0x12c0] sm:$0xff]
        %v1048 = vld [vmem:[#allocation4 + $0x12c8] sm:$0xff]
        %v1049 = vld [vmem:[#allocation4 + $0x12d0] sm:$0xff]
        %v1050 = vld [vmem:[#allocation4 + $0x12d8] sm:$0xff]
        %v1051 = vld [vmem:[#allocation4 + $0x12e0] sm:$0xff]
        %v1052 = vld [vmem:[#allocation4 + $0x12e8] sm:$0xff]
        %v1053 = vld [vmem:[#allocation4 + $0x12f0] sm:$0xff]
        %v1054 = vld [vmem:[#allocation4 + $0x12f8] sm:$0xff]
        %v1055 = vld [vmem:[#allocation4 + $0x1300] sm:$0xff]
        %v1056 = vld [vmem:[#allocation4 + $0x1308] sm:$0xff]
        %v1057 = vld [vmem:[#allocation4 + $0x1310] sm:$0xff]
        %v1058 = vld [vmem:[#allocation4 + $0x1318] sm:$0xff]
        %v1059 = vld [vmem:[#allocation4 + $0x1320] sm:$0xff]
        %v1060 = vld [vmem:[#allocation4 + $0x1328] sm:$0xff]
        %v1061 = vld [vmem:[#allocation4 + $0x1330] sm:$0xff]
        %v1062 = vld [vmem:[#allocation4 + $0x1338] sm:$0xff]
        %v1063 = vld [vmem:[#allocation4 + $0x1340] sm:$0xff]
        %v1064 = vld [vmem:[#allocation4 + $0x1348] sm:$0xff]
        %v1065 = vld [vmem:[#allocation4 + $0x1350] sm:$0xff]
        %v1066 = vld [vmem:[#allocation4 + $0x1358] sm:$0xff]
        %v1067 = vld [vmem:[#allocation4 + $0x1360] sm:$0xff]
        %v1068 = vld [vmem:[#allocation4 + $0x1368] sm:$0xff]
        %v1069 = vld [vmem:[#allocation4 + $0x1370] sm:$0xff]
        %v1070 = vld [vmem:[#allocation4 + $0x1378] sm:$0xff]
        %v1071 = vld [vmem:[#allocation4 + $0x1380] sm:$0xff]
        %v1072 = vld [vmem:[#allocation4 + $0x1388] sm:$0xff]
        %v1073 = vld [vmem:[#allocation4 + $0x1390] sm:$0xff]
        %v1074 = vld [vmem:[#allocation4 + $0x1398] sm:$0xff]
        %v1075 = vld [vmem:[#allocation4 + $0x13a0] sm:$0xff]
        %v1076 = vld [vmem:[#allocation4 + $0x13a8] sm:$0xff]
        %v1077 = vld [vmem:[#allocation4 + $0x13b0] sm:$0xff]
        %v1078 = vld [vmem:[#allocation4 + $0x13b8] sm:$0xff]
        %v1079 = vld [vmem:[#allocation4 + $0x13c0] sm:$0xff]
        %v1080 = vld [vmem:[#allocation4 + $0x13c8] sm:$0xff]
        %v1081 = vld [vmem:[#allocation4 + $0x13d0] sm:$0xff]
        %v1082 = vld [vmem:[#allocation4 + $0x13d8] sm:$0xff]
        %v1083 = vld [vmem:[#allocation4 + $0x13e0] sm:$0xff]
        %v1084 = vld [vmem:[#allocation4 + $0x13e8] sm:$0xff]
        %v1085 = vld [vmem:[#allocation4 + $0x13f0] sm:$0xff]
        %v1086 = vld [vmem:[#allocation4 + $0x13f8] sm:$0xff]
        %v1087 = vld [vmem:[#allocation4 + $0x1400] sm:$0xff]
        %v1088 = vld [vmem:[#allocation4 + $0x1408] sm:$0xff]
        %v1089 = vld [vmem:[#allocation4 + $0x1410] sm:$0xff]
        %v1090 = vld [vmem:[#allocation4 + $0x1418] sm:$0xff]
        %v1091 = vld [vmem:[#allocation4 + $0x1420] sm:$0xff]
        %v1092 = vld [vmem:[#allocation4 + $0x1428] sm:$0xff]
        %v1093 = vld [vmem:[#allocation4 + $0x1430] sm:$0xff]
        %v1094 = vld [vmem:[#allocation4 + $0x1438] sm:$0xff]
        %v1095 = vld [vmem:[#allocation4 + $0x1440] sm:$0xff]
        %v1096 = vld [vmem:[#allocation4 + $0x1448] sm:$0xff]
        %v1097 = vld [vmem:[#allocation4 + $0x1450] sm:$0xff]
        %v1098 = vld [vmem:[#allocation4 + $0x1458] sm:$0xff]
        %v1099 = vld [vmem:[#allocation4 + $0x1460] sm:$0xff]
        %v1100 = vld [vmem:[#allocation4 + $0x1468] sm:$0xff]
        %v1101 = vld [vmem:[#allocation4 + $0x1470] sm:$0xff]
        %v1102 = vld [vmem:[#allocation4 + $0x1478] sm:$0xff]
        %v1103 = vld [vmem:[#allocation4 + $0x1480] sm:$0xff]
        %v1104 = vld [vmem:[#allocation4 + $0x1488] sm:$0xff]
        %v1105 = vld [vmem:[#allocation4 + $0x1490] sm:$0xff]
        %v1106 = vld [vmem:[#allocation4 + $0x1498] sm:$0xff]
        %v1107 = vld [vmem:[#allocation4 + $0x14a0] sm:$0xff]
        %v1108 = vld [vmem:[#allocation4 + $0x14a8] sm:$0xff]
        %v1109 = vld [vmem:[#allocation4 + $0x14b0] sm:$0xff]
        %v1110 = vld [vmem:[#allocation4 + $0x14b8] sm:$0xff]
        %v1111 = vld [vmem:[#allocation4 + $0x14c0] sm:$0xff]
        %v1112 = vld [vmem:[#allocation4 + $0x14c8] sm:$0xff]
        %v1113 = vld [vmem:[#allocation4 + $0x14d0] sm:$0xff]
        %v1114 = vld [vmem:[#allocation4 + $0x14d8] sm:$0xff]
        %v1115 = vld [vmem:[#allocation4 + $0x14e0] sm:$0xff]
        %v1116 = vld [vmem:[#allocation4 + $0x14e8] sm:$0xff]
        %v1117 = vld [vmem:[#allocation4 + $0x14f0] sm:$0xff]
        %v1118 = vld [vmem:[#allocation4 + $0x14f8] sm:$0xff]
        %v1119 = vld [vmem:[#allocation4 + $0x1500] sm:$0xff]
        %v1120 = vld [vmem:[#allocation4 + $0x1508] sm:$0xff]
        %v1121 = vld [vmem:[#allocation4 + $0x1510] sm:$0xff]
        %v1122 = vld [vmem:[#allocation4 + $0x1518] sm:$0xff]
        %v1123 = vld [vmem:[#allocation4 + $0x1520] sm:$0xff]
        %v1124 = vld [vmem:[#allocation4 + $0x1528] sm:$0xff]
        %v1125 = vld [vmem:[#allocation4 + $0x1530] sm:$0xff]
        %v1126 = vld [vmem:[#allocation4 + $0x1538] sm:$0xff]
        %v1127 = vld [vmem:[#allocation4 + $0x1540] sm:$0xff]
        %v1128 = vld [vmem:[#allocation4 + $0x1548] sm:$0xff]
        %v1129 = vld [vmem:[#allocation4 + $0x1550] sm:$0xff]
        %v1130 = vld [vmem:[#allocation4 + $0x1558] sm:$0xff]
        %v1131 = vld [vmem:[#allocation4 + $0x1560] sm:$0xff]
        %v1132 = vld [vmem:[#allocation4 + $0x1568] sm:$0xff]
        %v1133 = vld [vmem:[#allocation4 + $0x1570] sm:$0xff]
        %v1134 = vld [vmem:[#allocation4 + $0x1578] sm:$0xff]
        %v1135 = vld [vmem:[#allocation4 + $0x1580] sm:$0xff]
        %v1136 = vld [vmem:[#allocation4 + $0x1588] sm:$0xff]
        %v1137 = vld [vmem:[#allocation4 + $0x1590] sm:$0xff]
        %v1138 = vld [vmem:[#allocation4 + $0x1598] sm:$0xff]
        %v1139 = vld [vmem:[#allocation4 + $0x15a0] sm:$0xff]
        %v1140 = vld [vmem:[#allocation4 + $0x15a8] sm:$0xff]
        %v1141 = vld [vmem:[#allocation4 + $0x15b0] sm:$0xff]
        %v1142 = vld [vmem:[#allocation4 + $0x15b8] sm:$0xff]
        %v1143 = vld [vmem:[#allocation4 + $0x15c0] sm:$0xff]
        %v1144 = vld [vmem:[#allocation4 + $0x15c8] sm:$0xff]
        %v1145 = vld [vmem:[#allocation4 + $0x15d0] sm:$0xff]
        %v1146 = vld [vmem:[#allocation4 + $0x15d8] sm:$0xff]
        %v1147 = vld [vmem:[#allocation4 + $0x15e0] sm:$0xff]
        %v1148 = vld [vmem:[#allocation4 + $0x15e8] sm:$0xff]
        %v1149 = vld [vmem:[#allocation4 + $0x15f0] sm:$0xff]
        %v1150 = vld [vmem:[#allocation4 + $0x15f8] sm:$0xff]
        %v1151 = vld [vmem:[#allocation4 + $0x1600] sm:$0xff]
        %v1152 = vld [vmem:[#allocation4 + $0x1608] sm:$0xff]
        %v1153 = vld [vmem:[#allocation4 + $0x1610] sm:$0xff]
        %v1154 = vld [vmem:[#allocation4 + $0x1618] sm:$0xff]
        %v1155 = vld [vmem:[#allocation4 + $0x1620] sm:$0xff]
        %v1156 = vld [vmem:[#allocation4 + $0x1628] sm:$0xff]
        %v1157 = vld [vmem:[#allocation4 + $0x1630] sm:$0xff]
        %v1158 = vld [vmem:[#allocation4 + $0x1638] sm:$0xff]
        %v1159 = vld [vmem:[#allocation4 + $0x1640] sm:$0xff]
        %v1160 = vld [vmem:[#allocation4 + $0x1648] sm:$0xff]
        %v1161 = vld [vmem:[#allocation4 + $0x1650] sm:$0xff]
        %v1162 = vld [vmem:[#allocation4 + $0x1658] sm:$0xff]
        %v1163 = vld [vmem:[#allocation4 + $0x1660] sm:$0xff]
        %v1164 = vld [vmem:[#allocation4 + $0x1668] sm:$0xff]
        %v1165 = vld [vmem:[#allocation4 + $0x1670] sm:$0xff]
        %v1166 = vld [vmem:[#allocation4 + $0x1678] sm:$0xff]
        %v1167 = vld [vmem:[#allocation4 + $0x1680] sm:$0xff]
        %v1168 = vld [vmem:[#allocation4 + $0x1688] sm:$0xff]
        %v1169 = vld [vmem:[#allocation4 + $0x1690] sm:$0xff]
        %v1170 = vld [vmem:[#allocation4 + $0x1698] sm:$0xff]
        %v1171 = vld [vmem:[#allocation4 + $0x16a0] sm:$0xff]
        %v1172 = vld [vmem:[#allocation4 + $0x16a8] sm:$0xff]
        %v1173 = vld [vmem:[#allocation4 + $0x16b0] sm:$0xff]
        %v1174 = vld [vmem:[#allocation4 + $0x16b8] sm:$0xff]
        %v1175 = vld [vmem:[#allocation4 + $0x16c0] sm:$0xff]
        %v1176 = vld [vmem:[#allocation4 + $0x16c8] sm:$0xff]
        %v1177 = vld [vmem:[#allocation4 + $0x16d0] sm:$0xff]
        %v1178 = vld [vmem:[#allocation4 + $0x16d8] sm:$0xff]
        %v1179 = vld [vmem:[#allocation4 + $0x16e0] sm:$0xff]
        %v1180 = vld [vmem:[#allocation4 + $0x16e8] sm:$0xff]
        %v1181 = vld [vmem:[#allocation4 + $0x16f0] sm:$0xff]
        %v1182 = vld [vmem:[#allocation4 + $0x16f8] sm:$0xff]
        %v1183 = vld [vmem:[#allocation4 + $0x1700] sm:$0xff]
        %v1184 = vld [vmem:[#allocation4 + $0x1708] sm:$0xff]
        %v1185 = vld [vmem:[#allocation4 + $0x1710] sm:$0xff]
        %v1186 = vld [vmem:[#allocation4 + $0x1718] sm:$0xff]
        %v1187 = vld [vmem:[#allocation4 + $0x1720] sm:$0xff]
        %v1188 = vld [vmem:[#allocation4 + $0x1728] sm:$0xff]
        %v1189 = vld [vmem:[#allocation4 + $0x1730] sm:$0xff]
        %v1190 = vld [vmem:[#allocation4 + $0x1738] sm:$0xff]
        %v1191 = vld [vmem:[#allocation4 + $0x1740] sm:$0xff]
        %v1192 = vld [vmem:[#allocation4 + $0x1748] sm:$0xff]
        %v1193 = vld [vmem:[#allocation4 + $0x1750] sm:$0xff]
        %v1194 = vld [vmem:[#allocation4 + $0x1758] sm:$0xff]
        %v1195 = vld [vmem:[#allocation4 + $0x1760] sm:$0xff]
        %v1196 = vld [vmem:[#allocation4 + $0x1768] sm:$0xff]
        %v1197 = vld [vmem:[#allocation4 + $0x1770] sm:$0xff]
        %v1198 = vld [vmem:[#allocation4 + $0x1778] sm:$0xff]
        %v1199 = vld [vmem:[#allocation4 + $0x1780] sm:$0xff]
        %v1200 = vld [vmem:[#allocation4 + $0x1788] sm:$0xff]
        %v1201 = vld [vmem:[#allocation4 + $0x1790] sm:$0xff]
        %v1202 = vld [vmem:[#allocation4 + $0x1798] sm:$0xff]
        %v1203 = vld [vmem:[#allocation4 + $0x17a0] sm:$0xff]
        %v1204 = vld [vmem:[#allocation4 + $0x17a8] sm:$0xff]
        %v1205 = vld [vmem:[#allocation4 + $0x17b0] sm:$0xff]
        %v1206 = vld [vmem:[#allocation4 + $0x17b8] sm:$0xff]
        %v1207 = vld [vmem:[#allocation4 + $0x17c0] sm:$0xff]
        %v1208 = vld [vmem:[#allocation4 + $0x17c8] sm:$0xff]
        %v1209 = vld [vmem:[#allocation4 + $0x17d0] sm:$0xff]
        %v1210 = vld [vmem:[#allocation4 + $0x17d8] sm:$0xff]
        %v1211 = vld [vmem:[#allocation4 + $0x17e0] sm:$0xff]
        %v1212 = vld [vmem:[#allocation4 + $0x17e8] sm:$0xff]
        %v1213 = vld [vmem:[#allocation4 + $0x17f0] sm:$0xff]
        %v1214 = vld [vmem:[#allocation4 + $0x17f8] sm:$0xff]
        %v1215 = vld [vmem:[#allocation4 + $0x1800] sm:$0xff]
        %v1216 = vld [vmem:[#allocation4 + $0x1808] sm:$0xff]
        %v1217 = vld [vmem:[#allocation4 + $0x1810] sm:$0xff]
        %v1218 = vld [vmem:[#allocation4 + $0x1818] sm:$0xff]
        %v1219 = vld [vmem:[#allocation4 + $0x1820] sm:$0xff]
        %v1220 = vld [vmem:[#allocation4 + $0x1828] sm:$0xff]
        %v1221 = vld [vmem:[#allocation4 + $0x1830] sm:$0xff]
        %v1222 = vld [vmem:[#allocation4 + $0x1838] sm:$0xff]
        %v1223 = vld [vmem:[#allocation4 + $0x1840] sm:$0xff]
        %v1224 = vld [vmem:[#allocation4 + $0x1848] sm:$0xff]
        %v1225 = vld [vmem:[#allocation4 + $0x1850] sm:$0xff]
        %v1226 = vld [vmem:[#allocation4 + $0x1858] sm:$0xff]
        %v1227 = vld [vmem:[#allocation4 + $0x1860] sm:$0xff]
        %v1228 = vld [vmem:[#allocation4 + $0x1868] sm:$0xff]
        %v1229 = vld [vmem:[#allocation4 + $0x1870] sm:$0xff]
        %v1230 = vld [vmem:[#allocation4 + $0x1878] sm:$0xff]
        %v1231 = vld [vmem:[#allocation4 + $0x1880] sm:$0xff]
        %v1232 = vld [vmem:[#allocation4 + $0x1888] sm:$0xff]
        %v1233 = vld [vmem:[#allocation4 + $0x1890] sm:$0xff]
        %v1234 = vld [vmem:[#allocation4 + $0x1898] sm:$0xff]
        %v1235 = vld [vmem:[#allocation4 + $0x18a0] sm:$0xff]
        %v1236 = vld [vmem:[#allocation4 + $0x18a8] sm:$0xff]
        %v1237 = vld [vmem:[#allocation4 + $0x18b0] sm:$0xff]
        %v1238 = vld [vmem:[#allocation4 + $0x18b8] sm:$0xff]
        %v1239 = vld [vmem:[#allocation4 + $0x18c0] sm:$0xff]
        %v1240 = vld [vmem:[#allocation4 + $0x18c8] sm:$0xff]
        %v1241 = vld [vmem:[#allocation4 + $0x18d0] sm:$0xff]
        %v1242 = vld [vmem:[#allocation4 + $0x18d8] sm:$0xff]
        %v1243 = vld [vmem:[#allocation4 + $0x18e0] sm:$0xff]
        %v1244 = vld [vmem:[#allocation4 + $0x18e8] sm:$0xff]
        %v1245 = vld [vmem:[#allocation4 + $0x18f0] sm:$0xff]
        %v1246 = vld [vmem:[#allocation4 + $0x18f8] sm:$0xff]
        %v1247 = vld [vmem:[#allocation4 + $0x1900] sm:$0xff]
        %v1248 = vld [vmem:[#allocation4 + $0x1908] sm:$0xff]
        %v1249 = vld [vmem:[#allocation4 + $0x1910] sm:$0xff]
        %v1250 = vld [vmem:[#allocation4 + $0x1918] sm:$0xff]
        %v1251 = vld [vmem:[#allocation4 + $0x1920] sm:$0xff]
        %v1252 = vld [vmem:[#allocation4 + $0x1928] sm:$0xff]
        %v1253 = vld [vmem:[#allocation4 + $0x1930] sm:$0xff]
        %v1254 = vld [vmem:[#allocation4 + $0x1938] sm:$0xff]
        %v1255 = vld [vmem:[#allocation4 + $0x1940] sm:$0xff]
        %v1256 = vld [vmem:[#allocation4 + $0x1948] sm:$0xff]
        %v1257 = vld [vmem:[#allocation4 + $0x1950] sm:$0xff]
        %v1258 = vld [vmem:[#allocation4 + $0x1958] sm:$0xff]
        %v1259 = vld [vmem:[#allocation4 + $0x1960] sm:$0xff]
        %v1260 = vld [vmem:[#allocation4 + $0x1968] sm:$0xff]
        %v1261 = vld [vmem:[#allocation4 + $0x1970] sm:$0xff]
        %v1262 = vld [vmem:[#allocation4 + $0x1978] sm:$0xff]
        %v1263 = vld [vmem:[#allocation4 + $0x1980] sm:$0xff]
        %v1264 = vld [vmem:[#allocation4 + $0x1988] sm:$0xff]
        %v1265 = vld [vmem:[#allocation4 + $0x1990] sm:$0xff]
        %v1266 = vld [vmem:[#allocation4 + $0x1998] sm:$0xff]
        %v1267 = vld [vmem:[#allocation4 + $0x19a0] sm:$0xff]
        %v1268 = vld [vmem:[#allocation4 + $0x19a8] sm:$0xff]
        %v1269 = vld [vmem:[#allocation4 + $0x19b0] sm:$0xff]
        %v1270 = vld [vmem:[#allocation4 + $0x19b8] sm:$0xff]
        %v1271 = vld [vmem:[#allocation4 + $0x19c0] sm:$0xff]
        %v1272 = vld [vmem:[#allocation4 + $0x19c8] sm:$0xff]
        %v1273 = vld [vmem:[#allocation4 + $0x19d0] sm:$0xff]
        %v1274 = vld [vmem:[#allocation4 + $0x19d8] sm:$0xff]
        %v1275 = vld [vmem:[#allocation4 + $0x19e0] sm:$0xff]
        %v1276 = vld [vmem:[#allocation4 + $0x19e8] sm:$0xff]
        %v1277 = vld [vmem:[#allocation4 + $0x19f0] sm:$0xff]
        %v1278 = vld [vmem:[#allocation4 + $0x19f8] sm:$0xff]
        %v1279 = vld [vmem:[#allocation4 + $0x1a00] sm:$0xff]
        %v1280 = vld [vmem:[#allocation4 + $0x1a08] sm:$0xff]
        %v1281 = vld [vmem:[#allocation4 + $0x1a10] sm:$0xff]
        %v1282 = vld [vmem:[#allocation4 + $0x1a18] sm:$0xff]
        %v1283 = vld [vmem:[#allocation4 + $0x1a20] sm:$0xff]
        %v1284 = vld [vmem:[#allocation4 + $0x1a28] sm:$0xff]
        %v1285 = vld [vmem:[#allocation4 + $0x1a30] sm:$0xff]
        %v1286 = vld [vmem:[#allocation4 + $0x1a38] sm:$0xff]
        %v1287 = vld [vmem:[#allocation4 + $0x1a40] sm:$0xff]
        %v1288 = vld [vmem:[#allocation4 + $0x1a48] sm:$0xff]
        %v1289 = vld [vmem:[#allocation4 + $0x1a50] sm:$0xff]
        %v1290 = vld [vmem:[#allocation4 + $0x1a58] sm:$0xff]
        %v1291 = vld [vmem:[#allocation4 + $0x1a60] sm:$0xff]
        %v1292 = vld [vmem:[#allocation4 + $0x1a68] sm:$0xff]
        %v1293 = vld [vmem:[#allocation4 + $0x1a70] sm:$0xff]
        %v1294 = vld [vmem:[#allocation4 + $0x1a78] sm:$0xff]
        %v1295 = vld [vmem:[#allocation4 + $0x1a80] sm:$0xff]
        %v1296 = vld [vmem:[#allocation4 + $0x1a88] sm:$0xff]
        %v1297 = vld [vmem:[#allocation4 + $0x1a90] sm:$0xff]
        %v1298 = vld [vmem:[#allocation4 + $0x1a98] sm:$0xff]
        %v1299 = vld [vmem:[#allocation4 + $0x1aa0] sm:$0xff]
        %v1300 = vld [vmem:[#allocation4 + $0x1aa8] sm:$0xff]
        %v1301 = vld [vmem:[#allocation4 + $0x1ab0] sm:$0xff]
        %v1302 = vld [vmem:[#allocation4 + $0x1ab8] sm:$0xff]
        %v1303 = vld [vmem:[#allocation4 + $0x1ac0] sm:$0xff]
        %v1304 = vld [vmem:[#allocation4 + $0x1ac8] sm:$0xff]
        %v1305 = vld [vmem:[#allocation4 + $0x1ad0] sm:$0xff]
        %v1306 = vld [vmem:[#allocation4 + $0x1ad8] sm:$0xff]
        %v1307 = vld [vmem:[#allocation4 + $0x1ae0] sm:$0xff]
        %v1308 = vld [vmem:[#allocation4 + $0x1ae8] sm:$0xff]
        %v1309 = vld [vmem:[#allocation4 + $0x1af0] sm:$0xff]
        %v1310 = vld [vmem:[#allocation4 + $0x1af8] sm:$0xff]
        %v1311 = vld [vmem:[#allocation4 + $0x1b00] sm:$0xff]
        %v1312 = vld [vmem:[#allocation4 + $0x1b08] sm:$0xff]
        %v1313 = vld [vmem:[#allocation4 + $0x1b10] sm:$0xff]
        %v1314 = vld [vmem:[#allocation4 + $0x1b18] sm:$0xff]
        %v1315 = vld [vmem:[#allocation4 + $0x1b20] sm:$0xff]
        %v1316 = vld [vmem:[#allocation4 + $0x1b28] sm:$0xff]
        %v1317 = vld [vmem:[#allocation4 + $0x1b30] sm:$0xff]
        %v1318 = vld [vmem:[#allocation4 + $0x1b38] sm:$0xff]
        %v1319 = vld [vmem:[#allocation4 + $0x1b40] sm:$0xff]
        %v1320 = vld [vmem:[#allocation4 + $0x1b48] sm:$0xff]
        %v1321 = vld [vmem:[#allocation4 + $0x1b50] sm:$0xff]
        %v1322 = vld [vmem:[#allocation4 + $0x1b58] sm:$0xff]
        %v1323 = vld [vmem:[#allocation4 + $0x1b60] sm:$0xff]
        %v1324 = vld [vmem:[#allocation4 + $0x1b68] sm:$0xff]
        %v1325 = vld [vmem:[#allocation4 + $0x1b70] sm:$0xff]
        %v1326 = vld [vmem:[#allocation4 + $0x1b78] sm:$0xff]
        %v1327 = vld [vmem:[#allocation4 + $0x1b80] sm:$0xff]
        %v1328 = vld [vmem:[#allocation4 + $0x1b88] sm:$0xff]
        %v1329 = vld [vmem:[#allocation4 + $0x1b90] sm:$0xff]
        %v1330 = vld [vmem:[#allocation4 + $0x1b98] sm:$0xff]
        %v1331 = vld [vmem:[#allocation4 + $0x1ba0] sm:$0xff]
        %v1332 = vld [vmem:[#allocation4 + $0x1ba8] sm:$0xff]
        %v1333 = vld [vmem:[#allocation4 + $0x1bb0] sm:$0xff]
        %v1334 = vld [vmem:[#allocation4 + $0x1bb8] sm:$0xff]
        %v1335 = vld [vmem:[#allocation4 + $0x1bc0] sm:$0xff]
        %v1336 = vld [vmem:[#allocation4 + $0x1bc8] sm:$0xff]
        %v1337 = vld [vmem:[#allocation4 + $0x1bd0] sm:$0xff]
        %v1338 = vld [vmem:[#allocation4 + $0x1bd8] sm:$0xff]
        %v1339 = vld [vmem:[#allocation4 + $0x1be0] sm:$0xff]
        %v1340 = vld [vmem:[#allocation4 + $0x1be8] sm:$0xff]
        %v1341 = vld [vmem:[#allocation4 + $0x1bf0] sm:$0xff]
        %v1342 = vld [vmem:[#allocation4 + $0x1bf8] sm:$0xff]
        %v1343 = vld [vmem:[#allocation4 + $0x1c00] sm:$0xff]
        %v1344 = vld [vmem:[#allocation4 + $0x1c08] sm:$0xff]
        %v1345 = vld [vmem:[#allocation4 + $0x1c10] sm:$0xff]
        %v1346 = vld [vmem:[#allocation4 + $0x1c18] sm:$0xff]
        %v1347 = vld [vmem:[#allocation4 + $0x1c20] sm:$0xff]
        %v1348 = vld [vmem:[#allocation4 + $0x1c28] sm:$0xff]
        %v1349 = vld [vmem:[#allocation4 + $0x1c30] sm:$0xff]
        %v1350 = vld [vmem:[#allocation4 + $0x1c38] sm:$0xff]
        %v1351 = vld [vmem:[#allocation4 + $0x1c40] sm:$0xff]
        %v1352 = vld [vmem:[#allocation4 + $0x1c48] sm:$0xff]
        %v1353 = vld [vmem:[#allocation4 + $0x1c50] sm:$0xff]
        %v1354 = vld [vmem:[#allocation4 + $0x1c58] sm:$0xff]
        %v1355 = vld [vmem:[#allocation4 + $0x1c60] sm:$0xff]
        %v1356 = vld [vmem:[#allocation4 + $0x1c68] sm:$0xff]
        %v1357 = vld [vmem:[#allocation4 + $0x1c70] sm:$0xff]
        %v1358 = vld [vmem:[#allocation4 + $0x1c78] sm:$0xff]
        %v1359 = vld [vmem:[#allocation4 + $0x1c80] sm:$0xff]
        %v1360 = vld [vmem:[#allocation4 + $0x1c88] sm:$0xff]
        %v1361 = vld [vmem:[#allocation4 + $0x1c90] sm:$0xff]
        %v1362 = vld [vmem:[#allocation4 + $0x1c98] sm:$0xff]
        %v1363 = vld [vmem:[#allocation4 + $0x1ca0] sm:$0xff]
        %v1364 = vld [vmem:[#allocation4 + $0x1ca8] sm:$0xff]
        %v1365 = vld [vmem:[#allocation4 + $0x1cb0] sm:$0xff]
        %v1366 = vld [vmem:[#allocation4 + $0x1cb8] sm:$0xff]
        %v1367 = vld [vmem:[#allocation4 + $0x1cc0] sm:$0xff]
        %v1368 = vld [vmem:[#allocation4 + $0x1cc8] sm:$0xff]
        %v1369 = vld [vmem:[#allocation4 + $0x1cd0] sm:$0xff]
        %v1370 = vld [vmem:[#allocation4 + $0x1cd8] sm:$0xff]
        %v1371 = vld [vmem:[#allocation4 + $0x1ce0] sm:$0xff]
        %v1372 = vld [vmem:[#allocation4 + $0x1ce8] sm:$0xff]
        %v1373 = vld [vmem:[#allocation4 + $0x1cf0] sm:$0xff]
        %v1374 = vld [vmem:[#allocation4 + $0x1cf8] sm:$0xff]
        %v1375 = vld [vmem:[#allocation4 + $0x1d00] sm:$0xff]
        %v1376 = vld [vmem:[#allocation4 + $0x1d08] sm:$0xff]
        %v1377 = vld [vmem:[#allocation4 + $0x1d10] sm:$0xff]
        %v1378 = vld [vmem:[#allocation4 + $0x1d18] sm:$0xff]
        %v1379 = vld [vmem:[#allocation4 + $0x1d20] sm:$0xff]
        %v1380 = vld [vmem:[#allocation4 + $0x1d28] sm:$0xff]
        %v1381 = vld [vmem:[#allocation4 + $0x1d30] sm:$0xff]
        %v1382 = vld [vmem:[#allocation4 + $0x1d38] sm:$0xff]
        %v1383 = vld [vmem:[#allocation4 + $0x1d40] sm:$0xff]
        %v1384 = vld [vmem:[#allocation4 + $0x1d48] sm:$0xff]
        %v1385 = vld [vmem:[#allocation4 + $0x1d50] sm:$0xff]
        %v1386 = vld [vmem:[#allocation4 + $0x1d58] sm:$0xff]
        %v1387 = vld [vmem:[#allocation4 + $0x1d60] sm:$0xff]
        %v1388 = vld [vmem:[#allocation4 + $0x1d68] sm:$0xff]
        %v1389 = vld [vmem:[#allocation4 + $0x1d70] sm:$0xff]
        %v1390 = vld [vmem:[#allocation4 + $0x1d78] sm:$0xff]
        %v1391 = vld [vmem:[#allocation4 + $0x1d80] sm:$0xff]
        %v1392 = vld [vmem:[#allocation4 + $0x1d88] sm:$0xff]
        %v1393 = vld [vmem:[#allocation4 + $0x1d90] sm:$0xff]
        %v1394 = vld [vmem:[#allocation4 + $0x1d98] sm:$0xff]
        %v1395 = vld [vmem:[#allocation4 + $0x1da0] sm:$0xff]
        %v1396 = vld [vmem:[#allocation4 + $0x1da8] sm:$0xff]
        %v1397 = vld [vmem:[#allocation4 + $0x1db0] sm:$0xff]
        %v1398 = vld [vmem:[#allocation4 + $0x1db8] sm:$0xff]
        %v1399 = vld [vmem:[#allocation4 + $0x1dc0] sm:$0xff]
        %v1400 = vld [vmem:[#allocation4 + $0x1dc8] sm:$0xff]
        %v1401 = vld [vmem:[#allocation4 + $0x1dd0] sm:$0xff]
        %v1402 = vld [vmem:[#allocation4 + $0x1dd8] sm:$0xff]
        %v1403 = vld [vmem:[#allocation4 + $0x1de0] sm:$0xff]
        %v1404 = vld [vmem:[#allocation4 + $0x1de8] sm:$0xff]
        %v1405 = vld [vmem:[#allocation4 + $0x1df0] sm:$0xff]
        %v1406 = vld [vmem:[#allocation4 + $0x1df8] sm:$0xff]
        %v1407 = vld [vmem:[#allocation4 + $0x1e00] sm:$0xff]
        %v1408 = vld [vmem:[#allocation4 + $0x1e08] sm:$0xff]
        %v1409 = vld [vmem:[#allocation4 + $0x1e10] sm:$0xff]
        %v1410 = vld [vmem:[#allocation4 + $0x1e18] sm:$0xff]
        %v1411 = vld [vmem:[#allocation4 + $0x1e20] sm:$0xff]
        %v1412 = vld [vmem:[#allocation4 + $0x1e28] sm:$0xff]
        %v1413 = vld [vmem:[#allocation4 + $0x1e30] sm:$0xff]
        %v1414 = vld [vmem:[#allocation4 + $0x1e38] sm:$0xff]
        %v1415 = vld [vmem:[#allocation4 + $0x1e40] sm:$0xff]
        %v1416 = vld [vmem:[#allocation4 + $0x1e48] sm:$0xff]
        %v1417 = vld [vmem:[#allocation4 + $0x1e50] sm:$0xff]
        %v1418 = vld [vmem:[#allocation4 + $0x1e58] sm:$0xff]
        %v1419 = vld [vmem:[#allocation4 + $0x1e60] sm:$0xff]
        %v1420 = vld [vmem:[#allocation4 + $0x1e68] sm:$0xff]
        %v1421 = vld [vmem:[#allocation4 + $0x1e70] sm:$0xff]
        %v1422 = vld [vmem:[#allocation4 + $0x1e78] sm:$0xff]
        %v1423 = vld [vmem:[#allocation4 + $0x1e80] sm:$0xff]
        %v1424 = vld [vmem:[#allocation4 + $0x1e88] sm:$0xff]
        %v1425 = vld [vmem:[#allocation4 + $0x1e90] sm:$0xff]
        %v1426 = vld [vmem:[#allocation4 + $0x1e98] sm:$0xff]
        %v1427 = vld [vmem:[#allocation4 + $0x1ea0] sm:$0xff]
        %v1428 = vld [vmem:[#allocation4 + $0x1ea8] sm:$0xff]
        %v1429 = vld [vmem:[#allocation4 + $0x1eb0] sm:$0xff]
        %v1430 = vld [vmem:[#allocation4 + $0x1eb8] sm:$0xff]
        %v1431 = vld [vmem:[#allocation4 + $0x1ec0] sm:$0xff]
        %v1432 = vld [vmem:[#allocation4 + $0x1ec8] sm:$0xff]
        %v1433 = vld [vmem:[#allocation4 + $0x1ed0] sm:$0xff]
        %v1434 = vld [vmem:[#allocation4 + $0x1ed8] sm:$0xff]
        %v1435 = vld [vmem:[#allocation4 + $0x1ee0] sm:$0xff]
        %v1436 = vld [vmem:[#allocation4 + $0x1ee8] sm:$0xff]
        %v1437 = vld [vmem:[#allocation4 + $0x1ef0] sm:$0xff]
        %v1438 = vld [vmem:[#allocation4 + $0x1ef8] sm:$0xff]
        %v1439 = vld [vmem:[#allocation4 + $0x1f00] sm:$0xff]
        %v1440 = vld [vmem:[#allocation4 + $0x1f08] sm:$0xff]
        %v1441 = vld [vmem:[#allocation4 + $0x1f10] sm:$0xff]
        %v1442 = vld [vmem:[#allocation4 + $0x1f18] sm:$0xff]
        %v1443 = vld [vmem:[#allocation4 + $0x1f20] sm:$0xff]
        %v1444 = vld [vmem:[#allocation4 + $0x1f28] sm:$0xff]
        %v1445 = vld [vmem:[#allocation4 + $0x1f30] sm:$0xff]
        %v1446 = vld [vmem:[#allocation4 + $0x1f38] sm:$0xff]
        %v1447 = vld [vmem:[#allocation4 + $0x1f40] sm:$0xff]
        %v1448 = vld [vmem:[#allocation4 + $0x1f48] sm:$0xff]
        %v1449 = vld [vmem:[#allocation4 + $0x1f50] sm:$0xff]
        %v1450 = vld [vmem:[#allocation4 + $0x1f58] sm:$0xff]
        %v1451 = vld [vmem:[#allocation4 + $0x1f60] sm:$0xff]
        %v1452 = vld [vmem:[#allocation4 + $0x1f68] sm:$0xff]
        %v1453 = vld [vmem:[#allocation4 + $0x1f70] sm:$0xff]
        %v1454 = vld [vmem:[#allocation4 + $0x1f78] sm:$0xff]
        %v1455 = vld [vmem:[#allocation4 + $0x1f80] sm:$0xff]
        %v1456 = vld [vmem:[#allocation4 + $0x1f88] sm:$0xff]
        %v1457 = vld [vmem:[#allocation4 + $0x1f90] sm:$0xff]
        %v1458 = vld [vmem:[#allocation4 + $0x1f98] sm:$0xff]
        %v1459 = vld [vmem:[#allocation4 + $0x1fa0] sm:$0xff]
        %v1460 = vld [vmem:[#allocation4 + $0x1fa8] sm:$0xff]
        %v1461 = vld [vmem:[#allocation4 + $0x1fb0] sm:$0xff]
        %v1462 = vld [vmem:[#allocation4 + $0x1fb8] sm:$0xff]
        %v1463 = vld [vmem:[#allocation4 + $0x1fc0] sm:$0xff]
        %v1464 = vld [vmem:[#allocation4 + $0x1fc8] sm:$0xff]
        %v1465 = vld [vmem:[#allocation4 + $0x1fd0] sm:$0xff]
        %v1466 = vld [vmem:[#allocation4 + $0x1fd8] sm:$0xff]
        %v1467 = vld [vmem:[#allocation4 + $0x1fe0] sm:$0xff]
        %v1468 = vld [vmem:[#allocation4 + $0x1fe8] sm:$0xff]
        %v1469 = vld [vmem:[#allocation4 + $0x1ff0] sm:$0xff]
        %v1470 = vld [vmem:[#allocation4 + $0x1ff8] sm:$0xff]
        %1471 = vmatprep.subr.mxu0 %v448
        %1472 = vmatpush1.msra.mxu0 %v447
        %1473 = vmatprep.subr.mxu0 %v480
        %1474 = vmatpush1.msra.mxu0 %v479
        %1475 = vmatprep.subr.mxu0 %v512
        %1476 = vmatpush1.msra.mxu0 %v511
        %1477 = vmatprep.subr.mxu0 %v544
        %1478 = vmatpush1.msra.mxu0 %v543
        %1479 = vmatprep.subr.mxu0 %v576
        %1480 = vmatpush1.msra.mxu0 %v575
        %1481 = vmatprep.subr.mxu0 %v608
        %1482 = vmatpush1.msra.mxu0 %v607
        %1483 = vmatprep.subr.mxu0 %v640
        %1484 = vmatpush1.msra.mxu0 %v639
        %1485 = vmatprep.subr.mxu0 %v672
        %1486 = vmatpush1.msra.mxu0 %v671
        %1487 = vmatprep.subr.mxu0 %v704
        %1488 = vmatpush1.msra.mxu0 %v703
        %1489 = vmatprep.subr.mxu0 %v736
        %1490 = vmatpush1.msra.mxu0 %v735
        %1491 = vmatprep.subr.mxu0 %v768
        %1492 = vmatpush1.msra.mxu0 %v767
        %1493 = vmatprep.subr.mxu0 %v800
        %1494 = vmatpush1.msra.mxu0 %v799
        %1495 = vmatprep.subr.mxu0 %v832
        %1496 = vmatpush1.msra.mxu0 %v831
        %1497 = vmatprep.subr.mxu0 %v864
        %1498 = vmatpush1.msra.mxu0 %v863
        %1499 = vmatprep.subr.mxu0 %v896
        %1500 = vmatpush1.msra.mxu0 %v895
        %1501 = vmatprep.subr.mxu0 %v928
        %1502 = vmatpush1.msra.mxu0 %v927
        %1503 = vmatprep.subr.mxu0 %v960
        %1504 = vmatpush1.msra.mxu0 %v959
        %1505 = vmatprep.subr.mxu0 %v992
        %1506 = vmatpush1.msra.mxu0 %v991
        %1507 = vmatprep.subr.mxu0 %v1024
        %1508 = vmatpush1.msra.mxu0 %v1023
        %1509 = vmatprep.subr.mxu0 %v1056
        %1510 = vmatpush1.msra.mxu0 %v1055
        %1511 = vmatprep.subr.mxu0 %v1088
        %1512 = vmatpush1.msra.mxu0 %v1087
        %1513 = vmatprep.subr.mxu0 %v1120
        %1514 = vmatpush1.msra.mxu0 %v1119
        %1515 = vmatprep.subr.mxu0 %v1152
        %1516 = vmatpush1.msra.mxu0 %v1151
        %1517 = vmatprep.subr.mxu0 %v1184
        %1518 = vmatpush1.msra.mxu0 %v1183
        %1519 = vmatprep.subr.mxu0 %v1216
        %1520 = vmatpush1.msra.mxu0 %v1215
        %1521 = vmatprep.subr.mxu0 %v1248
        %1522 = vmatpush1.msra.mxu0 %v1247
        %1523 = vmatprep.subr.mxu0 %v1280
        %1524 = vmatpush1.msra.mxu0 %v1279
        %1525 = vmatprep.subr.mxu0 %v1312
        %1526 = vmatpush1.msra.mxu0 %v1311
        %1527 = vmatprep.subr.mxu0 %v1344
        %1528 = vmatpush1.msra.mxu0 %v1343
        %1529 = vmatprep.subr.mxu0 %v1376
        %1530 = vmatpush1.msra.mxu0 %v1375
        %1531 = vmatprep.subr.mxu0 %v1408
        %1532 = vmatpush1.msra.mxu0 %v1407
        %1533 = vmatprep.subr.mxu0 %v1440
        %1534 = vmatpush1.msra.mxu0 %v1439
        %1535 = vmatprep.mubr.f32.mxu0 %v446
        %1536 = vmatmul.mubr.f32.gmra.mrb[0].mxu0 %v445
        %v1537 = vpop.f32.mrb[0].mxu0
        %v1538 = vadd.f32 0.0, %v1537
        %v1539 = vpop.f32.mrb[0].mxu0
        %v1540 = vadd.f32 0.0, %v1539
        %1541 = vdwg.mxu0
        %1542 = vmatprep.subr.mxu0 %v450
        %1543 = vmatpush1.msra.mxu0 %v449
        %1544 = vmatprep.subr.mxu0 %v482
        %1545 = vmatpush1.msra.mxu0 %v481
        %1546 = vmatprep.subr.mxu0 %v514
        %1547 = vmatpush1.msra.mxu0 %v513
        %1548 = vmatprep.subr.mxu0 %v546
        %1549 = vmatpush1.msra.mxu0 %v545
        %1550 = vmatprep.subr.mxu0 %v578
        %1551 = vmatpush1.msra.mxu0 %v577
        %1552 = vmatprep.subr.mxu0 %v610
        %1553 = vmatpush1.msra.mxu0 %v609
        %1554 = vmatprep.subr.mxu0 %v642
        %1555 = vmatpush1.msra.mxu0 %v641
        %1556 = vmatprep.subr.mxu0 %v674
        %1557 = vmatpush1.msra.mxu0 %v673
        %1558 = vmatprep.subr.mxu0 %v706
        %1559 = vmatpush1.msra.mxu0 %v705
        %1560 = vmatprep.subr.mxu0 %v738
        %1561 = vmatpush1.msra.mxu0 %v737
        %1562 = vmatprep.subr.mxu0 %v770
        %1563 = vmatpush1.msra.mxu0 %v769
        %1564 = vmatprep.subr.mxu0 %v802
        %1565 = vmatpush1.msra.mxu0 %v801
        %1566 = vmatprep.subr.mxu0 %v834
        %1567 = vmatpush1.msra.mxu0 %v833
        %1568 = vmatprep.subr.mxu0 %v866
        %1569 = vmatpush1.msra.mxu0 %v865
        %1570 = vmatprep.subr.mxu0 %v898
        %1571 = vmatpush1.msra.mxu0 %v897
        %1572 = vmatprep.subr.mxu0 %v930
        %1573 = vmatpush1.msra.mxu0 %v929
        %1574 = vmatprep.subr.mxu0 %v962
        %1575 = vmatpush1.msra.mxu0 %v961
        %1576 = vmatprep.subr.mxu0 %v994
        %1577 = vmatpush1.msra.mxu0 %v993
        %1578 = vmatprep.subr.mxu0 %v1026
        %1579 = vmatpush1.msra.mxu0 %v1025
        %1580 = vmatprep.subr.mxu0 %v1058
        %1581 = vmatpush1.msra.mxu0 %v1057
        %1582 = vmatprep.subr.mxu0 %v1090
        %1583 = vmatpush1.msra.mxu0 %v1089
        %1584 = vmatprep.subr.mxu0 %v1122
        %1585 = vmatpush1.msra.mxu0 %v1121
        %1586 = vmatprep.subr.mxu0 %v1154
        %1587 = vmatpush1.msra.mxu0 %v1153
        %1588 = vmatprep.subr.mxu0 %v1186
        %1589 = vmatpush1.msra.mxu0 %v1185
        %1590 = vmatprep.subr.mxu0 %v1218
        %1591 = vmatpush1.msra.mxu0 %v1217
        %1592 = vmatprep.subr.mxu0 %v1250
        %1593 = vmatpush1.msra.mxu0 %v1249
        %1594 = vmatprep.subr.mxu0 %v1282
        %1595 = vmatpush1.msra.mxu0 %v1281
        %1596 = vmatprep.subr.mxu0 %v1314
        %1597 = vmatpush1.msra.mxu0 %v1313
        %1598 = vmatprep.subr.mxu0 %v1346
        %1599 = vmatpush1.msra.mxu0 %v1345
        %1600 = vmatprep.subr.mxu0 %v1378
        %1601 = vmatpush1.msra.mxu0 %v1377
        %1602 = vmatprep.subr.mxu0 %v1410
        %1603 = vmatpush1.msra.mxu0 %v1409
        %1604 = vmatprep.subr.mxu0 %v1442
        %1605 = vmatpush1.msra.mxu0 %v1441
        %1606 = vmatprep.mubr.f32.mxu0 %v446
        %1607 = vmatmul.mubr.f32.gmra.mrb[0].mxu0 %v445
        %v1608 = vpop.f32.mrb[0].mxu0
        %v1609 = vadd.f32 0.0, %v1608
        %v1610 = vpop.f32.mrb[0].mxu0
        %v1611 = vadd.f32 0.0, %v1610
        %1612 = vdwg.mxu0
        %1613 = vmatprep.subr.mxu0 %v452
        %1614 = vmatpush1.msra.mxu0 %v451
        %1615 = vmatprep.subr.mxu0 %v484
        %1616 = vmatpush1.msra.mxu0 %v483
        %1617 = vmatprep.subr.mxu0 %v516
        %1618 = vmatpush1.msra.mxu0 %v515
        %1619 = vmatprep.subr.mxu0 %v548
        %1620 = vmatpush1.msra.mxu0 %v547
        %1621 = vmatprep.subr.mxu0 %v580
        %1622 = vmatpush1.msra.mxu0 %v579
        %1623 = vmatprep.subr.mxu0 %v612
        %1624 = vmatpush1.msra.mxu0 %v611
        %1625 = vmatprep.subr.mxu0 %v644
        %1626 = vmatpush1.msra.mxu0 %v643
        %1627 = vmatprep.subr.mxu0 %v676
        %1628 = vmatpush1.msra.mxu0 %v675
        %1629 = vmatprep.subr.mxu0 %v708
        %1630 = vmatpush1.msra.mxu0 %v707
        %1631 = vmatprep.subr.mxu0 %v740
        %1632 = vmatpush1.msra.mxu0 %v739
        %1633 = vmatprep.subr.mxu0 %v772
        %1634 = vmatpush1.msra.mxu0 %v771
        %1635 = vmatprep.subr.mxu0 %v804
        %1636 = vmatpush1.msra.mxu0 %v803
        %1637 = vmatprep.subr.mxu0 %v836
        %1638 = vmatpush1.msra.mxu0 %v835
        %1639 = vmatprep.subr.mxu0 %v868
        %1640 = vmatpush1.msra.mxu0 %v867
        %1641 = vmatprep.subr.mxu0 %v900
        %1642 = vmatpush1.msra.mxu0 %v899
        %1643 = vmatprep.subr.mxu0 %v932
        %1644 = vmatpush1.msra.mxu0 %v931
        %1645 = vmatprep.subr.mxu0 %v964
        %1646 = vmatpush1.msra.mxu0 %v963
        %1647 = vmatprep.subr.mxu0 %v996
        %1648 = vmatpush1.msra.mxu0 %v995
        %1649 = vmatprep.subr.mxu0 %v1028
        %1650 = vmatpush1.msra.mxu0 %v1027
        %1651 = vmatprep.subr.mxu0 %v1060
        %1652 = vmatpush1.msra.mxu0 %v1059
        %1653 = vmatprep.subr.mxu0 %v1092
        %1654 = vmatpush1.msra.mxu0 %v1091
        %1655 = vmatprep.subr.mxu0 %v1124
        %1656 = vmatpush1.msra.mxu0 %v1123
        %1657 = vmatprep.subr.mxu0 %v1156
        %1658 = vmatpush1.msra.mxu0 %v1155
        %1659 = vmatprep.subr.mxu0 %v1188
        %1660 = vmatpush1.msra.mxu0 %v1187
        %1661 = vmatprep.subr.mxu0 %v1220
        %1662 = vmatpush1.msra.mxu0 %v1219
        %1663 = vmatprep.subr.mxu0 %v1252
        %1664 = vmatpush1.msra.mxu0 %v1251
        %1665 = vmatprep.subr.mxu0 %v1284
        %1666 = vmatpush1.msra.mxu0 %v1283
        %1667 = vmatprep.subr.mxu0 %v1316
        %1668 = vmatpush1.msra.mxu0 %v1315
        %1669 = vmatprep.subr.mxu0 %v1348
        %1670 = vmatpush1.msra.mxu0 %v1347
        %1671 = vmatprep.subr.mxu0 %v1380
        %1672 = vmatpush1.msra.mxu0 %v1379
        %1673 = vmatprep.subr.mxu0 %v1412
        %1674 = vmatpush1.msra.mxu0 %v1411
        %1675 = vmatprep.subr.mxu0 %v1444
        %1676 = vmatpush1.msra.mxu0 %v1443
        %1677 = vmatprep.mubr.f32.mxu0 %v446
        %1678 = vmatmul.mubr.f32.gmra.mrb[0].mxu0 %v445
        %v1679 = vpop.f32.mrb[0].mxu0
        %v1680 = vadd.f32 0.0, %v1679
        %v1681 = vpop.f32.mrb[0].mxu0
        %v1682 = vadd.f32 0.0, %v1681
        %1683 = vdwg.mxu0
        %1684 = vmatprep.subr.mxu0 %v454
        %1685 = vmatpush1.msra.mxu0 %v453
        %1686 = vmatprep.subr.mxu0 %v486
        %1687 = vmatpush1.msra.mxu0 %v485
        %1688 = vmatprep.subr.mxu0 %v518
        %1689 = vmatpush1.msra.mxu0 %v517
        %1690 = vmatprep.subr.mxu0 %v550
        %1691 = vmatpush1.msra.mxu0 %v549
        %1692 = vmatprep.subr.mxu0 %v582
        %1693 = vmatpush1.msra.mxu0 %v581
        %1694 = vmatprep.subr.mxu0 %v614
        %1695 = vmatpush1.msra.mxu0 %v613
        %1696 = vmatprep.subr.mxu0 %v646
        %1697 = vmatpush1.msra.mxu0 %v645
        %1698 = vmatprep.subr.mxu0 %v678
        %1699 = vmatpush1.msra.mxu0 %v677
        %1700 = vmatprep.subr.mxu0 %v710
        %1701 = vmatpush1.msra.mxu0 %v709
        %1702 = vmatprep.subr.mxu0 %v742
        %1703 = vmatpush1.msra.mxu0 %v741
        %1704 = vmatprep.subr.mxu0 %v774
        %1705 = vmatpush1.msra.mxu0 %v773
        %1706 = vmatprep.subr.mxu0 %v806
        %1707 = vmatpush1.msra.mxu0 %v805
        %1708 = vmatprep.subr.mxu0 %v838
        %1709 = vmatpush1.msra.mxu0 %v837
        %1710 = vmatprep.subr.mxu0 %v870
        %1711 = vmatpush1.msra.mxu0 %v869
        %1712 = vmatprep.subr.mxu0 %v902
        %1713 = vmatpush1.msra.mxu0 %v901
        %1714 = vmatprep.subr.mxu0 %v934
        %1715 = vmatpush1.msra.mxu0 %v933
        %1716 = vmatprep.subr.mxu0 %v966
        %1717 = vmatpush1.msra.mxu0 %v965
        %1718 = vmatprep.subr.mxu0 %v998
        %1719 = vmatpush1.msra.mxu0 %v997
        %1720 = vmatprep.subr.mxu0 %v1030
        %1721 = vmatpush1.msra.mxu0 %v1029
        %1722 = vmatprep.subr.mxu0 %v1062
        %1723 = vmatpush1.msra.mxu0 %v1061
        %1724 = vmatprep.subr.mxu0 %v1094
        %1725 = vmatpush1.msra.mxu0 %v1093
        %1726 = vmatprep.subr.mxu0 %v1126
        %1727 = vmatpush1.msra.mxu0 %v1125
        %1728 = vmatprep.subr.mxu0 %v1158
        %1729 = vmatpush1.msra.mxu0 %v1157
        %1730 = vmatprep.subr.mxu0 %v1190
        %1731 = vmatpush1.msra.mxu0 %v1189
        %1732 = vmatprep.subr.mxu0 %v1222
        %1733 = vmatpush1.msra.mxu0 %v1221
        %1734 = vmatprep.subr.mxu0 %v1254
        %1735 = vmatpush1.msra.mxu0 %v1253
        %1736 = vmatprep.subr.mxu0 %v1286
        %1737 = vmatpush1.msra.mxu0 %v1285
        %1738 = vmatprep.subr.mxu0 %v1318
        %1739 = vmatpush1.msra.mxu0 %v1317
        %1740 = vmatprep.subr.mxu0 %v1350
        %1741 = vmatpush1.msra.mxu0 %v1349
        %1742 = vmatprep.subr.mxu0 %v1382
        %1743 = vmatpush1.msra.mxu0 %v1381
        %1744 = vmatprep.subr.mxu0 %v1414
        %1745 = vmatpush1.msra.mxu0 %v1413
        %1746 = vmatprep.subr.mxu0 %v1446
        %1747 = vmatpush1.msra.mxu0 %v1445
        %1748 = vmatprep.mubr.f32.mxu0 %v446
        %1749 = vmatmul.mubr.f32.gmra.mrb[0].mxu0 %v445
        %v1750 = vpop.f32.mrb[0].mxu0
        %v1751 = vadd.f32 0.0, %v1750
        %v1752 = vpop.f32.mrb[0].mxu0
        %v1753 = vadd.f32 0.0, %v1752
        %1754 = vdwg.mxu0
        %1755 = vmatprep.subr.mxu0 %v456
        %1756 = vmatpush1.msra.mxu0 %v455
        %1757 = vmatprep.subr.mxu0 %v488
        %1758 = vmatpush1.msra.mxu0 %v487
        %1759 = vmatprep.subr.mxu0 %v520
        %1760 = vmatpush1.msra.mxu0 %v519
        %1761 = vmatprep.subr.mxu0 %v552
        %1762 = vmatpush1.msra.mxu0 %v551
        %1763 = vmatprep.subr.mxu0 %v584
        %1764 = vmatpush1.msra.mxu0 %v583
        %1765 = vmatprep.subr.mxu0 %v616
        %1766 = vmatpush1.msra.mxu0 %v615
        %1767 = vmatprep.subr.mxu0 %v648
        %1768 = vmatpush1.msra.mxu0 %v647
        %1769 = vmatprep.subr.mxu0 %v680
        %1770 = vmatpush1.msra.mxu0 %v679
        %1771 = vmatprep.subr.mxu0 %v712
        %1772 = vmatpush1.msra.mxu0 %v711
        %1773 = vmatprep.subr.mxu0 %v744
        %1774 = vmatpush1.msra.mxu0 %v743
        %1775 = vmatprep.subr.mxu0 %v776
        %1776 = vmatpush1.msra.mxu0 %v775
        %1777 = vmatprep.subr.mxu0 %v808
        %1778 = vmatpush1.msra.mxu0 %v807
        %1779 = vmatprep.subr.mxu0 %v840
        %1780 = vmatpush1.msra.mxu0 %v839
        %1781 = vmatprep.subr.mxu0 %v872
        %1782 = vmatpush1.msra.mxu0 %v871
        %1783 = vmatprep.subr.mxu0 %v904
        %1784 = vmatpush1.msra.mxu0 %v903
        %1785 = vmatprep.subr.mxu0 %v936
        %1786 = vmatpush1.msra.mxu0 %v935
        %1787 = vmatprep.subr.mxu0 %v968
        %1788 = vmatpush1.msra.mxu0 %v967
        %1789 = vmatprep.subr.mxu0 %v1000
        %1790 = vmatpush1.msra.mxu0 %v999
        %1791 = vmatprep.subr.mxu0 %v1032
        %1792 = vmatpush1.msra.mxu0 %v1031
        %1793 = vmatprep.subr.mxu0 %v1064
        %1794 = vmatpush1.msra.mxu0 %v1063
        %1795 = vmatprep.subr.mxu0 %v1096
        %1796 = vmatpush1.msra.mxu0 %v1095
        %1797 = vmatprep.subr.mxu0 %v1128
        %1798 = vmatpush1.msra.mxu0 %v1127
        %1799 = vmatprep.subr.mxu0 %v1160
        %1800 = vmatpush1.msra.mxu0 %v1159
        %1801 = vmatprep.subr.mxu0 %v1192
        %1802 = vmatpush1.msra.mxu0 %v1191
        %1803 = vmatprep.subr.mxu0 %v1224
        %1804 = vmatpush1.msra.mxu0 %v1223
        %1805 = vmatprep.subr.mxu0 %v1256
        %1806 = vmatpush1.msra.mxu0 %v1255
        %1807 = vmatprep.subr.mxu0 %v1288
        %1808 = vmatpush1.msra.mxu0 %v1287
        %1809 = vmatprep.subr.mxu0 %v1320
        %1810 = vmatpush1.msra.mxu0 %v1319
        %1811 = vmatprep.subr.mxu0 %v1352
        %1812 = vmatpush1.msra.mxu0 %v1351
        %1813 = vmatprep.subr.mxu0 %v1384
        %1814 = vmatpush1.msra.mxu0 %v1383
        %1815 = vmatprep.subr.mxu0 %v1416
        %1816 = vmatpush1.msra.mxu0 %v1415
        %1817 = vmatprep.subr.mxu0 %v1448
        %1818 = vmatpush1.msra.mxu0 %v1447
        %1819 = vmatprep.mubr.f32.mxu0 %v446
        %1820 = vmatmul.mubr.f32.gmra.mrb[0].mxu0 %v445
        %v1821 = vpop.f32.mrb[0].mxu0
        %v1822 = vadd.f32 0.0, %v1821
        %v1823 = vpop.f32.mrb[0].mxu0
        %v1824 = vadd.f32 0.0, %v1823
        %1825 = vdwg.mxu0
        %1826 = vmatprep.subr.mxu0 %v458
        %1827 = vmatpush1.msra.mxu0 %v457
        %1828 = vmatprep.subr.mxu0 %v490
        %1829 = vmatpush1.msra.mxu0 %v489
        %1830 = vmatprep.subr.mxu0 %v522
        %1831 = vmatpush1.msra.mxu0 %v521
        %1832 = vmatprep.subr.mxu0 %v554
        %1833 = vmatpush1.msra.mxu0 %v553
        %1834 = vmatprep.subr.mxu0 %v586
        %1835 = vmatpush1.msra.mxu0 %v585
        %1836 = vmatprep.subr.mxu0 %v618
        %1837 = vmatpush1.msra.mxu0 %v617
        %1838 = vmatprep.subr.mxu0 %v650
        %1839 = vmatpush1.msra.mxu0 %v649
        %1840 = vmatprep.subr.mxu0 %v682
        %1841 = vmatpush1.msra.mxu0 %v681
        %1842 = vmatprep.subr.mxu0 %v714
        %1843 = vmatpush1.msra.mxu0 %v713
        %1844 = vmatprep.subr.mxu0 %v746
        %1845 = vmatpush1.msra.mxu0 %v745
        %1846 = vmatprep.subr.mxu0 %v778
        %1847 = vmatpush1.msra.mxu0 %v777
        %1848 = vmatprep.subr.mxu0 %v810
        %1849 = vmatpush1.msra.mxu0 %v809
        %1850 = vmatprep.subr.mxu0 %v842
        %1851 = vmatpush1.msra.mxu0 %v841
        %1852 = vmatprep.subr.mxu0 %v874
        %1853 = vmatpush1.msra.mxu0 %v873
        %1854 = vmatprep.subr.mxu0 %v906
        %1855 = vmatpush1.msra.mxu0 %v905
        %1856 = vmatprep.subr.mxu0 %v938
        %1857 = vmatpush1.msra.mxu0 %v937
        %1858 = vmatprep.subr.mxu0 %v970
        %1859 = vmatpush1.msra.mxu0 %v969
        %1860 = vmatprep.subr.mxu0 %v1002
        %1861 = vmatpush1.msra.mxu0 %v1001
        %1862 = vmatprep.subr.mxu0 %v1034
        %1863 = vmatpush1.msra.mxu0 %v1033
        %1864 = vmatprep.subr.mxu0 %v1066
        %1865 = vmatpush1.msra.mxu0 %v1065
        %1866 = vmatprep.subr.mxu0 %v1098
        %1867 = vmatpush1.msra.mxu0 %v1097
        %1868 = vmatprep.subr.mxu0 %v1130
        %1869 = vmatpush1.msra.mxu0 %v1129
        %1870 = vmatprep.subr.mxu0 %v1162
        %1871 = vmatpush1.msra.mxu0 %v1161
        %1872 = vmatprep.subr.mxu0 %v1194
        %1873 = vmatpush1.msra.mxu0 %v1193
        %1874 = vmatprep.subr.mxu0 %v1226
        %1875 = vmatpush1.msra.mxu0 %v1225
        %1876 = vmatprep.subr.mxu0 %v1258
        %1877 = vmatpush1.msra.mxu0 %v1257
        %1878 = vmatprep.subr.mxu0 %v1290
        %1879 = vmatpush1.msra.mxu0 %v1289
        %1880 = vmatprep.subr.mxu0 %v1322
        %1881 = vmatpush1.msra.mxu0 %v1321
        %1882 = vmatprep.subr.mxu0 %v1354
        %1883 = vmatpush1.msra.mxu0 %v1353
        %1884 = vmatprep.subr.mxu0 %v1386
        %1885 = vmatpush1.msra.mxu0 %v1385
        %1886 = vmatprep.subr.mxu0 %v1418
        %1887 = vmatpush1.msra.mxu0 %v1417
        %1888 = vmatprep.subr.mxu0 %v1450
        %1889 = vmatpush1.msra.mxu0 %v1449
        %1890 = vmatprep.mubr.f32.mxu0 %v446
        %1891 = vmatmul.mubr.f32.gmra.mrb[0].mxu0 %v445
        %v1892 = vpop.f32.mrb[0].mxu0
        %v1893 = vadd.f32 0.0, %v1892
        %v1894 = vpop.f32.mrb[0].mxu0
        %v1895 = vadd.f32 0.0, %v1894
        %1896 = vdwg.mxu0
        %1897 = vmatprep.subr.mxu0 %v460
        %1898 = vmatpush1.msra.mxu0 %v459
        %1899 = vmatprep.subr.mxu0 %v492
        %1900 = vmatpush1.msra.mxu0 %v491
        %1901 = vmatprep.subr.mxu0 %v524
        %1902 = vmatpush1.msra.mxu0 %v523
        %1903 = vmatprep.subr.mxu0 %v556
        %1904 = vmatpush1.msra.mxu0 %v555
        %1905 = vmatprep.subr.mxu0 %v588
        %1906 = vmatpush1.msra.mxu0 %v587
        %1907 = vmatprep.subr.mxu0 %v620
        %1908 = vmatpush1.msra.mxu0 %v619
        %1909 = vmatprep.subr.mxu0 %v652
        %1910 = vmatpush1.msra.mxu0 %v651
        %1911 = vmatprep.subr.mxu0 %v684
        %1912 = vmatpush1.msra.mxu0 %v683
        %1913 = vmatprep.subr.mxu0 %v716
        %1914 = vmatpush1.msra.mxu0 %v715
        %1915 = vmatprep.subr.mxu0 %v748
        %1916 = vmatpush1.msra.mxu0 %v747
        %1917 = vmatprep.subr.mxu0 %v780
        %1918 = vmatpush1.msra.mxu0 %v779
        %1919 = vmatprep.subr.mxu0 %v812
        %1920 = vmatpush1.msra.mxu0 %v811
        %1921 = vmatprep.subr.mxu0 %v844
        %1922 = vmatpush1.msra.mxu0 %v843
        %1923 = vmatprep.subr.mxu0 %v876
        %1924 = vmatpush1.msra.mxu0 %v875
        %1925 = vmatprep.subr.mxu0 %v908
        %1926 = vmatpush1.msra.mxu0 %v907
        %1927 = vmatprep.subr.mxu0 %v940
        %1928 = vmatpush1.msra.mxu0 %v939
        %1929 = vmatprep.subr.mxu0 %v972
        %1930 = vmatpush1.msra.mxu0 %v971
        %1931 = vmatprep.subr.mxu0 %v1004
        %1932 = vmatpush1.msra.mxu0 %v1003
        %1933 = vmatprep.subr.mxu0 %v1036
        %1934 = vmatpush1.msra.mxu0 %v1035
        %1935 = vmatprep.subr.mxu0 %v1068
        %1936 = vmatpush1.msra.mxu0 %v1067
        %1937 = vmatprep.subr.mxu0 %v1100
        %1938 = vmatpush1.msra.mxu0 %v1099
        %1939 = vmatprep.subr.mxu0 %v1132
        %1940 = vmatpush1.msra.mxu0 %v1131
        %1941 = vmatprep.subr.mxu0 %v1164
        %1942 = vmatpush1.msra.mxu0 %v1163
        %1943 = vmatprep.subr.mxu0 %v1196
        %1944 = vmatpush1.msra.mxu0 %v1195
        %1945 = vmatprep.subr.mxu0 %v1228
        %1946 = vmatpush1.msra.mxu0 %v1227
        %1947 = vmatprep.subr.mxu0 %v1260
        %1948 = vmatpush1.msra.mxu0 %v1259
        %1949 = vmatprep.subr.mxu0 %v1292
        %1950 = vmatpush1.msra.mxu0 %v1291
        %1951 = vmatprep.subr.mxu0 %v1324
        %1952 = vmatpush1.msra.mxu0 %v1323
        %1953 = vmatprep.subr.mxu0 %v1356
        %1954 = vmatpush1.msra.mxu0 %v1355
        %1955 = vmatprep.subr.mxu0 %v1388
        %1956 = vmatpush1.msra.mxu0 %v1387
        %1957 = vmatprep.subr.mxu0 %v1420
        %1958 = vmatpush1.msra.mxu0 %v1419
        %1959 = vmatprep.subr.mxu0 %v1452
        %1960 = vmatpush1.msra.mxu0 %v1451
        %1961 = vmatprep.mubr.f32.mxu0 %v446
        %1962 = vmatmul.mubr.f32.gmra.mrb[0].mxu0 %v445
        %v1963 = vpop.f32.mrb[0].mxu0
        %v1964 = vadd.f32 0.0, %v1963
        %v1965 = vpop.f32.mrb[0].mxu0
        %v1966 = vadd.f32 0.0, %v1965
        %1967 = vdwg.mxu0
        %1968 = vmatprep.subr.mxu0 %v462
        %1969 = vmatpush1.msra.mxu0 %v461
        %1970 = vmatprep.subr.mxu0 %v494
        %1971 = vmatpush1.msra.mxu0 %v493
        %1972 = vmatprep.subr.mxu0 %v526
        %1973 = vmatpush1.msra.mxu0 %v525
        %1974 = vmatprep.subr.mxu0 %v558
        %1975 = vmatpush1.msra.mxu0 %v557
        %1976 = vmatprep.subr.mxu0 %v590
        %1977 = vmatpush1.msra.mxu0 %v589
        %1978 = vmatprep.subr.mxu0 %v622
        %1979 = vmatpush1.msra.mxu0 %v621
        %1980 = vmatprep.subr.mxu0 %v654
        %1981 = vmatpush1.msra.mxu0 %v653
        %1982 = vmatprep.subr.mxu0 %v686
        %1983 = vmatpush1.msra.mxu0 %v685
        %1984 = vmatprep.subr.mxu0 %v718
        %1985 = vmatpush1.msra.mxu0 %v717
        %1986 = vmatprep.subr.mxu0 %v750
        %1987 = vmatpush1.msra.mxu0 %v749
        %1988 = vmatprep.subr.mxu0 %v782
        %1989 = vmatpush1.msra.mxu0 %v781
        %1990 = vmatprep.subr.mxu0 %v814
        %1991 = vmatpush1.msra.mxu0 %v813
        %1992 = vmatprep.subr.mxu0 %v846
        %1993 = vmatpush1.msra.mxu0 %v845
        %1994 = vmatprep.subr.mxu0 %v878
        %1995 = vmatpush1.msra.mxu0 %v877
        %1996 = vmatprep.subr.mxu0 %v910
        %1997 = vmatpush1.msra.mxu0 %v909
        %1998 = vmatprep.subr.mxu0 %v942
        %1999 = vmatpush1.msra.mxu0 %v941
        %2000 = vmatprep.subr.mxu0 %v974
        %2001 = vmatpush1.msra.mxu0 %v973
        %2002 = vmatprep.subr.mxu0 %v1006
        %2003 = vmatpush1.msra.mxu0 %v1005
        %2004 = vmatprep.subr.mxu0 %v1038
        %2005 = vmatpush1.msra.mxu0 %v1037
        %2006 = vmatprep.subr.mxu0 %v1070
        %2007 = vmatpush1.msra.mxu0 %v1069
        %2008 = vmatprep.subr.mxu0 %v1102
        %2009 = vmatpush1.msra.mxu0 %v1101
        %2010 = vmatprep.subr.mxu0 %v1134
        %2011 = vmatpush1.msra.mxu0 %v1133
        %2012 = vmatprep.subr.mxu0 %v1166
        %2013 = vmatpush1.msra.mxu0 %v1165
        %2014 = vmatprep.subr.mxu0 %v1198
        %2015 = vmatpush1.msra.mxu0 %v1197
        %2016 = vmatprep.subr.mxu0 %v1230
        %2017 = vmatpush1.msra.mxu0 %v1229
        %2018 = vmatprep.subr.mxu0 %v1262
        %2019 = vmatpush1.msra.mxu0 %v1261
        %2020 = vmatprep.subr.mxu0 %v1294
        %2021 = vmatpush1.msra.mxu0 %v1293
        %2022 = vmatprep.subr.mxu0 %v1326
        %2023 = vmatpush1.msra.mxu0 %v1325
        %2024 = vmatprep.subr.mxu0 %v1358
        %2025 = vmatpush1.msra.mxu0 %v1357
        %2026 = vmatprep.subr.mxu0 %v1390
        %2027 = vmatpush1.msra.mxu0 %v1389
        %2028 = vmatprep.subr.mxu0 %v1422
        %2029 = vmatpush1.msra.mxu0 %v1421
        %2030 = vmatprep.subr.mxu0 %v1454
        %2031 = vmatpush1.msra.mxu0 %v1453
        %2032 = vmatprep.mubr.f32.mxu0 %v446
        %2033 = vmatmul.mubr.f32.gmra.mrb[0].mxu0 %v445
        %v2034 = vpop.f32.mrb[0].mxu0
        %v2035 = vadd.f32 0.0, %v2034
        %v2036 = vpop.f32.mrb[0].mxu0
        %v2037 = vadd.f32 0.0, %v2036
        %2038 = vdwg.mxu0
        %2039 = vmatprep.subr.mxu0 %v464
        %2040 = vmatpush1.msra.mxu0 %v463
        %2041 = vmatprep.subr.mxu0 %v496
        %2042 = vmatpush1.msra.mxu0 %v495
        %2043 = vmatprep.subr.mxu0 %v528
        %2044 = vmatpush1.msra.mxu0 %v527
        %2045 = vmatprep.subr.mxu0 %v560
        %2046 = vmatpush1.msra.mxu0 %v559
        %2047 = vmatprep.subr.mxu0 %v592
        %2048 = vmatpush1.msra.mxu0 %v591
        %2049 = vmatprep.subr.mxu0 %v624
        %2050 = vmatpush1.msra.mxu0 %v623
        %2051 = vmatprep.subr.mxu0 %v656
        %2052 = vmatpush1.msra.mxu0 %v655
        %2053 = vmatprep.subr.mxu0 %v688
        %2054 = vmatpush1.msra.mxu0 %v687
        %2055 = vmatprep.subr.mxu0 %v720
        %2056 = vmatpush1.msra.mxu0 %v719
        %2057 = vmatprep.subr.mxu0 %v752
        %2058 = vmatpush1.msra.mxu0 %v751
        %2059 = vmatprep.subr.mxu0 %v784
        %2060 = vmatpush1.msra.mxu0 %v783
        %2061 = vmatprep.subr.mxu0 %v816
        %2062 = vmatpush1.msra.mxu0 %v815
        %2063 = vmatprep.subr.mxu0 %v848
        %2064 = vmatpush1.msra.mxu0 %v847
        %2065 = vmatprep.subr.mxu0 %v880
        %2066 = vmatpush1.msra.mxu0 %v879
        %2067 = vmatprep.subr.mxu0 %v912
        %2068 = vmatpush1.msra.mxu0 %v911
        %2069 = vmatprep.subr.mxu0 %v944
        %2070 = vmatpush1.msra.mxu0 %v943
        %2071 = vmatprep.subr.mxu0 %v976
        %2072 = vmatpush1.msra.mxu0 %v975
        %2073 = vmatprep.subr.mxu0 %v1008
        %2074 = vmatpush1.msra.mxu0 %v1007
        %2075 = vmatprep.subr.mxu0 %v1040
        %2076 = vmatpush1.msra.mxu0 %v1039
        %2077 = vmatprep.subr.mxu0 %v1072
        %2078 = vmatpush1.msra.mxu0 %v1071
        %2079 = vmatprep.subr.mxu0 %v1104
        %2080 = vmatpush1.msra.mxu0 %v1103
        %2081 = vmatprep.subr.mxu0 %v1136
        %2082 = vmatpush1.msra.mxu0 %v1135
        %2083 = vmatprep.subr.mxu0 %v1168
        %2084 = vmatpush1.msra.mxu0 %v1167
        %2085 = vmatprep.subr.mxu0 %v1200
        %2086 = vmatpush1.msra.mxu0 %v1199
        %2087 = vmatprep.subr.mxu0 %v1232
        %2088 = vmatpush1.msra.mxu0 %v1231
        %2089 = vmatprep.subr.mxu0 %v1264
        %2090 = vmatpush1.msra.mxu0 %v1263
        %2091 = vmatprep.subr.mxu0 %v1296
        %2092 = vmatpush1.msra.mxu0 %v1295
        %2093 = vmatprep.subr.mxu0 %v1328
        %2094 = vmatpush1.msra.mxu0 %v1327
        %2095 = vmatprep.subr.mxu0 %v1360
        %2096 = vmatpush1.msra.mxu0 %v1359
        %2097 = vmatprep.subr.mxu0 %v1392
        %2098 = vmatpush1.msra.mxu0 %v1391
        %2099 = vmatprep.subr.mxu0 %v1424
        %2100 = vmatpush1.msra.mxu0 %v1423
        %2101 = vmatprep.subr.mxu0 %v1456
        %2102 = vmatpush1.msra.mxu0 %v1455
        %2103 = vmatprep.mubr.f32.mxu0 %v446
        %2104 = vmatmul.mubr.f32.gmra.mrb[0].mxu0 %v445
        %v2105 = vpop.f32.mrb[0].mxu0
        %v2106 = vadd.f32 0.0, %v2105
        %v2107 = vpop.f32.mrb[0].mxu0
        %v2108 = vadd.f32 0.0, %v2107
        %2109 = vdwg.mxu0
        %2110 = vmatprep.subr.mxu0 %v466
        %2111 = vmatpush1.msra.mxu0 %v465
        %2112 = vmatprep.subr.mxu0 %v498
        %2113 = vmatpush1.msra.mxu0 %v497
        %2114 = vmatprep.subr.mxu0 %v530
        %2115 = vmatpush1.msra.mxu0 %v529
        %2116 = vmatprep.subr.mxu0 %v562
        %2117 = vmatpush1.msra.mxu0 %v561
        %2118 = vmatprep.subr.mxu0 %v594
        %2119 = vmatpush1.msra.mxu0 %v593
        %2120 = vmatprep.subr.mxu0 %v626
        %2121 = vmatpush1.msra.mxu0 %v625
        %2122 = vmatprep.subr.mxu0 %v658
        %2123 = vmatpush1.msra.mxu0 %v657
        %2124 = vmatprep.subr.mxu0 %v690
        %2125 = vmatpush1.msra.mxu0 %v689
        %2126 = vmatprep.subr.mxu0 %v722
        %2127 = vmatpush1.msra.mxu0 %v721
        %2128 = vmatprep.subr.mxu0 %v754
        %2129 = vmatpush1.msra.mxu0 %v753
        %2130 = vmatprep.subr.mxu0 %v786
        %2131 = vmatpush1.msra.mxu0 %v785
        %2132 = vmatprep.subr.mxu0 %v818
        %2133 = vmatpush1.msra.mxu0 %v817
        %2134 = vmatprep.subr.mxu0 %v850
        %2135 = vmatpush1.msra.mxu0 %v849
        %2136 = vmatprep.subr.mxu0 %v882
        %2137 = vmatpush1.msra.mxu0 %v881
        %2138 = vmatprep.subr.mxu0 %v914
        %2139 = vmatpush1.msra.mxu0 %v913
        %2140 = vmatprep.subr.mxu0 %v946
        %2141 = vmatpush1.msra.mxu0 %v945
        %2142 = vmatprep.subr.mxu0 %v978
        %2143 = vmatpush1.msra.mxu0 %v977
        %2144 = vmatprep.subr.mxu0 %v1010
        %2145 = vmatpush1.msra.mxu0 %v1009
        %2146 = vmatprep.subr.mxu0 %v1042
        %2147 = vmatpush1.msra.mxu0 %v1041
        %2148 = vmatprep.subr.mxu0 %v1074
        %2149 = vmatpush1.msra.mxu0 %v1073
        %2150 = vmatprep.subr.mxu0 %v1106
        %2151 = vmatpush1.msra.mxu0 %v1105
        %2152 = vmatprep.subr.mxu0 %v1138
        %2153 = vmatpush1.msra.mxu0 %v1137
        %2154 = vmatprep.subr.mxu0 %v1170
        %2155 = vmatpush1.msra.mxu0 %v1169
        %2156 = vmatprep.subr.mxu0 %v1202
        %2157 = vmatpush1.msra.mxu0 %v1201
        %2158 = vmatprep.subr.mxu0 %v1234
        %2159 = vmatpush1.msra.mxu0 %v1233
        %2160 = vmatprep.subr.mxu0 %v1266
        %2161 = vmatpush1.msra.mxu0 %v1265
        %2162 = vmatprep.subr.mxu0 %v1298
        %2163 = vmatpush1.msra.mxu0 %v1297
        %2164 = vmatprep.subr.mxu0 %v1330
        %2165 = vmatpush1.msra.mxu0 %v1329
        %2166 = vmatprep.subr.mxu0 %v1362
        %2167 = vmatpush1.msra.mxu0 %v1361
        %2168 = vmatprep.subr.mxu0 %v1394
        %2169 = vmatpush1.msra.mxu0 %v1393
        %2170 = vmatprep.subr.mxu0 %v1426
        %2171 = vmatpush1.msra.mxu0 %v1425
        %2172 = vmatprep.subr.mxu0 %v1458
        %2173 = vmatpush1.msra.mxu0 %v1457
        %2174 = vmatprep.mubr.f32.mxu0 %v446
        %2175 = vmatmul.mubr.f32.gmra.mrb[0].mxu0 %v445
        %v2176 = vpop.f32.mrb[0].mxu0
        %v2177 = vadd.f32 0.0, %v2176
        %v2178 = vpop.f32.mrb[0].mxu0
        %v2179 = vadd.f32 0.0, %v2178
        %2180 = vdwg.mxu0
        %2181 = vmatprep.subr.mxu0 %v468
        %2182 = vmatpush1.msra.mxu0 %v467
        %2183 = vmatprep.subr.mxu0 %v500
        %2184 = vmatpush1.msra.mxu0 %v499
        %2185 = vmatprep.subr.mxu0 %v532
        %2186 = vmatpush1.msra.mxu0 %v531
        %2187 = vmatprep.subr.mxu0 %v564
        %2188 = vmatpush1.msra.mxu0 %v563
        %2189 = vmatprep.subr.mxu0 %v596
        %2190 = vmatpush1.msra.mxu0 %v595
        %2191 = vmatprep.subr.mxu0 %v628
        %2192 = vmatpush1.msra.mxu0 %v627
        %2193 = vmatprep.subr.mxu0 %v660
        %2194 = vmatpush1.msra.mxu0 %v659
        %2195 = vmatprep.subr.mxu0 %v692
        %2196 = vmatpush1.msra.mxu0 %v691
        %2197 = vmatprep.subr.mxu0 %v724
        %2198 = vmatpush1.msra.mxu0 %v723
        %2199 = vmatprep.subr.mxu0 %v756
        %2200 = vmatpush1.msra.mxu0 %v755
        %2201 = vmatprep.subr.mxu0 %v788
        %2202 = vmatpush1.msra.mxu0 %v787
        %2203 = vmatprep.subr.mxu0 %v820
        %2204 = vmatpush1.msra.mxu0 %v819
        %2205 = vmatprep.subr.mxu0 %v852
        %2206 = vmatpush1.msra.mxu0 %v851
        %2207 = vmatprep.subr.mxu0 %v884
        %2208 = vmatpush1.msra.mxu0 %v883
        %2209 = vmatprep.subr.mxu0 %v916
        %2210 = vmatpush1.msra.mxu0 %v915
        %2211 = vmatprep.subr.mxu0 %v948
        %2212 = vmatpush1.msra.mxu0 %v947
        %2213 = vmatprep.subr.mxu0 %v980
        %2214 = vmatpush1.msra.mxu0 %v979
        %2215 = vmatprep.subr.mxu0 %v1012
        %2216 = vmatpush1.msra.mxu0 %v1011
        %2217 = vmatprep.subr.mxu0 %v1044
        %2218 = vmatpush1.msra.mxu0 %v1043
        %2219 = vmatprep.subr.mxu0 %v1076
        %2220 = vmatpush1.msra.mxu0 %v1075
        %2221 = vmatprep.subr.mxu0 %v1108
        %2222 = vmatpush1.msra.mxu0 %v1107
        %2223 = vmatprep.subr.mxu0 %v1140
        %2224 = vmatpush1.msra.mxu0 %v1139
        %2225 = vmatprep.subr.mxu0 %v1172
        %2226 = vmatpush1.msra.mxu0 %v1171
        %2227 = vmatprep.subr.mxu0 %v1204
        %2228 = vmatpush1.msra.mxu0 %v1203
        %2229 = vmatprep.subr.mxu0 %v1236
        %2230 = vmatpush1.msra.mxu0 %v1235
        %2231 = vmatprep.subr.mxu0 %v1268
        %2232 = vmatpush1.msra.mxu0 %v1267
        %2233 = vmatprep.subr.mxu0 %v1300
        %2234 = vmatpush1.msra.mxu0 %v1299
        %2235 = vmatprep.subr.mxu0 %v1332
        %2236 = vmatpush1.msra.mxu0 %v1331
        %2237 = vmatprep.subr.mxu0 %v1364
        %2238 = vmatpush1.msra.mxu0 %v1363
        %2239 = vmatprep.subr.mxu0 %v1396
        %2240 = vmatpush1.msra.mxu0 %v1395
        %2241 = vmatprep.subr.mxu0 %v1428
        %2242 = vmatpush1.msra.mxu0 %v1427
        %2243 = vmatprep.subr.mxu0 %v1460
        %2244 = vmatpush1.msra.mxu0 %v1459
        %2245 = vmatprep.mubr.f32.mxu0 %v446
        %2246 = vmatmul.mubr.f32.gmra.mrb[0].mxu0 %v445
        %v2247 = vpop.f32.mrb[0].mxu0
        %v2248 = vadd.f32 0.0, %v2247
        %v2249 = vpop.f32.mrb[0].mxu0
        %v2250 = vadd.f32 0.0, %v2249
        %2251 = vdwg.mxu0
        %2252 = vmatprep.subr.mxu0 %v470
        %2253 = vmatpush1.msra.mxu0 %v469
        %2254 = vmatprep.subr.mxu0 %v502
        %2255 = vmatpush1.msra.mxu0 %v501
        %2256 = vmatprep.subr.mxu0 %v534
        %2257 = vmatpush1.msra.mxu0 %v533
        %2258 = vmatprep.subr.mxu0 %v566
        %2259 = vmatpush1.msra.mxu0 %v565
        %2260 = vmatprep.subr.mxu0 %v598
        %2261 = vmatpush1.msra.mxu0 %v597
        %2262 = vmatprep.subr.mxu0 %v630
        %2263 = vmatpush1.msra.mxu0 %v629
        %2264 = vmatprep.subr.mxu0 %v662
        %2265 = vmatpush1.msra.mxu0 %v661
        %2266 = vmatprep.subr.mxu0 %v694
        %2267 = vmatpush1.msra.mxu0 %v693
        %2268 = vmatprep.subr.mxu0 %v726
        %2269 = vmatpush1.msra.mxu0 %v725
        %2270 = vmatprep.subr.mxu0 %v758
        %2271 = vmatpush1.msra.mxu0 %v757
        %2272 = vmatprep.subr.mxu0 %v790
        %2273 = vmatpush1.msra.mxu0 %v789
        %2274 = vmatprep.subr.mxu0 %v822
        %2275 = vmatpush1.msra.mxu0 %v821
        %2276 = vmatprep.subr.mxu0 %v854
        %2277 = vmatpush1.msra.mxu0 %v853
        %2278 = vmatprep.subr.mxu0 %v886
        %2279 = vmatpush1.msra.mxu0 %v885
        %2280 = vmatprep.subr.mxu0 %v918
        %2281 = vmatpush1.msra.mxu0 %v917
        %2282 = vmatprep.subr.mxu0 %v950
        %2283 = vmatpush1.msra.mxu0 %v949
        %2284 = vmatprep.subr.mxu0 %v982
        %2285 = vmatpush1.msra.mxu0 %v981
        %2286 = vmatprep.subr.mxu0 %v1014
        %2287 = vmatpush1.msra.mxu0 %v1013
        %2288 = vmatprep.subr.mxu0 %v1046
        %2289 = vmatpush1.msra.mxu0 %v1045
        %2290 = vmatprep.subr.mxu0 %v1078
        %2291 = vmatpush1.msra.mxu0 %v1077
        %2292 = vmatprep.subr.mxu0 %v1110
        %2293 = vmatpush1.msra.mxu0 %v1109
        %2294 = vmatprep.subr.mxu0 %v1142
        %2295 = vmatpush1.msra.mxu0 %v1141
        %2296 = vmatprep.subr.mxu0 %v1174
        %2297 = vmatpush1.msra.mxu0 %v1173
        %2298 = vmatprep.subr.mxu0 %v1206
        %2299 = vmatpush1.msra.mxu0 %v1205
        %2300 = vmatprep.subr.mxu0 %v1238
        %2301 = vmatpush1.msra.mxu0 %v1237
        %2302 = vmatprep.subr.mxu0 %v1270
        %2303 = vmatpush1.msra.mxu0 %v1269
        %2304 = vmatprep.subr.mxu0 %v1302
        %2305 = vmatpush1.msra.mxu0 %v1301
        %2306 = vmatprep.subr.mxu0 %v1334
        %2307 = vmatpush1.msra.mxu0 %v1333
        %2308 = vmatprep.subr.mxu0 %v1366
        %2309 = vmatpush1.msra.mxu0 %v1365
        %2310 = vmatprep.subr.mxu0 %v1398
        %2311 = vmatpush1.msra.mxu0 %v1397
        %2312 = vmatprep.subr.mxu0 %v1430
        %2313 = vmatpush1.msra.mxu0 %v1429
        %2314 = vmatprep.subr.mxu0 %v1462
        %2315 = vmatpush1.msra.mxu0 %v1461
        %2316 = vmatprep.mubr.f32.mxu0 %v446
        %2317 = vmatmul.mubr.f32.gmra.mrb[0].mxu0 %v445
        %v2318 = vpop.f32.mrb[0].mxu0
        %v2319 = vadd.f32 0.0, %v2318
        %v2320 = vpop.f32.mrb[0].mxu0
        %v2321 = vadd.f32 0.0, %v2320
        %2322 = vdwg.mxu0
        %2323 = vmatprep.subr.mxu0 %v472
        %2324 = vmatpush1.msra.mxu0 %v471
        %2325 = vmatprep.subr.mxu0 %v504
        %2326 = vmatpush1.msra.mxu0 %v503
        %2327 = vmatprep.subr.mxu0 %v536
        %2328 = vmatpush1.msra.mxu0 %v535
        %2329 = vmatprep.subr.mxu0 %v568
        %2330 = vmatpush1.msra.mxu0 %v567
        %2331 = vmatprep.subr.mxu0 %v600
        %2332 = vmatpush1.msra.mxu0 %v599
        %2333 = vmatprep.subr.mxu0 %v632
        %2334 = vmatpush1.msra.mxu0 %v631
        %2335 = vmatprep.subr.mxu0 %v664
        %2336 = vmatpush1.msra.mxu0 %v663
        %2337 = vmatprep.subr.mxu0 %v696
        %2338 = vmatpush1.msra.mxu0 %v695
        %2339 = vmatprep.subr.mxu0 %v728
        %2340 = vmatpush1.msra.mxu0 %v727
        %2341 = vmatprep.subr.mxu0 %v760
        %2342 = vmatpush1.msra.mxu0 %v759
        %2343 = vmatprep.subr.mxu0 %v792
        %2344 = vmatpush1.msra.mxu0 %v791
        %2345 = vmatprep.subr.mxu0 %v824
        %2346 = vmatpush1.msra.mxu0 %v823
        %2347 = vmatprep.subr.mxu0 %v856
        %2348 = vmatpush1.msra.mxu0 %v855
        %2349 = vmatprep.subr.mxu0 %v888
        %2350 = vmatpush1.msra.mxu0 %v887
        %2351 = vmatprep.subr.mxu0 %v920
        %2352 = vmatpush1.msra.mxu0 %v919
        %2353 = vmatprep.subr.mxu0 %v952
        %2354 = vmatpush1.msra.mxu0 %v951
        %2355 = vmatprep.subr.mxu0 %v984
        %2356 = vmatpush1.msra.mxu0 %v983
        %2357 = vmatprep.subr.mxu0 %v1016
        %2358 = vmatpush1.msra.mxu0 %v1015
        %2359 = vmatprep.subr.mxu0 %v1048
        %2360 = vmatpush1.msra.mxu0 %v1047
        %2361 = vmatprep.subr.mxu0 %v1080
        %2362 = vmatpush1.msra.mxu0 %v1079
        %2363 = vmatprep.subr.mxu0 %v1112
        %2364 = vmatpush1.msra.mxu0 %v1111
        %2365 = vmatprep.subr.mxu0 %v1144
        %2366 = vmatpush1.msra.mxu0 %v1143
        %2367 = vmatprep.subr.mxu0 %v1176
        %2368 = vmatpush1.msra.mxu0 %v1175
        %2369 = vmatprep.subr.mxu0 %v1208
        %2370 = vmatpush1.msra.mxu0 %v1207
        %2371 = vmatprep.subr.mxu0 %v1240
        %2372 = vmatpush1.msra.mxu0 %v1239
        %2373 = vmatprep.subr.mxu0 %v1272
        %2374 = vmatpush1.msra.mxu0 %v1271
        %2375 = vmatprep.subr.mxu0 %v1304
        %2376 = vmatpush1.msra.mxu0 %v1303
        %2377 = vmatprep.subr.mxu0 %v1336
        %2378 = vmatpush1.msra.mxu0 %v1335
        %2379 = vmatprep.subr.mxu0 %v1368
        %2380 = vmatpush1.msra.mxu0 %v1367
        %2381 = vmatprep.subr.mxu0 %v1400
        %2382 = vmatpush1.msra.mxu0 %v1399
        %2383 = vmatprep.subr.mxu0 %v1432
        %2384 = vmatpush1.msra.mxu0 %v1431
        %2385 = vmatprep.subr.mxu0 %v1464
        %2386 = vmatpush1.msra.mxu0 %v1463
        %2387 = vmatprep.mubr.f32.mxu0 %v446
        %2388 = vmatmul.mubr.f32.gmra.mrb[0].mxu0 %v445
        %v2389 = vpop.f32.mrb[0].mxu0
        %v2390 = vadd.f32 0.0, %v2389
        %v2391 = vpop.f32.mrb[0].mxu0
        %v2392 = vadd.f32 0.0, %v2391
        %2393 = vdwg.mxu0
        %2394 = vmatprep.subr.mxu0 %v474
        %2395 = vmatpush1.msra.mxu0 %v473
        %2396 = vmatprep.subr.mxu0 %v506
        %2397 = vmatpush1.msra.mxu0 %v505
        %2398 = vmatprep.subr.mxu0 %v538
        %2399 = vmatpush1.msra.mxu0 %v537
        %2400 = vmatprep.subr.mxu0 %v570
        %2401 = vmatpush1.msra.mxu0 %v569
        %2402 = vmatprep.subr.mxu0 %v602
        %2403 = vmatpush1.msra.mxu0 %v601
        %2404 = vmatprep.subr.mxu0 %v634
        %2405 = vmatpush1.msra.mxu0 %v633
        %2406 = vmatprep.subr.mxu0 %v666
        %2407 = vmatpush1.msra.mxu0 %v665
        %2408 = vmatprep.subr.mxu0 %v698
        %2409 = vmatpush1.msra.mxu0 %v697
        %2410 = vmatprep.subr.mxu0 %v730
        %2411 = vmatpush1.msra.mxu0 %v729
        %2412 = vmatprep.subr.mxu0 %v762
        %2413 = vmatpush1.msra.mxu0 %v761
        %2414 = vmatprep.subr.mxu0 %v794
        %2415 = vmatpush1.msra.mxu0 %v793
        %2416 = vmatprep.subr.mxu0 %v826
        %2417 = vmatpush1.msra.mxu0 %v825
        %2418 = vmatprep.subr.mxu0 %v858
        %2419 = vmatpush1.msra.mxu0 %v857
        %2420 = vmatprep.subr.mxu0 %v890
        %2421 = vmatpush1.msra.mxu0 %v889
        %2422 = vmatprep.subr.mxu0 %v922
        %2423 = vmatpush1.msra.mxu0 %v921
        %2424 = vmatprep.subr.mxu0 %v954
        %2425 = vmatpush1.msra.mxu0 %v953
        %2426 = vmatprep.subr.mxu0 %v986
        %2427 = vmatpush1.msra.mxu0 %v985
        %2428 = vmatprep.subr.mxu0 %v1018
        %2429 = vmatpush1.msra.mxu0 %v1017
        %2430 = vmatprep.subr.mxu0 %v1050
        %2431 = vmatpush1.msra.mxu0 %v1049
        %2432 = vmatprep.subr.mxu0 %v1082
        %2433 = vmatpush1.msra.mxu0 %v1081
        %2434 = vmatprep.subr.mxu0 %v1114
        %2435 = vmatpush1.msra.mxu0 %v1113
        %2436 = vmatprep.subr.mxu0 %v1146
        %2437 = vmatpush1.msra.mxu0 %v1145
        %2438 = vmatprep.subr.mxu0 %v1178
        %2439 = vmatpush1.msra.mxu0 %v1177
        %2440 = vmatprep.subr.mxu0 %v1210
        %2441 = vmatpush1.msra.mxu0 %v1209
        %2442 = vmatprep.subr.mxu0 %v1242
        %2443 = vmatpush1.msra.mxu0 %v1241
        %2444 = vmatprep.subr.mxu0 %v1274
        %2445 = vmatpush1.msra.mxu0 %v1273
        %2446 = vmatprep.subr.mxu0 %v1306
        %2447 = vmatpush1.msra.mxu0 %v1305
        %2448 = vmatprep.subr.mxu0 %v1338
        %2449 = vmatpush1.msra.mxu0 %v1337
        %2450 = vmatprep.subr.mxu0 %v1370
        %2451 = vmatpush1.msra.mxu0 %v1369
        %2452 = vmatprep.subr.mxu0 %v1402
        %2453 = vmatpush1.msra.mxu0 %v1401
        %2454 = vmatprep.subr.mxu0 %v1434
        %2455 = vmatpush1.msra.mxu0 %v1433
        %2456 = vmatprep.subr.mxu0 %v1466
        %2457 = vmatpush1.msra.mxu0 %v1465
        %2458 = vmatprep.mubr.f32.mxu0 %v446
        %2459 = vmatmul.mubr.f32.gmra.mrb[0].mxu0 %v445
        %v2460 = vpop.f32.mrb[0].mxu0
        %v2461 = vadd.f32 0.0, %v2460
        %v2462 = vpop.f32.mrb[0].mxu0
        %v2463 = vadd.f32 0.0, %v2462
        %2464 = vdwg.mxu0
        %2465 = vmatprep.subr.mxu0 %v476
        %2466 = vmatpush1.msra.mxu0 %v475
        %2467 = vmatprep.subr.mxu0 %v508
        %2468 = vmatpush1.msra.mxu0 %v507
        %2469 = vmatprep.subr.mxu0 %v540
        %2470 = vmatpush1.msra.mxu0 %v539
        %2471 = vmatprep.subr.mxu0 %v572
        %2472 = vmatpush1.msra.mxu0 %v571
        %2473 = vmatprep.subr.mxu0 %v604
        %2474 = vmatpush1.msra.mxu0 %v603
        %2475 = vmatprep.subr.mxu0 %v636
        %2476 = vmatpush1.msra.mxu0 %v635
        %2477 = vmatprep.subr.mxu0 %v668
        %2478 = vmatpush1.msra.mxu0 %v667
        %2479 = vmatprep.subr.mxu0 %v700
        %2480 = vmatpush1.msra.mxu0 %v699
        %2481 = vmatprep.subr.mxu0 %v732
        %2482 = vmatpush1.msra.mxu0 %v731
        %2483 = vmatprep.subr.mxu0 %v764
        %2484 = vmatpush1.msra.mxu0 %v763
        %2485 = vmatprep.subr.mxu0 %v796
        %2486 = vmatpush1.msra.mxu0 %v795
        %2487 = vmatprep.subr.mxu0 %v828
        %2488 = vmatpush1.msra.mxu0 %v827
        %2489 = vmatprep.subr.mxu0 %v860
        %2490 = vmatpush1.msra.mxu0 %v859
        %2491 = vmatprep.subr.mxu0 %v892
        %2492 = vmatpush1.msra.mxu0 %v891
        %2493 = vmatprep.subr.mxu0 %v924
        %2494 = vmatpush1.msra.mxu0 %v923
        %2495 = vmatprep.subr.mxu0 %v956
        %2496 = vmatpush1.msra.mxu0 %v955
        %2497 = vmatprep.subr.mxu0 %v988
        %2498 = vmatpush1.msra.mxu0 %v987
        %2499 = vmatprep.subr.mxu0 %v1020
        %2500 = vmatpush1.msra.mxu0 %v1019
        %2501 = vmatprep.subr.mxu0 %v1052
        %2502 = vmatpush1.msra.mxu0 %v1051
        %2503 = vmatprep.subr.mxu0 %v1084
        %2504 = vmatpush1.msra.mxu0 %v1083
        %2505 = vmatprep.subr.mxu0 %v1116
        %2506 = vmatpush1.msra.mxu0 %v1115
        %2507 = vmatprep.subr.mxu0 %v1148
        %2508 = vmatpush1.msra.mxu0 %v1147
        %2509 = vmatprep.subr.mxu0 %v1180
        %2510 = vmatpush1.msra.mxu0 %v1179
        %2511 = vmatprep.subr.mxu0 %v1212
        %2512 = vmatpush1.msra.mxu0 %v1211
        %2513 = vmatprep.subr.mxu0 %v1244
        %2514 = vmatpush1.msra.mxu0 %v1243
        %2515 = vmatprep.subr.mxu0 %v1276
        %2516 = vmatpush1.msra.mxu0 %v1275
        %2517 = vmatprep.subr.mxu0 %v1308
        %2518 = vmatpush1.msra.mxu0 %v1307
        %2519 = vmatprep.subr.mxu0 %v1340
        %2520 = vmatpush1.msra.mxu0 %v1339
        %2521 = vmatprep.subr.mxu0 %v1372
        %2522 = vmatpush1.msra.mxu0 %v1371
        %2523 = vmatprep.subr.mxu0 %v1404
        %2524 = vmatpush1.msra.mxu0 %v1403
        %2525 = vmatprep.subr.mxu0 %v1436
        %2526 = vmatpush1.msra.mxu0 %v1435
        %2527 = vmatprep.subr.mxu0 %v1468
        %2528 = vmatpush1.msra.mxu0 %v1467
        %2529 = vmatprep.mubr.f32.mxu0 %v446
        %2530 = vmatmul.mubr.f32.gmra.mrb[0].mxu0 %v445
        %v2531 = vpop.f32.mrb[0].mxu0
        %v2532 = vadd.f32 0.0, %v2531
        %v2533 = vpop.f32.mrb[0].mxu0
        %v2534 = vadd.f32 0.0, %v2533
        %2535 = vdwg.mxu0
        %2536 = vmatprep.subr.mxu0 %v478
        %2537 = vmatpush1.msra.mxu0 %v477
        %2538 = vmatprep.subr.mxu0 %v510
        %2539 = vmatpush1.msra.mxu0 %v509
        %2540 = vmatprep.subr.mxu0 %v542
        %2541 = vmatpush1.msra.mxu0 %v541
        %2542 = vmatprep.subr.mxu0 %v574
        %2543 = vmatpush1.msra.mxu0 %v573
        %2544 = vmatprep.subr.mxu0 %v606
        %2545 = vmatpush1.msra.mxu0 %v605
        %2546 = vmatprep.subr.mxu0 %v638
        %2547 = vmatpush1.msra.mxu0 %v637
        %2548 = vmatprep.subr.mxu0 %v670
        %2549 = vmatpush1.msra.mxu0 %v669
        %2550 = vmatprep.subr.mxu0 %v702
        %2551 = vmatpush1.msra.mxu0 %v701
        %2552 = vmatprep.subr.mxu0 %v734
        %2553 = vmatpush1.msra.mxu0 %v733
        %2554 = vmatprep.subr.mxu0 %v766
        %2555 = vmatpush1.msra.mxu0 %v765
        %2556 = vmatprep.subr.mxu0 %v798
        %2557 = vmatpush1.msra.mxu0 %v797
        %2558 = vmatprep.subr.mxu0 %v830
        %2559 = vmatpush1.msra.mxu0 %v829
        %2560 = vmatprep.subr.mxu0 %v862
        %2561 = vmatpush1.msra.mxu0 %v861
        %2562 = vmatprep.subr.mxu0 %v894
        %2563 = vmatpush1.msra.mxu0 %v893
        %2564 = vmatprep.subr.mxu0 %v926
        %2565 = vmatpush1.msra.mxu0 %v925
        %2566 = vmatprep.subr.mxu0 %v958
        %2567 = vmatpush1.msra.mxu0 %v957
        %2568 = vmatprep.subr.mxu0 %v990
        %2569 = vmatpush1.msra.mxu0 %v989
        %2570 = vmatprep.subr.mxu0 %v1022
        %2571 = vmatpush1.msra.mxu0 %v1021
        %2572 = vmatprep.subr.mxu0 %v1054
        %2573 = vmatpush1.msra.mxu0 %v1053
        %2574 = vmatprep.subr.mxu0 %v1086
        %2575 = vmatpush1.msra.mxu0 %v1085
        %2576 = vmatprep.subr.mxu0 %v1118
        %2577 = vmatpush1.msra.mxu0 %v1117
        %2578 = vmatprep.subr.mxu0 %v1150
        %2579 = vmatpush1.msra.mxu0 %v1149
        %2580 = vmatprep.subr.mxu0 %v1182
        %2581 = vmatpush1.msra.mxu0 %v1181
        %2582 = vmatprep.subr.mxu0 %v1214
        %2583 = vmatpush1.msra.mxu0 %v1213
        %2584 = vmatprep.subr.mxu0 %v1246
        %2585 = vmatpush1.msra.mxu0 %v1245
        %2586 = vmatprep.subr.mxu0 %v1278
        %2587 = vmatpush1.msra.mxu0 %v1277
        %2588 = vmatprep.subr.mxu0 %v1310
        %2589 = vmatpush1.msra.mxu0 %v1309
        %2590 = vmatprep.subr.mxu0 %v1342
        %2591 = vmatpush1.msra.mxu0 %v1341
        %2592 = vmatprep.subr.mxu0 %v1374
        %2593 = vmatpush1.msra.mxu0 %v1373
        %2594 = vmatprep.subr.mxu0 %v1406
        %2595 = vmatpush1.msra.mxu0 %v1405
        %2596 = vmatprep.subr.mxu0 %v1438
        %2597 = vmatpush1.msra.mxu0 %v1437
        %2598 = vmatprep.subr.mxu0 %v1470
        %2599 = vmatpush1.msra.mxu0 %v1469
        %2600 = vmatprep.mubr.f32.mxu0 %v446
        %2601 = vmatmul.mubr.f32.gmra.mrb[0].mxu0 %v445
        %v2602 = vpop.f32.mrb[0].mxu0
        %v2603 = vadd.f32 0.0, %v2602
        %v2604 = vpop.f32.mrb[0].mxu0
        %v2605 = vadd.f32 0.0, %v2604
        %2606 = vdwg.mxu0
        %v2607 = vmax.f32 %v1538, 0.0
        %v2608 = vmax.f32 %v1540, 0.0
        %v2609 = vmax.f32 %v1609, 0.0
        %v2610 = vmax.f32 %v1611, 0.0
        %v2611 = vmax.f32 %v1680, 0.0
        %v2612 = vmax.f32 %v1682, 0.0
        %v2613 = vmax.f32 %v1751, 0.0
        %v2614 = vmax.f32 %v1753, 0.0
        %v2615 = vmax.f32 %v1822, 0.0
        %v2616 = vmax.f32 %v1824, 0.0
        %v2617 = vmax.f32 %v1893, 0.0
        %v2618 = vmax.f32 %v1895, 0.0
        %v2619 = vmax.f32 %v1964, 0.0
        %v2620 = vmax.f32 %v1966, 0.0
        %v2621 = vmax.f32 %v2035, 0.0
        %v2622 = vmax.f32 %v2037, 0.0
        %v2623 = vmax.f32 %v2106, 0.0
        %v2624 = vmax.f32 %v2108, 0.0
        %v2625 = vmax.f32 %v2177, 0.0
        %v2626 = vmax.f32 %v2179, 0.0
        %v2627 = vmax.f32 %v2248, 0.0
        %v2628 = vmax.f32 %v2250, 0.0
        %v2629 = vmax.f32 %v2319, 0.0
        %v2630 = vmax.f32 %v2321, 0.0
        %v2631 = vmax.f32 %v2390, 0.0
        %v2632 = vmax.f32 %v2392, 0.0
        %v2633 = vmax.f32 %v2461, 0.0
        %v2634 = vmax.f32 %v2463, 0.0
        %v2635 = vmax.f32 %v2532, 0.0
        %v2636 = vmax.f32 %v2534, 0.0
        %v2637 = vmax.f32 %v2603, 0.0
        %v2638 = vmax.f32 %v2605, 0.0
        %v2671 = vcombine.low %v2607, %v2608
        %v2672 = vcombine.low %v2609, %v2610
        %v2673 = vcombine.low %v2611, %v2612
        %v2674 = vcombine.low %v2613, %v2614
        %v2676 = vunpack.c.l.s4 1966171168
        %v2677 = vunpack.c.0.s8 %v2676
        %v2678 = vlaneseq
        %v2679 = vshrl.u32 %v2678, 7
        %v2680 = vsub.s32 %v2677, %v2679
        %v2681 = vrot.slane %v2671, %v2680
        %v2683 = vunpack.c.l.s4 1966171168
        %v2684 = vunpack.c.0.s8 %v2683
        %v2685 = vlaneseq
        %v2686 = vshrl.u32 %v2685, 7
        %v2687 = vsub.s32 %v2684, %v2686
        %v2688 = vrot.slane %v2672, %v2687
        %v2690 = vunpack.c.l.s4 1966171168
        %v2691 = vunpack.c.0.s8 %v2690
        %v2692 = vlaneseq
        %v2693 = vshrl.u32 %v2692, 7
        %v2694 = vsub.s32 %v2691, %v2693
        %v2695 = vrot.slane %v2673, %v2694
        %v2697 = vunpack.c.l.s4 1966171168
        %v2698 = vunpack.c.0.s8 %v2697
        %v2699 = vlaneseq
        %v2700 = vshrl.u32 %v2699, 7
        %v2701 = vsub.s32 %v2698, %v2700
        %v2702 = vrot.slane %v2674, %v2701
        %v2703 = vcombine.low %v2681, %v2688
        %v2704 = vcombine.low %v2695, %v2702
        %v2706 = vunpack.c.l.s4 1966171168
        %v2707 = vunpack.c.0.s8 %v2706
        %v2708 = vlaneseq
        %v2709 = vshrl.u32 %v2708, 7
        %v2710 = vsub.s32 %v2707, %v2709
        %v2711 = vrot.slane %v2703, %v2710
        %v2713 = vunpack.c.l.s4 1966171168
        %v2714 = vunpack.c.0.s8 %v2713
        %v2715 = vlaneseq
        %v2716 = vshrl.u32 %v2715, 7
        %v2717 = vsub.s32 %v2714, %v2716
        %v2718 = vrot.slane %v2704, %v2717
        %v2719 = vcombine.low %v2711, %v2718
        %v2720 = vcombine.low %v2615, %v2616
        %v2721 = vcombine.low %v2617, %v2618
        %v2722 = vcombine.low %v2619, %v2620
        %v2723 = vcombine.low %v2621, %v2622
        %v2725 = vunpack.c.l.s4 1966171168
        %v2726 = vunpack.c.0.s8 %v2725
        %v2727 = vlaneseq
        %v2728 = vshrl.u32 %v2727, 7
        %v2729 = vsub.s32 %v2726, %v2728
        %v2730 = vrot.slane %v2720, %v2729
        %v2732 = vunpack.c.l.s4 1966171168
        %v2733 = vunpack.c.0.s8 %v2732
        %v2734 = vlaneseq
        %v2735 = vshrl.u32 %v2734, 7
        %v2736 = vsub.s32 %v2733, %v2735
        %v2737 = vrot.slane %v2721, %v2736
        %v2739 = vunpack.c.l.s4 1966171168
        %v2740 = vunpack.c.0.s8 %v2739
        %v2741 = vlaneseq
        %v2742 = vshrl.u32 %v2741, 7
        %v2743 = vsub.s32 %v2740, %v2742
        %v2744 = vrot.slane %v2722, %v2743
        %v2746 = vunpack.c.l.s4 1966171168
        %v2747 = vunpack.c.0.s8 %v2746
        %v2748 = vlaneseq
        %v2749 = vshrl.u32 %v2748, 7
        %v2750 = vsub.s32 %v2747, %v2749
        %v2751 = vrot.slane %v2723, %v2750
        %v2752 = vcombine.low %v2730, %v2737
        %v2753 = vcombine.low %v2744, %v2751
        %v2755 = vunpack.c.l.s4 1966171168
        %v2756 = vunpack.c.0.s8 %v2755
        %v2757 = vlaneseq
        %v2758 = vshrl.u32 %v2757, 7
        %v2759 = vsub.s32 %v2756, %v2758
        %v2760 = vrot.slane %v2752, %v2759
        %v2762 = vunpack.c.l.s4 1966171168
        %v2763 = vunpack.c.0.s8 %v2762
        %v2764 = vlaneseq
        %v2765 = vshrl.u32 %v2764, 7
        %v2766 = vsub.s32 %v2763, %v2765
        %v2767 = vrot.slane %v2753, %v2766
        %v2768 = vcombine.low %v2760, %v2767
        %v2769 = vcombine.low %v2623, %v2624
        %v2770 = vcombine.low %v2625, %v2626
        %v2771 = vcombine.low %v2627, %v2628
        %v2772 = vcombine.low %v2629, %v2630
        %v2774 = vunpack.c.l.s4 1966171168
        %v2775 = vunpack.c.0.s8 %v2774
        %v2776 = vlaneseq
        %v2777 = vshrl.u32 %v2776, 7
        %v2778 = vsub.s32 %v2775, %v2777
        %v2779 = vrot.slane %v2769, %v2778
        %v2781 = vunpack.c.l.s4 1966171168
        %v2782 = vunpack.c.0.s8 %v2781
        %v2783 = vlaneseq
        %v2784 = vshrl.u32 %v2783, 7
        %v2785 = vsub.s32 %v2782, %v2784
        %v2786 = vrot.slane %v2770, %v2785
        %v2788 = vunpack.c.l.s4 1966171168
        %v2789 = vunpack.c.0.s8 %v2788
        %v2790 = vlaneseq
        %v2791 = vshrl.u32 %v2790, 7
        %v2792 = vsub.s32 %v2789, %v2791
        %v2793 = vrot.slane %v2771, %v2792
        %v2795 = vunpack.c.l.s4 1966171168
        %v2796 = vunpack.c.0.s8 %v2795
        %v2797 = vlaneseq
        %v2798 = vshrl.u32 %v2797, 7
        %v2799 = vsub.s32 %v2796, %v2798
        %v2800 = vrot.slane %v2772, %v2799
        %v2801 = vcombine.low %v2779, %v2786
        %v2802 = vcombine.low %v2793, %v2800
        %v2804 = vunpack.c.l.s4 1966171168
        %v2805 = vunpack.c.0.s8 %v2804
        %v2806 = vlaneseq
        %v2807 = vshrl.u32 %v2806, 7
        %v2808 = vsub.s32 %v2805, %v2807
        %v2809 = vrot.slane %v2801, %v2808
        %v2811 = vunpack.c.l.s4 1966171168
        %v2812 = vunpack.c.0.s8 %v2811
        %v2813 = vlaneseq
        %v2814 = vshrl.u32 %v2813, 7
        %v2815 = vsub.s32 %v2812, %v2814
        %v2816 = vrot.slane %v2802, %v2815
        %v2817 = vcombine.low %v2809, %v2816
        %v2818 = vcombine.low %v2631, %v2632
        %v2819 = vcombine.low %v2633, %v2634
        %v2820 = vcombine.low %v2635, %v2636
        %v2821 = vcombine.low %v2637, %v2638
        %v2823 = vunpack.c.l.s4 1966171168
        %v2824 = vunpack.c.0.s8 %v2823
        %v2825 = vlaneseq
        %v2826 = vshrl.u32 %v2825, 7
        %v2827 = vsub.s32 %v2824, %v2826
        %v2828 = vrot.slane %v2818, %v2827
        %v2830 = vunpack.c.l.s4 1966171168
        %v2831 = vunpack.c.0.s8 %v2830
        %v2832 = vlaneseq
        %v2833 = vshrl.u32 %v2832, 7
        %v2834 = vsub.s32 %v2831, %v2833
        %v2835 = vrot.slane %v2819, %v2834
        %v2837 = vunpack.c.l.s4 1966171168
        %v2838 = vunpack.c.0.s8 %v2837
        %v2839 = vlaneseq
        %v2840 = vshrl.u32 %v2839, 7
        %v2841 = vsub.s32 %v2838, %v2840
        %v2842 = vrot.slane %v2820, %v2841
        %v2844 = vunpack.c.l.s4 1966171168
        %v2845 = vunpack.c.0.s8 %v2844
        %v2846 = vlaneseq
        %v2847 = vshrl.u32 %v2846, 7
        %v2848 = vsub.s32 %v2845, %v2847
        %v2849 = vrot.slane %v2821, %v2848
        %v2850 = vcombine.low %v2828, %v2835
        %v2851 = vcombine.low %v2842, %v2849
        %v2853 = vunpack.c.l.s4 1966171168
        %v2854 = vunpack.c.0.s8 %v2853
        %v2855 = vlaneseq
        %v2856 = vshrl.u32 %v2855, 7
        %v2857 = vsub.s32 %v2854, %v2856
        %v2858 = vrot.slane %v2850, %v2857
        %v2860 = vunpack.c.l.s4 1966171168
        %v2861 = vunpack.c.0.s8 %v2860
        %v2862 = vlaneseq
        %v2863 = vshrl.u32 %v2862, 7
        %v2864 = vsub.s32 %v2861, %v2863
        %v2865 = vrot.slane %v2851, %v2864
        %v2866 = vcombine.low %v2858, %v2865
        %v2871 = vlaneseq
        %v2872 = vand.u32 %v2871, 127
        %vm2873 = vcmp.lt.s32.totalorder %v2872, 0
        %v2874 = vsub.s32 0, %v2872
        %v2875 = vsel %vm2873, %v2874, %v2872
        %v2876 = vmul.u32.u64.compose %v2875, 2454267026
        %v2877 = vextract.low.u32 %v2876
        %v2878 = vextract.high.u32 %v2876
        %vm2879 = vc.u32 %v2877, 2454267026
        %v2880 = vsel %vm2879, 1, 0
        %v2881 = vadd.s32 %v2878, %v2880
        %v2882 = vshrl.u32 %v2881, 2
        %v2883 = vmul.u32 %v2882, 7
        %v2884 = vsub.s32 %v2875, %v2883
        %v2885 = vsub.s32 0, %v2884
        %v2886 = vsel %vm2873, %v2885, %v2884
        %vm2887 = vcmp.ne.s32.totalorder %v2886, 0
        %vm2888 = vcmp.lt.s32.totalorder %v2886, 0
        %vm2889 = vmand %vm2888, %vm2887
        %v2890 = vadd.s32 %v2886, 7
        %v2891 = vsel %vm2889, %v2890, %v2886
        %vm2892 = vcmp.ne.s32.totalorder %v2891, 6
        %vm2893 = vcmp.ne.s32.totalorder %v2891, 0
        %vm2894 = vcmp.lt.s32.totalorder %v2872, 49
        %v2895 = vsel %vm2892, 1, 0
        %vm2896 = vcmp.eq.s32.totalorder %v2895, 1
        %v2897 = vsel %vm2896, %v2719, 0.0
        %v2898 = vsel %vm2896, %v2768, 0.0
        %v2899 = vsel %vm2896, %v2817, 0.0
        %v2900 = vsel %vm2896, %v2866, 0.0
        %v2901 = vsel %vm2893, 1, 0
        %vm2902 = vcmp.eq.s32.totalorder %v2901, 1
        %v2903 = vsel %vm2902, %v2719, 0.0
        %v2904 = vsel %vm2902, %v2768, 0.0
        %v2905 = vsel %vm2902, %v2817, 0.0
        %v2906 = vsel %vm2902, %v2866, 0.0
        %2907 = vrot.lane.b32.xlu0 %v2897, 8
        %v2908 = vpop.permute.xlu0 %2907
        %2909 = vrot.lane.b32.xlu0 %v2898, 8
        %v2910 = vpop.permute.xlu0 %2909
        %2911 = vrot.lane.b32.xlu0 %v2899, 8
        %v2912 = vpop.permute.xlu0 %2911
        %2913 = vrot.lane.b32.xlu0 %v2900, 8
        %v2914 = vpop.permute.xlu0 %2913
        %2915 = vrot.lane.b32.xlu0 %v2719, 7
        %v2916 = vpop.permute.xlu0 %2915
        %2917 = vrot.lane.b32.xlu0 %v2768, 7
        %v2918 = vpop.permute.xlu0 %2917
        %2919 = vrot.lane.b32.xlu0 %v2817, 7
        %v2920 = vpop.permute.xlu0 %2919
        %2921 = vrot.lane.b32.xlu0 %v2866, 7
        %v2922 = vpop.permute.xlu0 %2921
        %2923 = vrot.lane.b32.xlu0 %v2903, 6
        %v2924 = vpop.permute.xlu0 %2923
        %2925 = vrot.lane.b32.xlu0 %v2904, 6
        %v2926 = vpop.permute.xlu0 %2925
        %2927 = vrot.lane.b32.xlu0 %v2905, 6
        %v2928 = vpop.permute.xlu0 %2927
        %2929 = vrot.lane.b32.xlu0 %v2906, 6
        %v2930 = vpop.permute.xlu0 %2929
        %2931 = vrot.lane.b32.xlu0 %v2897, 1
        %v2932 = vpop.permute.xlu0 %2931
        %2933 = vrot.lane.b32.xlu0 %v2898, 1
        %v2934 = vpop.permute.xlu0 %2933
        %2935 = vrot.lane.b32.xlu0 %v2899, 1
        %v2936 = vpop.permute.xlu0 %2935
        %2937 = vrot.lane.b32.xlu0 %v2900, 1
        %v2938 = vpop.permute.xlu0 %2937
        %2939 = vrot.lane.b32.xlu0 %v2903, 127
        %v2940 = vpop.permute.xlu0 %2939
        %2941 = vrot.lane.b32.xlu0 %v2904, 127
        %v2942 = vpop.permute.xlu0 %2941
        %2943 = vrot.lane.b32.xlu0 %v2905, 127
        %v2944 = vpop.permute.xlu0 %2943
        %2945 = vrot.lane.b32.xlu0 %v2906, 127
        %v2946 = vpop.permute.xlu0 %2945
        %2947 = vrot.lane.b32.xlu0 %v2897, 122
        %v2948 = vpop.permute.xlu0 %2947
        %2949 = vrot.lane.b32.xlu0 %v2898, 122
        %v2950 = vpop.permute.xlu0 %2949
        %2951 = vrot.lane.b32.xlu0 %v2899, 122
        %v2952 = vpop.permute.xlu0 %2951
        %2953 = vrot.lane.b32.xlu0 %v2900, 122
        %v2954 = vpop.permute.xlu0 %2953
        %2955 = vrot.lane.b32.xlu0 %v2719, 121
        %v2956 = vpop.permute.xlu0 %2955
        %2957 = vrot.lane.b32.xlu0 %v2768, 121
        %v2958 = vpop.permute.xlu0 %2957
        %2959 = vrot.lane.b32.xlu0 %v2817, 121
        %v2960 = vpop.permute.xlu0 %2959
        %2961 = vrot.lane.b32.xlu0 %v2866, 121
        %v2962 = vpop.permute.xlu0 %2961
        %2963 = vrot.lane.b32.xlu0 %v2903, 120
        %v2964 = vpop.permute.xlu0 %2963
        %2965 = vrot.lane.b32.xlu0 %v2904, 120
        %v2966 = vpop.permute.xlu0 %2965
        %2967 = vrot.lane.b32.xlu0 %v2905, 120
        %v2968 = vpop.permute.xlu0 %2967
        %2969 = vrot.lane.b32.xlu0 %v2906, 120
        %v2970 = vpop.permute.xlu0 %2969
        %v2971 = vld [vmem:[%s4] sm:$0xff]
        %v2972 = vld [vmem:[%s4 + $0x8] sm:$0xff]
        %v2973 = vld [vmem:[%s4 + $0x10] sm:$0xff]
        %v2974 = vld [vmem:[%s4 + $0x18] sm:$0xff]
        %v2975 = vld [vmem:[%s4 + $0x20] sm:$0xff]
        %v2976 = vld [vmem:[%s4 + $0x28] sm:$0xff]
        %v2977 = vld [vmem:[%s4 + $0x30] sm:$0xff]
        %v2978 = vld [vmem:[%s4 + $0x38] sm:$0xff]
        %v2979 = vld [vmem:[%s4 + $0x40] sm:$0xff]
        %v2980 = vld [vmem:[%s4 + $0x48] sm:$0xff]
        %v2981 = vld [vmem:[%s4 + $0x50] sm:$0xff]
        %v2982 = vld [vmem:[%s4 + $0x58] sm:$0xff]
        %v2983 = vld [vmem:[%s4 + $0x60] sm:$0xff]
        %v2984 = vld [vmem:[%s4 + $0x68] sm:$0xff]
        %v2985 = vld [vmem:[%s4 + $0x70] sm:$0xff]
        %v2986 = vld [vmem:[%s4 + $0x78] sm:$0xff]
        %v2987 = vld [vmem:[%s4 + $0x80] sm:$0xff]
        %v2988 = vld [vmem:[%s4 + $0x88] sm:$0xff]
        %v2989 = vld [vmem:[%s4 + $0x90] sm:$0xff]
        %v2990 = vld [vmem:[%s4 + $0x98] sm:$0xff]
        %v2991 = vld [vmem:[%s4 + $0xa0] sm:$0xff]
        %v2992 = vld [vmem:[%s4 + $0xa8] sm:$0xff]
        %v2993 = vld [vmem:[%s4 + $0xb0] sm:$0xff]
        %v2994 = vld [vmem:[%s4 + $0xb8] sm:$0xff]
        %v2995 = vld [vmem:[%s4 + $0xc0] sm:$0xff]
        %v2996 = vld [vmem:[%s4 + $0xc8] sm:$0xff]
        %v2997 = vld [vmem:[%s4 + $0xd0] sm:$0xff]
        %v2998 = vld [vmem:[%s4 + $0xd8] sm:$0xff]
        %v2999 = vld [vmem:[%s4 + $0xe0] sm:$0xff]
        %v3000 = vld [vmem:[%s4 + $0xe8] sm:$0xff]
        %v3001 = vld [vmem:[%s4 + $0xf0] sm:$0xff]
        %v3002 = vld [vmem:[%s4 + $0xf8] sm:$0xff]
        %v3003 = vld [vmem:[%s4 + $0x100] sm:$0xff]
        %v3004 = vld [vmem:[%s4 + $0x108] sm:$0xff]
        %v3005 = vld [vmem:[%s4 + $0x110] sm:$0xff]
        %v3006 = vld [vmem:[%s4 + $0x118] sm:$0xff]
        %v3007 = vld [vmem:[%s4 + $0x120] sm:$0xff]
        %v3008 = vld [vmem:[%s4 + $0x128] sm:$0xff]
        %v3009 = vld [vmem:[%s4 + $0x130] sm:$0xff]
        %v3010 = vld [vmem:[%s4 + $0x138] sm:$0xff]
        %v3011 = vld [vmem:[%s4 + $0x140] sm:$0xff]
        %v3012 = vld [vmem:[%s4 + $0x148] sm:$0xff]
        %v3013 = vld [vmem:[%s4 + $0x150] sm:$0xff]
        %v3014 = vld [vmem:[%s4 + $0x158] sm:$0xff]
        %v3015 = vld [vmem:[%s4 + $0x160] sm:$0xff]
        %v3016 = vld [vmem:[%s4 + $0x168] sm:$0xff]
        %v3017 = vld [vmem:[%s4 + $0x170] sm:$0xff]
        %v3018 = vld [vmem:[%s4 + $0x178] sm:$0xff]
        %v3019 = vld [vmem:[%s4 + $0x180] sm:$0xff]
        %v3020 = vld [vmem:[%s4 + $0x188] sm:$0xff]
        %v3021 = vld [vmem:[%s4 + $0x190] sm:$0xff]
        %v3022 = vld [vmem:[%s4 + $0x198] sm:$0xff]
        %v3023 = vld [vmem:[%s4 + $0x1a0] sm:$0xff]
        %v3024 = vld [vmem:[%s4 + $0x1a8] sm:$0xff]
        %v3025 = vld [vmem:[%s4 + $0x1b0] sm:$0xff]
        %v3026 = vld [vmem:[%s4 + $0x1b8] sm:$0xff]
        %v3027 = vld [vmem:[%s4 + $0x1c0] sm:$0xff]
        %v3028 = vld [vmem:[%s4 + $0x1c8] sm:$0xff]
        %v3029 = vld [vmem:[%s4 + $0x1d0] sm:$0xff]
        %v3030 = vld [vmem:[%s4 + $0x1d8] sm:$0xff]
        %v3031 = vld [vmem:[%s4 + $0x1e0] sm:$0xff]
        %v3032 = vld [vmem:[%s4 + $0x1e8] sm:$0xff]
        %v3033 = vld [vmem:[%s4 + $0x1f0] sm:$0xff]
        %v3034 = vld [vmem:[%s4 + $0x1f8] sm:$0xff]
        %v3035 = vld [vmem:[%s4 + $0x200] sm:$0xff]
        %v3036 = vld [vmem:[%s4 + $0x208] sm:$0xff]
        %v3037 = vld [vmem:[%s4 + $0x210] sm:$0xff]
        %v3038 = vld [vmem:[%s4 + $0x218] sm:$0xff]
        %v3039 = vld [vmem:[%s4 + $0x220] sm:$0xff]
        %v3040 = vld [vmem:[%s4 + $0x228] sm:$0xff]
        %v3041 = vld [vmem:[%s4 + $0x230] sm:$0xff]
        %v3042 = vld [vmem:[%s4 + $0x238] sm:$0xff]
        %v3043 = vld [vmem:[%s4 + $0x240] sm:$0xff]
        %v3044 = vld [vmem:[%s4 + $0x248] sm:$0xff]
        %v3045 = vld [vmem:[%s4 + $0x250] sm:$0xff]
        %v3046 = vld [vmem:[%s4 + $0x258] sm:$0xff]
        %v3047 = vld [vmem:[%s4 + $0x260] sm:$0xff]
        %v3048 = vld [vmem:[%s4 + $0x268] sm:$0xff]
        %v3049 = vld [vmem:[%s4 + $0x270] sm:$0xff]
        %v3050 = vld [vmem:[%s4 + $0x278] sm:$0xff]
        %v3051 = vld [vmem:[%s4 + $0x280] sm:$0xff]
        %v3052 = vld [vmem:[%s4 + $0x288] sm:$0xff]
        %v3053 = vld [vmem:[%s4 + $0x290] sm:$0xff]
        %v3054 = vld [vmem:[%s4 + $0x298] sm:$0xff]
        %v3055 = vld [vmem:[%s4 + $0x2a0] sm:$0xff]
        %v3056 = vld [vmem:[%s4 + $0x2a8] sm:$0xff]
        %v3057 = vld [vmem:[%s4 + $0x2b0] sm:$0xff]
        %v3058 = vld [vmem:[%s4 + $0x2b8] sm:$0xff]
        %v3059 = vld [vmem:[%s4 + $0x2c0] sm:$0xff]
        %v3060 = vld [vmem:[%s4 + $0x2c8] sm:$0xff]
        %v3061 = vld [vmem:[%s4 + $0x2d0] sm:$0xff]
        %v3062 = vld [vmem:[%s4 + $0x2d8] sm:$0xff]
        %v3063 = vld [vmem:[%s4 + $0x2e0] sm:$0xff]
        %v3064 = vld [vmem:[%s4 + $0x2e8] sm:$0xff]
        %v3065 = vld [vmem:[%s4 + $0x2f0] sm:$0xff]
        %v3066 = vld [vmem:[%s4 + $0x2f8] sm:$0xff]
        %vm3067 = vcmask 261120
        %v3069 = vsel %vm3067, %v2973, 0
        %v3072 = vsel %vm3067, %v2976, 0
        %v3075 = vsel %vm3067, %v2979, 0
        %v3078 = vsel %vm3067, %v2982, 0
        %v3081 = vsel %vm3067, %v2985, 0
        %v3084 = vsel %vm3067, %v2988, 0
        %v3087 = vsel %vm3067, %v2991, 0
        %v3090 = vsel %vm3067, %v2994, 0
        %v3093 = vsel %vm3067, %v2997, 0
        %v3096 = vsel %vm3067, %v3000, 0
        %v3099 = vsel %vm3067, %v3003, 0
        %v3102 = vsel %vm3067, %v3006, 0
        %v3105 = vsel %vm3067, %v3009, 0
        %v3108 = vsel %vm3067, %v3012, 0
        %v3111 = vsel %vm3067, %v3015, 0
        %v3114 = vsel %vm3067, %v3018, 0
        %v3117 = vsel %vm3067, %v3021, 0
        %v3120 = vsel %vm3067, %v3024, 0
        %v3123 = vsel %vm3067, %v3027, 0
        %v3126 = vsel %vm3067, %v3030, 0
        %v3129 = vsel %vm3067, %v3033, 0
        %v3132 = vsel %vm3067, %v3036, 0
        %v3135 = vsel %vm3067, %v3039, 0
        %v3138 = vsel %vm3067, %v3042, 0
        %v3141 = vsel %vm3067, %v3045, 0
        %v3144 = vsel %vm3067, %v3048, 0
        %v3147 = vsel %vm3067, %v3051, 0
        %v3150 = vsel %vm3067, %v3054, 0
        %v3153 = vsel %vm3067, %v3057, 0
        %v3156 = vsel %vm3067, %v3060, 0
        %v3159 = vsel %vm3067, %v3063, 0
        %v3162 = vsel %vm3067, %v3066, 0
        %3164 = vmatprep.subr.mxu0 0.0
        %3165 = vmatpush1.msra.mxu0 %v2908
        %3166 = vmatprep.subr.mxu0 0.0
        %3167 = vmatpush1.msra.mxu0 %v2910
        %3168 = vmatprep.subr.mxu0 0.0
        %3169 = vmatpush1.msra.mxu0 %v2912
        %3170 = vmatprep.subr.mxu0 0.0
        %3171 = vmatpush1.msra.mxu0 %v2914
        %3172 = vmatprep.subr.mxu0 0.0
        %3173 = vmatpush1.msra.mxu0 %v2916
        %3174 = vmatprep.subr.mxu0 0.0
        %3175 = vmatpush1.msra.mxu0 %v2918
        %3176 = vmatprep.subr.mxu0 0.0
        %3177 = vmatpush1.msra.mxu0 %v2920
        %3178 = vmatprep.subr.mxu0 0.0
        %3179 = vmatpush1.msra.mxu0 %v2922
        %3180 = vmatprep.subr.mxu0 0.0
        %3181 = vmatpush1.msra.mxu0 %v2924
        %3182 = vmatprep.subr.mxu0 0.0
        %3183 = vmatpush1.msra.mxu0 %v2926
        %3184 = vmatprep.subr.mxu0 0.0
        %3185 = vmatpush1.msra.mxu0 %v2928
        %3186 = vmatprep.subr.mxu0 0.0
        %3187 = vmatpush1.msra.mxu0 %v2930
        %3188 = vmatprep.subr.mxu0 0.0
        %3189 = vmatpush1.msra.mxu0 %v2932
        %3190 = vmatprep.subr.mxu0 0.0
        %3191 = vmatpush1.msra.mxu0 %v2934
        %3192 = vmatprep.subr.mxu0 0.0
        %3193 = vmatpush1.msra.mxu0 %v2936
        %3194 = vmatprep.subr.mxu0 0.0
        %3195 = vmatpush1.msra.mxu0 %v2938
        %3196 = vmatprep.subr.mxu0 0.0
        %3197 = vmatpush1.msra.mxu0 %v2719
        %3198 = vmatprep.subr.mxu0 0.0
        %3199 = vmatpush1.msra.mxu0 %v2768
        %3200 = vmatprep.subr.mxu0 0.0
        %3201 = vmatpush1.msra.mxu0 %v2817
        %3202 = vmatprep.subr.mxu0 0.0
        %3203 = vmatpush1.msra.mxu0 %v2866
        %3204 = vmatprep.subr.mxu0 0.0
        %3205 = vmatpush1.msra.mxu0 %v2940
        %3206 = vmatprep.subr.mxu0 0.0
        %3207 = vmatpush1.msra.mxu0 %v2942
        %3208 = vmatprep.subr.mxu0 0.0
        %3209 = vmatpush1.msra.mxu0 %v2944
        %3210 = vmatprep.subr.mxu0 0.0
        %3211 = vmatpush1.msra.mxu0 %v2946
        %3212 = vmatprep.subr.mxu0 0.0
        %3213 = vmatpush1.msra.mxu0 %v2948
        %3214 = vmatprep.subr.mxu0 0.0
        %3215 = vmatpush1.msra.mxu0 %v2950
        %3216 = vmatprep.subr.mxu0 0.0
        %3217 = vmatpush1.msra.mxu0 %v2952
        %3218 = vmatprep.subr.mxu0 0.0
        %3219 = vmatpush1.msra.mxu0 %v2954
        %3220 = vmatprep.subr.mxu0 0.0
        %3221 = vmatpush1.msra.mxu0 %v2956
        %3222 = vmatprep.subr.mxu0 0.0
        %3223 = vmatpush1.msra.mxu0 %v2958
        %3224 = vmatprep.subr.mxu0 0.0
        %3225 = vmatpush1.msra.mxu0 %v2960
        %3226 = vmatprep.subr.mxu0 0.0
        %3227 = vmatpush1.msra.mxu0 %v2962
        %3228 = vmatprep.mubr.f32.mxu0 %v2972
        %3229 = vmatmul.mubr.f32.gmra.mrb[0].mxu0 %v2971
        %v3230 = vpop.f32.mrb[0].mxu0
        %v3231 = vadd.f32 0.0, %v3230
        %v3232 = vpop.f32.mrb[0].mxu0
        %3233 = vmatprep.mubr.f32.mxu0 %v2975
        %3234 = vmatmul.mubr.f32.gmra.mrb[0].mxu0 %v2974
        %v3235 = vpop.f32.mrb[0].mxu0
        %v3236 = vadd.f32 0.0, %v3235
        %v3237 = vpop.f32.mrb[0].mxu0
        %3238 = vmatprep.mubr.f32.mxu0 %v2978
        %3239 = vmatmul.mubr.f32.gmra.mrb[0].mxu0 %v2977
        %v3240 = vpop.f32.mrb[0].mxu0
        %v3241 = vadd.f32 0.0, %v3240
        %v3242 = vpop.f32.mrb[0].mxu0
        %3243 = vmatprep.mubr.f32.mxu0 %v2981
        %3244 = vmatmul.mubr.f32.gmra.mrb[0].mxu0 %v2980
        %v3245 = vpop.f32.mrb[0].mxu0
        %v3246 = vadd.f32 0.0, %v3245
        %v3247 = vpop.f32.mrb[0].mxu0
        %3248 = vmatprep.mubr.f32.mxu0 %v2984
        %3249 = vmatmul.mubr.f32.gmra.mrb[0].mxu0 %v2983
        %v3250 = vpop.f32.mrb[0].mxu0
        %v3251 = vadd.f32 0.0, %v3250
        %v3252 = vpop.f32.mrb[0].mxu0
        %3253 = vmatprep.mubr.f32.mxu0 %v2987
        %3254 = vmatmul.mubr.f32.gmra.mrb[0].mxu0 %v2986
        %v3255 = vpop.f32.mrb[0].mxu0
        %v3256 = vadd.f32 0.0, %v3255
        %v3257 = vpop.f32.mrb[0].mxu0
        %3258 = vmatprep.mubr.f32.mxu0 %v2990
        %3259 = vmatmul.mubr.f32.gmra.mrb[0].mxu0 %v2989
        %v3260 = vpop.f32.mrb[0].mxu0
        %v3261 = vadd.f32 0.0, %v3260
        %v3262 = vpop.f32.mrb[0].mxu0
        %3263 = vmatprep.mubr.f32.mxu0 %v2993
        %3264 = vmatmul.mubr.f32.gmra.mrb[0].mxu0 %v2992
        %v3265 = vpop.f32.mrb[0].mxu0
        %v3266 = vadd.f32 0.0, %v3265
        %v3267 = vpop.f32.mrb[0].mxu0
        %3268 = vmatprep.mubr.f32.mxu0 %v2996
        %3269 = vmatmul.mubr.f32.gmra.mrb[0].mxu0 %v2995
        %v3270 = vpop.f32.mrb[0].mxu0
        %v3271 = vadd.f32 0.0, %v3270
        %v3272 = vpop.f32.mrb[0].mxu0
        %3273 = vmatprep.mubr.f32.mxu0 %v2999
        %3274 = vmatmul.mubr.f32.gmra.mrb[0].mxu0 %v2998
        %v3275 = vpop.f32.mrb[0].mxu0
        %v3276 = vadd.f32 0.0, %v3275
        %v3277 = vpop.f32.mrb[0].mxu0
        %3278 = vmatprep.mubr.f32.mxu0 %v3002
        %3279 = vmatmul.mubr.f32.gmra.mrb[0].mxu0 %v3001
        %v3280 = vpop.f32.mrb[0].mxu0
        %v3281 = vadd.f32 0.0, %v3280
        %v3282 = vpop.f32.mrb[0].mxu0
        %3283 = vmatprep.mubr.f32.mxu0 %v3005
        %3284 = vmatmul.mubr.f32.gmra.mrb[0].mxu0 %v3004
        %v3285 = vpop.f32.mrb[0].mxu0
        %v3286 = vadd.f32 0.0, %v3285
        %v3287 = vpop.f32.mrb[0].mxu0
        %3288 = vmatprep.mubr.f32.mxu0 %v3008
        %3289 = vmatmul.mubr.f32.gmra.mrb[0].mxu0 %v3007
        %v3290 = vpop.f32.mrb[0].mxu0
        %v3291 = vadd.f32 0.0, %v3290
        %v3292 = vpop.f32.mrb[0].mxu0
        %3293 = vmatprep.mubr.f32.mxu0 %v3011
        %3294 = vmatmul.mubr.f32.gmra.mrb[0].mxu0 %v3010
        %v3295 = vpop.f32.mrb[0].mxu0
        %v3296 = vadd.f32 0.0, %v3295
        %v3297 = vpop.f32.mrb[0].mxu0
        %3298 = vmatprep.mubr.f32.mxu0 %v3014
        %3299 = vmatmul.mubr.f32.gmra.mrb[0].mxu0 %v3013
        %v3300 = vpop.f32.mrb[0].mxu0
        %v3301 = vadd.f32 0.0, %v3300
        %v3302 = vpop.f32.mrb[0].mxu0
        %3303 = vmatprep.mubr.f32.mxu0 %v3017
        %3304 = vmatmul.mubr.f32.gmra.mrb[0].mxu0 %v3016
        %v3305 = vpop.f32.mrb[0].mxu0
        %v3306 = vadd.f32 0.0, %v3305
        %v3307 = vpop.f32.mrb[0].mxu0
        %3308 = vmatprep.mubr.f32.mxu0 %v3020
        %3309 = vmatmul.mubr.f32.gmra.mrb[0].mxu0 %v3019
        %v3310 = vpop.f32.mrb[0].mxu0
        %v3311 = vadd.f32 0.0, %v3310
        %v3312 = vpop.f32.mrb[0].mxu0
        %3313 = vmatprep.mubr.f32.mxu0 %v3023
        %3314 = vmatmul.mubr.f32.gmra.mrb[0].mxu0 %v3022
        %v3315 = vpop.f32.mrb[0].mxu0
        %v3316 = vadd.f32 0.0, %v3315
        %v3317 = vpop.f32.mrb[0].mxu0
        %3318 = vmatprep.mubr.f32.mxu0 %v3026
        %3319 = vmatmul.mubr.f32.gmra.mrb[0].mxu0 %v3025
        %v3320 = vpop.f32.mrb[0].mxu0
        %v3321 = vadd.f32 0.0, %v3320
        %v3322 = vpop.f32.mrb[0].mxu0
        %3323 = vmatprep.mubr.f32.mxu0 %v3029
        %3324 = vmatmul.mubr.f32.gmra.mrb[0].mxu0 %v3028
        %v3325 = vpop.f32.mrb[0].mxu0
        %v3326 = vadd.f32 0.0, %v3325
        %v3327 = vpop.f32.mrb[0].mxu0
        %3328 = vmatprep.mubr.f32.mxu0 %v3032
        %3329 = vmatmul.mubr.f32.gmra.mrb[0].mxu0 %v3031
        %v3330 = vpop.f32.mrb[0].mxu0
        %v3331 = vadd.f32 0.0, %v3330
        %v3332 = vpop.f32.mrb[0].mxu0
        %3333 = vmatprep.mubr.f32.mxu0 %v3035
        %3334 = vmatmul.mubr.f32.gmra.mrb[0].mxu0 %v3034
        %v3335 = vpop.f32.mrb[0].mxu0
        %v3336 = vadd.f32 0.0, %v3335
        %v3337 = vpop.f32.mrb[0].mxu0
        %3338 = vmatprep.mubr.f32.mxu0 %v3038
        %3339 = vmatmul.mubr.f32.gmra.mrb[0].mxu0 %v3037
        %v3340 = vpop.f32.mrb[0].mxu0
        %v3341 = vadd.f32 0.0, %v3340
        %v3342 = vpop.f32.mrb[0].mxu0
        %3343 = vmatprep.mubr.f32.mxu0 %v3041
        %3344 = vmatmul.mubr.f32.gmra.mrb[0].mxu0 %v3040
        %v3345 = vpop.f32.mrb[0].mxu0
        %v3346 = vadd.f32 0.0, %v3345
        %v3347 = vpop.f32.mrb[0].mxu0
        %3348 = vmatprep.mubr.f32.mxu0 %v3044
        %3349 = vmatmul.mubr.f32.gmra.mrb[0].mxu0 %v3043
        %v3350 = vpop.f32.mrb[0].mxu0
        %v3351 = vadd.f32 0.0, %v3350
        %v3352 = vpop.f32.mrb[0].mxu0
        %3353 = vmatprep.mubr.f32.mxu0 %v3047
        %3354 = vmatmul.mubr.f32.gmra.mrb[0].mxu0 %v3046
        %v3355 = vpop.f32.mrb[0].mxu0
        %v3356 = vadd.f32 0.0, %v3355
        %v3357 = vpop.f32.mrb[0].mxu0
        %3358 = vmatprep.mubr.f32.mxu0 %v3050
        %3359 = vmatmul.mubr.f32.gmra.mrb[0].mxu0 %v3049
        %v3360 = vpop.f32.mrb[0].mxu0
        %v3361 = vadd.f32 0.0, %v3360
        %v3362 = vpop.f32.mrb[0].mxu0
        %3363 = vmatprep.mubr.f32.mxu0 %v3053
        %3364 = vmatmul.mubr.f32.gmra.mrb[0].mxu0 %v3052
        %v3365 = vpop.f32.mrb[0].mxu0
        %v3366 = vadd.f32 0.0, %v3365
        %v3367 = vpop.f32.mrb[0].mxu0
        %3368 = vmatprep.mubr.f32.mxu0 %v3056
        %3369 = vmatmul.mubr.f32.gmra.mrb[0].mxu0 %v3055
        %v3370 = vpop.f32.mrb[0].mxu0
        %v3371 = vadd.f32 0.0, %v3370
        %v3372 = vpop.f32.mrb[0].mxu0
        %3373 = vmatprep.mubr.f32.mxu0 %v3059
        %3374 = vmatmul.mubr.f32.gmra.mrb[0].mxu0 %v3058
        %v3375 = vpop.f32.mrb[0].mxu0
        %v3376 = vadd.f32 0.0, %v3375
        %v3377 = vpop.f32.mrb[0].mxu0
        %3378 = vmatprep.mubr.f32.mxu0 %v3062
        %3379 = vmatmul.mubr.f32.gmra.mrb[0].mxu0 %v3061
        %v3380 = vpop.f32.mrb[0].mxu0
        %v3381 = vadd.f32 0.0, %v3380
        %v3382 = vpop.f32.mrb[0].mxu0
        %3383 = vmatprep.mubr.f32.mxu0 %v3065
        %3384 = vmatmul.mubr.f32.gmra.mrb[0].mxu0 %v3064
        %v3385 = vpop.f32.mrb[0].mxu0
        %v3386 = vadd.f32 0.0, %v3385
        %v3387 = vpop.f32.mrb[0].mxu0
        %3388 = vdwg.mxu0
        %3389 = vmatprep.subr.mxu0 0.0
        %3390 = vmatpush1.msra.mxu0 %v2964
        %3391 = vmatprep.subr.mxu0 0.0
        %3392 = vmatpush1.msra.mxu0 %v2966
        %3393 = vmatprep.subr.mxu0 0.0
        %3394 = vmatpush1.msra.mxu0 %v2968
        %3395 = vmatprep.subr.mxu0 0.0
        %3396 = vmatpush1.msra.mxu0 %v2970
        %3397 = vmatprep.subr.mxu0 0.0
        %3398 = vmatpush1.msra.mxu0 0.0
        %3399 = vmatprep.subr.mxu0 0.0
        %3400 = vmatpush1.msra.mxu0 0.0
        %3401 = vmatprep.subr.mxu0 0.0
        %3402 = vmatpush1.msra.mxu0 0.0
        %3403 = vmatprep.subr.mxu0 0.0
        %3404 = vmatpush1.msra.mxu0 0.0
        %3405 = vmatprep.subr.mxu0 0.0
        %3406 = vmatpush1.msra.mxu0 0.0
        %3407 = vmatprep.subr.mxu0 0.0
        %3408 = vmatpush1.msra.mxu0 0.0
        %3409 = vmatprep.subr.mxu0 0.0
        %3410 = vmatpush1.msra.mxu0 0.0
        %3411 = vmatprep.subr.mxu0 0.0
        %3412 = vmatpush1.msra.mxu0 0.0
        %3413 = vmatprep.subr.mxu0 0.0
        %3414 = vmatpush1.msra.mxu0 0.0
        %3415 = vmatprep.subr.mxu0 0.0
        %3416 = vmatpush1.msra.mxu0 0.0
        %3417 = vmatprep.subr.mxu0 0.0
        %3418 = vmatpush1.msra.mxu0 0.0
        %3419 = vmatprep.subr.mxu0 0.0
        %3420 = vmatpush1.msra.mxu0 0.0
        %3421 = vmatprep.subr.mxu0 0.0
        %3422 = vmatpush1.msra.mxu0 0.0
        %3423 = vmatprep.subr.mxu0 0.0
        %3424 = vmatpush1.msra.mxu0 0.0
        %3425 = vmatprep.subr.mxu0 0.0
        %3426 = vmatpush1.msra.mxu0 0.0
        %3427 = vmatprep.subr.mxu0 0.0
        %3428 = vmatpush1.msra.mxu0 0.0
        %3429 = vmatprep.subr.mxu0 0.0
        %3430 = vmatpush1.msra.mxu0 0.0
        %3431 = vmatprep.subr.mxu0 0.0
        %3432 = vmatpush1.msra.mxu0 0.0
        %3433 = vmatprep.subr.mxu0 0.0
        %3434 = vmatpush1.msra.mxu0 0.0
        %3435 = vmatprep.subr.mxu0 0.0
        %3436 = vmatpush1.msra.mxu0 0.0
        %3437 = vmatprep.subr.mxu0 0.0
        %3438 = vmatpush1.msra.mxu0 0.0
        %3439 = vmatprep.subr.mxu0 0.0
        %3440 = vmatpush1.msra.mxu0 0.0
        %3441 = vmatprep.subr.mxu0 0.0
        %3442 = vmatpush1.msra.mxu0 0.0
        %3443 = vmatprep.subr.mxu0 0.0
        %3444 = vmatpush1.msra.mxu0 0.0
        %3445 = vmatprep.subr.mxu0 0.0
        %3446 = vmatpush1.msra.mxu0 0.0
        %3447 = vmatprep.subr.mxu0 0.0
        %3448 = vmatpush1.msra.mxu0 0.0
        %3449 = vmatprep.subr.mxu0 0.0
        %3450 = vmatpush1.msra.mxu0 0.0
        %3451 = vmatprep.subr.mxu0 0.0
        %3452 = vmatpush1.msra.mxu0 0.0
        %3453 = vmatprep.mubr.f32.mxu0 0.0
        %3454 = vmatmul.mubr.f32.gmra.mrb[0].mxu0 %v3069
        %v3455 = vpop.f32.mrb[0].mxu0
        %v3456 = vadd.f32 %v3231, %v3455
        %v3457 = vpop.f32.mrb[0].mxu0
        %3458 = vmatprep.mubr.f32.mxu0 0.0
        %3459 = vmatmul.mubr.f32.gmra.mrb[0].mxu0 %v3072
        %v3460 = vpop.f32.mrb[0].mxu0
        %v3461 = vadd.f32 %v3236, %v3460
        %v3462 = vpop.f32.mrb[0].mxu0
        %3463 = vmatprep.mubr.f32.mxu0 0.0
        %3464 = vmatmul.mubr.f32.gmra.mrb[0].mxu0 %v3075
        %v3465 = vpop.f32.mrb[0].mxu0
        %v3466 = vadd.f32 %v3241, %v3465
        %v3467 = vpop.f32.mrb[0].mxu0
        %3468 = vmatprep.mubr.f32.mxu0 0.0
        %3469 = vmatmul.mubr.f32.gmra.mrb[0].mxu0 %v3078
        %v3470 = vpop.f32.mrb[0].mxu0
        %v3471 = vadd.f32 %v3246, %v3470
        %v3472 = vpop.f32.mrb[0].mxu0
        %3473 = vmatprep.mubr.f32.mxu0 0.0
        %3474 = vmatmul.mubr.f32.gmra.mrb[0].mxu0 %v3081
        %v3475 = vpop.f32.mrb[0].mxu0
        %v3476 = vadd.f32 %v3251, %v3475
        %v3477 = vpop.f32.mrb[0].mxu0
        %3478 = vmatprep.mubr.f32.mxu0 0.0
        %3479 = vmatmul.mubr.f32.gmra.mrb[0].mxu0 %v3084
        %v3480 = vpop.f32.mrb[0].mxu0
        %v3481 = vadd.f32 %v3256, %v3480
        %v3482 = vpop.f32.mrb[0].mxu0
        %3483 = vmatprep.mubr.f32.mxu0 0.0
        %3484 = vmatmul.mubr.f32.gmra.mrb[0].mxu0 %v3087
        %v3485 = vpop.f32.mrb[0].mxu0
        %v3486 = vadd.f32 %v3261, %v3485
        %v3487 = vpop.f32.mrb[0].mxu0
        %3488 = vmatprep.mubr.f32.mxu0 0.0
        %3489 = vmatmul.mubr.f32.gmra.mrb[0].mxu0 %v3090
        %v3490 = vpop.f32.mrb[0].mxu0
        %v3491 = vadd.f32 %v3266, %v3490
        %v3492 = vpop.f32.mrb[0].mxu0
        %3493 = vmatprep.mubr.f32.mxu0 0.0
        %3494 = vmatmul.mubr.f32.gmra.mrb[0].mxu0 %v3093
        %v3495 = vpop.f32.mrb[0].mxu0
        %v3496 = vadd.f32 %v3271, %v3495
        %v3497 = vpop.f32.mrb[0].mxu0
        %3498 = vmatprep.mubr.f32.mxu0 0.0
        %3499 = vmatmul.mubr.f32.gmra.mrb[0].mxu0 %v3096
        %v3500 = vpop.f32.mrb[0].mxu0
        %v3501 = vadd.f32 %v3276, %v3500
        %v3502 = vpop.f32.mrb[0].mxu0
        %3503 = vmatprep.mubr.f32.mxu0 0.0
        %3504 = vmatmul.mubr.f32.gmra.mrb[0].mxu0 %v3099
        %v3505 = vpop.f32.mrb[0].mxu0
        %v3506 = vadd.f32 %v3281, %v3505
        %v3507 = vpop.f32.mrb[0].mxu0
        %3508 = vmatprep.mubr.f32.mxu0 0.0
        %3509 = vmatmul.mubr.f32.gmra.mrb[0].mxu0 %v3102
        %v3510 = vpop.f32.mrb[0].mxu0
        %v3511 = vadd.f32 %v3286, %v3510
        %v3512 = vpop.f32.mrb[0].mxu0
        %3513 = vmatprep.mubr.f32.mxu0 0.0
        %3514 = vmatmul.mubr.f32.gmra.mrb[0].mxu0 %v3105
        %v3515 = vpop.f32.mrb[0].mxu0
        %v3516 = vadd.f32 %v3291, %v3515
        %v3517 = vpop.f32.mrb[0].mxu0
        %3518 = vmatprep.mubr.f32.mxu0 0.0
        %3519 = vmatmul.mubr.f32.gmra.mrb[0].mxu0 %v3108
        %v3520 = vpop.f32.mrb[0].mxu0
        %v3521 = vadd.f32 %v3296, %v3520
        %v3522 = vpop.f32.mrb[0].mxu0
        %3523 = vmatprep.mubr.f32.mxu0 0.0
        %3524 = vmatmul.mubr.f32.gmra.mrb[0].mxu0 %v3111
        %v3525 = vpop.f32.mrb[0].mxu0
        %v3526 = vadd.f32 %v3301, %v3525
        %v3527 = vpop.f32.mrb[0].mxu0
        %3528 = vmatprep.mubr.f32.mxu0 0.0
        %3529 = vmatmul.mubr.f32.gmra.mrb[0].mxu0 %v3114
        %v3530 = vpop.f32.mrb[0].mxu0
        %v3531 = vadd.f32 %v3306, %v3530
        %v3532 = vpop.f32.mrb[0].mxu0
        %3533 = vmatprep.mubr.f32.mxu0 0.0
        %3534 = vmatmul.mubr.f32.gmra.mrb[0].mxu0 %v3117
        %v3535 = vpop.f32.mrb[0].mxu0
        %v3536 = vadd.f32 %v3311, %v3535
        %v3537 = vpop.f32.mrb[0].mxu0
        %3538 = vmatprep.mubr.f32.mxu0 0.0
        %3539 = vmatmul.mubr.f32.gmra.mrb[0].mxu0 %v3120
        %v3540 = vpop.f32.mrb[0].mxu0
        %v3541 = vadd.f32 %v3316, %v3540
        %v3542 = vpop.f32.mrb[0].mxu0
        %3543 = vmatprep.mubr.f32.mxu0 0.0
        %3544 = vmatmul.mubr.f32.gmra.mrb[0].mxu0 %v3123
        %v3545 = vpop.f32.mrb[0].mxu0
        %v3546 = vadd.f32 %v3321, %v3545
        %v3547 = vpop.f32.mrb[0].mxu0
        %3548 = vmatprep.mubr.f32.mxu0 0.0
        %3549 = vmatmul.mubr.f32.gmra.mrb[0].mxu0 %v3126
        %v3550 = vpop.f32.mrb[0].mxu0
        %v3551 = vadd.f32 %v3326, %v3550
        %v3552 = vpop.f32.mrb[0].mxu0
        %3553 = vmatprep.mubr.f32.mxu0 0.0
        %3554 = vmatmul.mubr.f32.gmra.mrb[0].mxu0 %v3129
        %v3555 = vpop.f32.mrb[0].mxu0
        %v3556 = vadd.f32 %v3331, %v3555
        %v3557 = vpop.f32.mrb[0].mxu0
        %3558 = vmatprep.mubr.f32.mxu0 0.0
        %3559 = vmatmul.mubr.f32.gmra.mrb[0].mxu0 %v3132
        %v3560 = vpop.f32.mrb[0].mxu0
        %v3561 = vadd.f32 %v3336, %v3560
        %v3562 = vpop.f32.mrb[0].mxu0
        %3563 = vmatprep.mubr.f32.mxu0 0.0
        %3564 = vmatmul.mubr.f32.gmra.mrb[0].mxu0 %v3135
        %v3565 = vpop.f32.mrb[0].mxu0
        %v3566 = vadd.f32 %v3341, %v3565
        %v3567 = vpop.f32.mrb[0].mxu0
        %3568 = vmatprep.mubr.f32.mxu0 0.0
        %3569 = vmatmul.mubr.f32.gmra.mrb[0].mxu0 %v3138
        %v3570 = vpop.f32.mrb[0].mxu0
        %v3571 = vadd.f32 %v3346, %v3570
        %v3572 = vpop.f32.mrb[0].mxu0
        %3573 = vmatprep.mubr.f32.mxu0 0.0
        %3574 = vmatmul.mubr.f32.gmra.mrb[0].mxu0 %v3141
        %v3575 = vpop.f32.mrb[0].mxu0
        %v3576 = vadd.f32 %v3351, %v3575
        %v3577 = vpop.f32.mrb[0].mxu0
        %3578 = vmatprep.mubr.f32.mxu0 0.0
        %3579 = vmatmul.mubr.f32.gmra.mrb[0].mxu0 %v3144
        %v3580 = vpop.f32.mrb[0].mxu0
        %v3581 = vadd.f32 %v3356, %v3580
        %v3582 = vpop.f32.mrb[0].mxu0
        %3583 = vmatprep.mubr.f32.mxu0 0.0
        %3584 = vmatmul.mubr.f32.gmra.mrb[0].mxu0 %v3147
        %v3585 = vpop.f32.mrb[0].mxu0
        %v3586 = vadd.f32 %v3361, %v3585
        %v3587 = vpop.f32.mrb[0].mxu0
        %3588 = vmatprep.mubr.f32.mxu0 0.0
        %3589 = vmatmul.mubr.f32.gmra.mrb[0].mxu0 %v3150
        %v3590 = vpop.f32.mrb[0].mxu0
        %v3591 = vadd.f32 %v3366, %v3590
        %v3592 = vpop.f32.mrb[0].mxu0
        %3593 = vmatprep.mubr.f32.mxu0 0.0
        %3594 = vmatmul.mubr.f32.gmra.mrb[0].mxu0 %v3153
        %v3595 = vpop.f32.mrb[0].mxu0
        %v3596 = vadd.f32 %v3371, %v3595
        %v3597 = vpop.f32.mrb[0].mxu0
        %3598 = vmatprep.mubr.f32.mxu0 0.0
        %3599 = vmatmul.mubr.f32.gmra.mrb[0].mxu0 %v3156
        %v3600 = vpop.f32.mrb[0].mxu0
        %v3601 = vadd.f32 %v3376, %v3600
        %v3602 = vpop.f32.mrb[0].mxu0
        %3603 = vmatprep.mubr.f32.mxu0 0.0
        %3604 = vmatmul.mubr.f32.gmra.mrb[0].mxu0 %v3159
        %v3605 = vpop.f32.mrb[0].mxu0
        %v3606 = vadd.f32 %v3381, %v3605
        %v3607 = vpop.f32.mrb[0].mxu0
        %3608 = vmatprep.mubr.f32.mxu0 0.0
        %3609 = vmatmul.mubr.f32.gmra.mrb[0].mxu0 %v3162
        %v3610 = vpop.f32.mrb[0].mxu0
        %v3611 = vadd.f32 %v3386, %v3610
        %v3612 = vpop.f32.mrb[0].mxu0
        %3613 = vdwg.mxu0
        %v3614 = vmax.f32 %v3456, 0.0
        %v3615 = vmax.f32 %v3461, 0.0
        %v3616 = vmax.f32 %v3466, 0.0
        %v3617 = vmax.f32 %v3471, 0.0
        %v3618 = vmax.f32 %v3476, 0.0
        %v3619 = vmax.f32 %v3481, 0.0
        %v3620 = vmax.f32 %v3486, 0.0
        %v3621 = vmax.f32 %v3491, 0.0
        %v3622 = vmax.f32 %v3496, 0.0
        %v3623 = vmax.f32 %v3501, 0.0
        %v3624 = vmax.f32 %v3506, 0.0
        %v3625 = vmax.f32 %v3511, 0.0
        %v3626 = vmax.f32 %v3516, 0.0
        %v3627 = vmax.f32 %v3521, 0.0
        %v3628 = vmax.f32 %v3526, 0.0
        %v3629 = vmax.f32 %v3531, 0.0
        %v3630 = vmax.f32 %v3536, 0.0
        %v3631 = vmax.f32 %v3541, 0.0
        %v3632 = vmax.f32 %v3546, 0.0
        %v3633 = vmax.f32 %v3551, 0.0
        %v3634 = vmax.f32 %v3556, 0.0
        %v3635 = vmax.f32 %v3561, 0.0
        %v3636 = vmax.f32 %v3566, 0.0
        %v3637 = vmax.f32 %v3571, 0.0
        %v3638 = vmax.f32 %v3576, 0.0
        %v3639 = vmax.f32 %v3581, 0.0
        %v3640 = vmax.f32 %v3586, 0.0
        %v3641 = vmax.f32 %v3591, 0.0
        %v3642 = vmax.f32 %v3596, 0.0
        %v3643 = vmax.f32 %v3601, 0.0
        %v3644 = vmax.f32 %v3606, 0.0
        %v3645 = vmax.f32 %v3611, 0.0
        %v3646 = vsel %vm2894, 1, 0
        %vm3647 = vcmp.eq.s32.totalorder %v3646, 1
        %v3648 = vsel %vm3647, %v3614, 0.0
        %v3649 = vsel %vm3647, %v3615, 0.0
        %v3650 = vsel %vm3647, %v3616, 0.0
        %v3651 = vsel %vm3647, %v3617, 0.0
        %v3652 = vsel %vm3647, %v3618, 0.0
        %v3653 = vsel %vm3647, %v3619, 0.0
        %v3654 = vsel %vm3647, %v3620, 0.0
        %v3655 = vsel %vm3647, %v3621, 0.0
        %v3656 = vsel %vm3647, %v3622, 0.0
        %v3657 = vsel %vm3647, %v3623, 0.0
        %v3658 = vsel %vm3647, %v3624, 0.0
        %v3659 = vsel %vm3647, %v3625, 0.0
        %v3660 = vsel %vm3647, %v3626, 0.0
        %v3661 = vsel %vm3647, %v3627, 0.0
        %v3662 = vsel %vm3647, %v3628, 0.0
        %v3663 = vsel %vm3647, %v3629, 0.0
        %v3664 = vsel %vm3647, %v3630, 0.0
        %v3665 = vsel %vm3647, %v3631, 0.0
        %v3666 = vsel %vm3647, %v3632, 0.0
        %v3667 = vsel %vm3647, %v3633, 0.0
        %v3668 = vsel %vm3647, %v3634, 0.0
        %v3669 = vsel %vm3647, %v3635, 0.0
        %v3670 = vsel %vm3647, %v3636, 0.0
        %v3671 = vsel %vm3647, %v3637, 0.0
        %v3672 = vsel %vm3647, %v3638, 0.0
        %v3673 = vsel %vm3647, %v3639, 0.0
        %v3674 = vsel %vm3647, %v3640, 0.0
        %v3675 = vsel %vm3647, %v3641, 0.0
        %v3676 = vsel %vm3647, %v3642, 0.0
        %v3677 = vsel %vm3647, %v3643, 0.0
        %v3678 = vsel %vm3647, %v3644, 0.0
        %v3679 = vsel %vm3647, %v3645, 0.0
        %v3680 = vsel %vm2896, %v3648, 0.0
        %v3681 = vsel %vm2896, %v3649, 0.0
        %v3682 = vsel %vm2896, %v3650, 0.0
        %v3683 = vsel %vm2896, %v3651, 0.0
        %v3684 = vsel %vm2896, %v3652, 0.0
        %v3685 = vsel %vm2896, %v3653, 0.0
        %v3686 = vsel %vm2896, %v3654, 0.0
        %v3687 = vsel %vm2896, %v3655, 0.0
        %v3688 = vsel %vm2896, %v3656, 0.0
        %v3689 = vsel %vm2896, %v3657, 0.0
        %v3690 = vsel %vm2896, %v3658, 0.0
        %v3691 = vsel %vm2896, %v3659, 0.0
        %v3692 = vsel %vm2896, %v3660, 0.0
        %v3693 = vsel %vm2896, %v3661, 0.0
        %v3694 = vsel %vm2896, %v3662, 0.0
        %v3695 = vsel %vm2896, %v3663, 0.0
        %v3696 = vsel %vm2896, %v3664, 0.0
        %v3697 = vsel %vm2896, %v3665, 0.0
        %v3698 = vsel %vm2896, %v3666, 0.0
        %v3699 = vsel %vm2896, %v3667, 0.0
        %v3700 = vsel %vm2896, %v3668, 0.0
        %v3701 = vsel %vm2896, %v3669, 0.0
        %v3702 = vsel %vm2896, %v3670, 0.0
        %v3703 = vsel %vm2896, %v3671, 0.0
        %v3704 = vsel %vm2896, %v3672, 0.0
        %v3705 = vsel %vm2896, %v3673, 0.0
        %v3706 = vsel %vm2896, %v3674, 0.0
        %v3707 = vsel %vm2896, %v3675, 0.0
        %v3708 = vsel %vm2896, %v3676, 0.0
        %v3709 = vsel %vm2896, %v3677, 0.0
        %v3710 = vsel %vm2896, %v3678, 0.0
        %v3711 = vsel %vm2896, %v3679, 0.0
        %v3712 = vsel %vm2902, %v3648, 0.0
        %v3713 = vsel %vm2902, %v3649, 0.0
        %v3714 = vsel %vm2902, %v3650, 0.0
        %v3715 = vsel %vm2902, %v3651, 0.0
        %v3716 = vsel %vm2902, %v3652, 0.0
        %v3717 = vsel %vm2902, %v3653, 0.0
        %v3718 = vsel %vm2902, %v3654, 0.0
        %v3719 = vsel %vm2902, %v3655, 0.0
        %v3720 = vsel %vm2902, %v3656, 0.0
        %v3721 = vsel %vm2902, %v3657, 0.0
        %v3722 = vsel %vm2902, %v3658, 0.0
        %v3723 = vsel %vm2902, %v3659, 0.0
        %v3724 = vsel %vm2902, %v3660, 0.0
        %v3725 = vsel %vm2902, %v3661, 0.0
        %v3726 = vsel %vm2902, %v3662, 0.0
        %v3727 = vsel %vm2902, %v3663, 0.0
        %v3728 = vsel %vm2902, %v3664, 0.0
        %v3729 = vsel %vm2902, %v3665, 0.0
        %v3730 = vsel %vm2902, %v3666, 0.0
        %v3731 = vsel %vm2902, %v3667, 0.0
        %v3732 = vsel %vm2902, %v3668, 0.0
        %v3733 = vsel %vm2902, %v3669, 0.0
        %v3734 = vsel %vm2902, %v3670, 0.0
        %v3735 = vsel %vm2902, %v3671, 0.0
        %v3736 = vsel %vm2902, %v3672, 0.0
        %v3737 = vsel %vm2902, %v3673, 0.0
        %v3738 = vsel %vm2902, %v3674, 0.0
        %v3739 = vsel %vm2902, %v3675, 0.0
        %v3740 = vsel %vm2902, %v3676, 0.0
        %v3741 = vsel %vm2902, %v3677, 0.0
        %v3742 = vsel %vm2902, %v3678, 0.0
        %v3743 = vsel %vm2902, %v3679, 0.0
        %3744 = vrot.lane.b32.xlu0 %v3680, 8
        %v3745 = vpop.permute.xlu0 %3744
        %3746 = vrot.lane.b32.xlu0 %v3681, 8
        %v3747 = vpop.permute.xlu0 %3746
        %3748 = vrot.lane.b32.xlu0 %v3682, 8
        %v3749 = vpop.permute.xlu0 %3748
        %3750 = vrot.lane.b32.xlu0 %v3683, 8
        %v3751 = vpop.permute.xlu0 %3750
        %3752 = vrot.lane.b32.xlu0 %v3684, 8
        %v3753 = vpop.permute.xlu0 %3752
        %3754 = vrot.lane.b32.xlu0 %v3685, 8
        %v3755 = vpop.permute.xlu0 %3754
        %3756 = vrot.lane.b32.xlu0 %v3686, 8
        %v3757 = vpop.permute.xlu0 %3756
        %3758 = vrot.lane.b32.xlu0 %v3687, 8
        %v3759 = vpop.permute.xlu0 %3758
        %3760 = vrot.lane.b32.xlu0 %v3688, 8
        %v3761 = vpop.permute.xlu0 %3760
        %3762 = vrot.lane.b32.xlu0 %v3689, 8
        %v3763 = vpop.permute.xlu0 %3762
        %3764 = vrot.lane.b32.xlu0 %v3690, 8
        %v3765 = vpop.permute.xlu0 %3764
        %3766 = vrot.lane.b32.xlu0 %v3691, 8
        %v3767 = vpop.permute.xlu0 %3766
        %3768 = vrot.lane.b32.xlu0 %v3692, 8
        %v3769 = vpop.permute.xlu0 %3768
        %3770 = vrot.lane.b32.xlu0 %v3693, 8
        %v3771 = vpop.permute.xlu0 %3770
        %3772 = vrot.lane.b32.xlu0 %v3694, 8
        %v3773 = vpop.permute.xlu0 %3772
        %3774 = vrot.lane.b32.xlu0 %v3695, 8
        %v3775 = vpop.permute.xlu0 %3774
        %3776 = vrot.lane.b32.xlu0 %v3696, 8
        %v3777 = vpop.permute.xlu0 %3776
        %3778 = vrot.lane.b32.xlu0 %v3697, 8
        %v3779 = vpop.permute.xlu0 %3778
        %3780 = vrot.lane.b32.xlu0 %v3698, 8
        %v3781 = vpop.permute.xlu0 %3780
        %3782 = vrot.lane.b32.xlu0 %v3699, 8
        %v3783 = vpop.permute.xlu0 %3782
        %3784 = vrot.lane.b32.xlu0 %v3700, 8
        %v3785 = vpop.permute.xlu0 %3784
        %3786 = vrot.lane.b32.xlu0 %v3701, 8
        %v3787 = vpop.permute.xlu0 %3786
        %3788 = vrot.lane.b32.xlu0 %v3702, 8
        %v3789 = vpop.permute.xlu0 %3788
        %3790 = vrot.lane.b32.xlu0 %v3703, 8
        %v3791 = vpop.permute.xlu0 %3790
        %3792 = vrot.lane.b32.xlu0 %v3704, 8
        %v3793 = vpop.permute.xlu0 %3792
        %3794 = vrot.lane.b32.xlu0 %v3705, 8
        %v3795 = vpop.permute.xlu0 %3794
        %3796 = vrot.lane.b32.xlu0 %v3706, 8
        %v3797 = vpop.permute.xlu0 %3796
        %3798 = vrot.lane.b32.xlu0 %v3707, 8
        %v3799 = vpop.permute.xlu0 %3798
        %3800 = vrot.lane.b32.xlu0 %v3708, 8
        %v3801 = vpop.permute.xlu0 %3800
        %3802 = vrot.lane.b32.xlu0 %v3709, 8
        %v3803 = vpop.permute.xlu0 %3802
        %3804 = vrot.lane.b32.xlu0 %v3710, 8
        %v3805 = vpop.permute.xlu0 %3804
        %3806 = vrot.lane.b32.xlu0 %v3711, 8
        %v3807 = vpop.permute.xlu0 %3806
        %3808 = vrot.lane.b32.xlu0 %v3648, 7
        %v3809 = vpop.permute.xlu0 %3808
        %3810 = vrot.lane.b32.xlu0 %v3649, 7
        %v3811 = vpop.permute.xlu0 %3810
        %3812 = vrot.lane.b32.xlu0 %v3650, 7
        %v3813 = vpop.permute.xlu0 %3812
        %3814 = vrot.lane.b32.xlu0 %v3651, 7
        %v3815 = vpop.permute.xlu0 %3814
        %3816 = vrot.lane.b32.xlu0 %v3652, 7
        %v3817 = vpop.permute.xlu0 %3816
        %3818 = vrot.lane.b32.xlu0 %v3653, 7
        %v3819 = vpop.permute.xlu0 %3818
        %3820 = vrot.lane.b32.xlu0 %v3654, 7
        %v3821 = vpop.permute.xlu0 %3820
        %3822 = vrot.lane.b32.xlu0 %v3655, 7
        %v3823 = vpop.permute.xlu0 %3822
        %3824 = vrot.lane.b32.xlu0 %v3656, 7
        %v3825 = vpop.permute.xlu0 %3824
        %3826 = vrot.lane.b32.xlu0 %v3657, 7
        %v3827 = vpop.permute.xlu0 %3826
        %3828 = vrot.lane.b32.xlu0 %v3658, 7
        %v3829 = vpop.permute.xlu0 %3828
        %3830 = vrot.lane.b32.xlu0 %v3659, 7
        %v3831 = vpop.permute.xlu0 %3830
        %3832 = vrot.lane.b32.xlu0 %v3660, 7
        %v3833 = vpop.permute.xlu0 %3832
        %3834 = vrot.lane.b32.xlu0 %v3661, 7
        %v3835 = vpop.permute.xlu0 %3834
        %3836 = vrot.lane.b32.xlu0 %v3662, 7
        %v3837 = vpop.permute.xlu0 %3836
        %3838 = vrot.lane.b32.xlu0 %v3663, 7
        %v3839 = vpop.permute.xlu0 %3838
        %3840 = vrot.lane.b32.xlu0 %v3664, 7
        %v3841 = vpop.permute.xlu0 %3840
        %3842 = vrot.lane.b32.xlu0 %v3665, 7
        %v3843 = vpop.permute.xlu0 %3842
        %3844 = vrot.lane.b32.xlu0 %v3666, 7
        %v3845 = vpop.permute.xlu0 %3844
        %3846 = vrot.lane.b32.xlu0 %v3667, 7
        %v3847 = vpop.permute.xlu0 %3846
        %3848 = vrot.lane.b32.xlu0 %v3668, 7
        %v3849 = vpop.permute.xlu0 %3848
        %3850 = vrot.lane.b32.xlu0 %v3669, 7
        %v3851 = vpop.permute.xlu0 %3850
        %3852 = vrot.lane.b32.xlu0 %v3670, 7
        %v3853 = vpop.permute.xlu0 %3852
        %3854 = vrot.lane.b32.xlu0 %v3671, 7
        %v3855 = vpop.permute.xlu0 %3854
        %3856 = vrot.lane.b32.xlu0 %v3672, 7
        %v3857 = vpop.permute.xlu0 %3856
        %3858 = vrot.lane.b32.xlu0 %v3673, 7
        %v3859 = vpop.permute.xlu0 %3858
        %3860 = vrot.lane.b32.xlu0 %v3674, 7
        %v3861 = vpop.permute.xlu0 %3860
        %3862 = vrot.lane.b32.xlu0 %v3675, 7
        %v3863 = vpop.permute.xlu0 %3862
        %3864 = vrot.lane.b32.xlu0 %v3676, 7
        %v3865 = vpop.permute.xlu0 %3864
        %3866 = vrot.lane.b32.xlu0 %v3677, 7
        %v3867 = vpop.permute.xlu0 %3866
        %3868 = vrot.lane.b32.xlu0 %v3678, 7
        %v3869 = vpop.permute.xlu0 %3868
        %3870 = vrot.lane.b32.xlu0 %v3679, 7
        %v3871 = vpop.permute.xlu0 %3870
        %3872 = vrot.lane.b32.xlu0 %v3712, 6
        %v3873 = vpop.permute.xlu0 %3872
        %3874 = vrot.lane.b32.xlu0 %v3713, 6
        %v3875 = vpop.permute.xlu0 %3874
        %3876 = vrot.lane.b32.xlu0 %v3714, 6
        %v3877 = vpop.permute.xlu0 %3876
        %3878 = vrot.lane.b32.xlu0 %v3715, 6
        %v3879 = vpop.permute.xlu0 %3878
        %3880 = vrot.lane.b32.xlu0 %v3716, 6
        %v3881 = vpop.permute.xlu0 %3880
        %3882 = vrot.lane.b32.xlu0 %v3717, 6
        %v3883 = vpop.permute.xlu0 %3882
        %3884 = vrot.lane.b32.xlu0 %v3718, 6
        %v3885 = vpop.permute.xlu0 %3884
        %3886 = vrot.lane.b32.xlu0 %v3719, 6
        %v3887 = vpop.permute.xlu0 %3886
        %3888 = vrot.lane.b32.xlu0 %v3720, 6
        %v3889 = vpop.permute.xlu0 %3888
        %3890 = vrot.lane.b32.xlu0 %v3721, 6
        %v3891 = vpop.permute.xlu0 %3890
        %3892 = vrot.lane.b32.xlu0 %v3722, 6
        %v3893 = vpop.permute.xlu0 %3892
        %3894 = vrot.lane.b32.xlu0 %v3723, 6
        %v3895 = vpop.permute.xlu0 %3894
        %3896 = vrot.lane.b32.xlu0 %v3724, 6
        %v3897 = vpop.permute.xlu0 %3896
        %3898 = vrot.lane.b32.xlu0 %v3725, 6
        %v3899 = vpop.permute.xlu0 %3898
        %3900 = vrot.lane.b32.xlu0 %v3726, 6
        %v3901 = vpop.permute.xlu0 %3900
        %3902 = vrot.lane.b32.xlu0 %v3727, 6
        %v3903 = vpop.permute.xlu0 %3902
        %3904 = vrot.lane.b32.xlu0 %v3728, 6
        %v3905 = vpop.permute.xlu0 %3904
        %3906 = vrot.lane.b32.xlu0 %v3729, 6
        %v3907 = vpop.permute.xlu0 %3906
        %3908 = vrot.lane.b32.xlu0 %v3730, 6
        %v3909 = vpop.permute.xlu0 %3908
        %3910 = vrot.lane.b32.xlu0 %v3731, 6
        %v3911 = vpop.permute.xlu0 %3910
        %3912 = vrot.lane.b32.xlu0 %v3732, 6
        %v3913 = vpop.permute.xlu0 %3912
        %3914 = vrot.lane.b32.xlu0 %v3733, 6
        %v3915 = vpop.permute.xlu0 %3914
        %3916 = vrot.lane.b32.xlu0 %v3734, 6
        %v3917 = vpop.permute.xlu0 %3916
        %3918 = vrot.lane.b32.xlu0 %v3735, 6
        %v3919 = vpop.permute.xlu0 %3918
        %3920 = vrot.lane.b32.xlu0 %v3736, 6
        %v3921 = vpop.permute.xlu0 %3920
        %3922 = vrot.lane.b32.xlu0 %v3737, 6
        %v3923 = vpop.permute.xlu0 %3922
        %3924 = vrot.lane.b32.xlu0 %v3738, 6
        %v3925 = vpop.permute.xlu0 %3924
        %3926 = vrot.lane.b32.xlu0 %v3739, 6
        %v3927 = vpop.permute.xlu0 %3926
        %3928 = vrot.lane.b32.xlu0 %v3740, 6
        %v3929 = vpop.permute.xlu0 %3928
        %3930 = vrot.lane.b32.xlu0 %v3741, 6
        %v3931 = vpop.permute.xlu0 %3930
        %3932 = vrot.lane.b32.xlu0 %v3742, 6
        %v3933 = vpop.permute.xlu0 %3932
        %3934 = vrot.lane.b32.xlu0 %v3743, 6
        %v3935 = vpop.permute.xlu0 %3934
        %3936 = vrot.lane.b32.xlu0 %v3680, 1
        %v3937 = vpop.permute.xlu0 %3936
        %3938 = vrot.lane.b32.xlu0 %v3681, 1
        %v3939 = vpop.permute.xlu0 %3938
        %3940 = vrot.lane.b32.xlu0 %v3682, 1
        %v3941 = vpop.permute.xlu0 %3940
        %3942 = vrot.lane.b32.xlu0 %v3683, 1
        %v3943 = vpop.permute.xlu0 %3942
        %3944 = vrot.lane.b32.xlu0 %v3684, 1
        %v3945 = vpop.permute.xlu0 %3944
        %3946 = vrot.lane.b32.xlu0 %v3685, 1
        %v3947 = vpop.permute.xlu0 %3946
        %3948 = vrot.lane.b32.xlu0 %v3686, 1
        %v3949 = vpop.permute.xlu0 %3948
        %3950 = vrot.lane.b32.xlu0 %v3687, 1
        %v3951 = vpop.permute.xlu0 %3950
        %3952 = vrot.lane.b32.xlu0 %v3688, 1
        %v3953 = vpop.permute.xlu0 %3952
        %3954 = vrot.lane.b32.xlu0 %v3689, 1
        %v3955 = vpop.permute.xlu0 %3954
        %3956 = vrot.lane.b32.xlu0 %v3690, 1
        %v3957 = vpop.permute.xlu0 %3956
        %3958 = vrot.lane.b32.xlu0 %v3691, 1
        %v3959 = vpop.permute.xlu0 %3958
        %3960 = vrot.lane.b32.xlu0 %v3692, 1
        %v3961 = vpop.permute.xlu0 %3960
        %3962 = vrot.lane.b32.xlu0 %v3693, 1
        %v3963 = vpop.permute.xlu0 %3962
        %3964 = vrot.lane.b32.xlu0 %v3694, 1
        %v3965 = vpop.permute.xlu0 %3964
        %3966 = vrot.lane.b32.xlu0 %v3695, 1
        %v3967 = vpop.permute.xlu0 %3966
        %3968 = vrot.lane.b32.xlu0 %v3696, 1
        %v3969 = vpop.permute.xlu0 %3968
        %3970 = vrot.lane.b32.xlu0 %v3697, 1
        %v3971 = vpop.permute.xlu0 %3970
        %3972 = vrot.lane.b32.xlu0 %v3698, 1
        %v3973 = vpop.permute.xlu0 %3972
        %3974 = vrot.lane.b32.xlu0 %v3699, 1
        %v3975 = vpop.permute.xlu0 %3974
        %3976 = vrot.lane.b32.xlu0 %v3700, 1
        %v3977 = vpop.permute.xlu0 %3976
        %3978 = vrot.lane.b32.xlu0 %v3701, 1
        %v3979 = vpop.permute.xlu0 %3978
        %3980 = vrot.lane.b32.xlu0 %v3702, 1
        %v3981 = vpop.permute.xlu0 %3980
        %3982 = vrot.lane.b32.xlu0 %v3703, 1
        %v3983 = vpop.permute.xlu0 %3982
        %3984 = vrot.lane.b32.xlu0 %v3704, 1
        %v3985 = vpop.permute.xlu0 %3984
        %3986 = vrot.lane.b32.xlu0 %v3705, 1
        %v3987 = vpop.permute.xlu0 %3986
        %3988 = vrot.lane.b32.xlu0 %v3706, 1
        %v3989 = vpop.permute.xlu0 %3988
        %3990 = vrot.lane.b32.xlu0 %v3707, 1
        %v3991 = vpop.permute.xlu0 %3990
        %3992 = vrot.lane.b32.xlu0 %v3708, 1
        %v3993 = vpop.permute.xlu0 %3992
        %3994 = vrot.lane.b32.xlu0 %v3709, 1
        %v3995 = vpop.permute.xlu0 %3994
        %3996 = vrot.lane.b32.xlu0 %v3710, 1
        %v3997 = vpop.permute.xlu0 %3996
        %3998 = vrot.lane.b32.xlu0 %v3711, 1
        %v3999 = vpop.permute.xlu0 %3998
        %4000 = vrot.lane.b32.xlu0 %v3712, 127
        %v4001 = vpop.permute.xlu0 %4000
        %4002 = vrot.lane.b32.xlu0 %v3713, 127
        %v4003 = vpop.permute.xlu0 %4002
        %4004 = vrot.lane.b32.xlu0 %v3714, 127
        %v4005 = vpop.permute.xlu0 %4004
        %4006 = vrot.lane.b32.xlu0 %v3715, 127
        %v4007 = vpop.permute.xlu0 %4006
        %4008 = vrot.lane.b32.xlu0 %v3716, 127
        %v4009 = vpop.permute.xlu0 %4008
        %4010 = vrot.lane.b32.xlu0 %v3717, 127
        %v4011 = vpop.permute.xlu0 %4010
        %4012 = vrot.lane.b32.xlu0 %v3718, 127
        %v4013 = vpop.permute.xlu0 %4012
        %4014 = vrot.lane.b32.xlu0 %v3719, 127
        %v4015 = vpop.permute.xlu0 %4014
        %4016 = vrot.lane.b32.xlu0 %v3720, 127
        %v4017 = vpop.permute.xlu0 %4016
        %4018 = vrot.lane.b32.xlu0 %v3721, 127
        %v4019 = vpop.permute.xlu0 %4018
        %4020 = vrot.lane.b32.xlu0 %v3722, 127
        %v4021 = vpop.permute.xlu0 %4020
        %4022 = vrot.lane.b32.xlu0 %v3723, 127
        %v4023 = vpop.permute.xlu0 %4022
        %4024 = vrot.lane.b32.xlu0 %v3724, 127
        %v4025 = vpop.permute.xlu0 %4024
        %4026 = vrot.lane.b32.xlu0 %v3725, 127
        %v4027 = vpop.permute.xlu0 %4026
        %4028 = vrot.lane.b32.xlu0 %v3726, 127
        %v4029 = vpop.permute.xlu0 %4028
        %4030 = vrot.lane.b32.xlu0 %v3727, 127
        %v4031 = vpop.permute.xlu0 %4030
        %4032 = vrot.lane.b32.xlu0 %v3728, 127
        %v4033 = vpop.permute.xlu0 %4032
        %4034 = vrot.lane.b32.xlu0 %v3729, 127
        %v4035 = vpop.permute.xlu0 %4034
        %4036 = vrot.lane.b32.xlu0 %v3730, 127
        %v4037 = vpop.permute.xlu0 %4036
        %4038 = vrot.lane.b32.xlu0 %v3731, 127
        %v4039 = vpop.permute.xlu0 %4038
        %4040 = vrot.lane.b32.xlu0 %v3732, 127
        %v4041 = vpop.permute.xlu0 %4040
        %4042 = vrot.lane.b32.xlu0 %v3733, 127
        %v4043 = vpop.permute.xlu0 %4042
        %4044 = vrot.lane.b32.xlu0 %v3734, 127
        %v4045 = vpop.permute.xlu0 %4044
        %4046 = vrot.lane.b32.xlu0 %v3735, 127
        %v4047 = vpop.permute.xlu0 %4046
        %4048 = vrot.lane.b32.xlu0 %v3736, 127
        %v4049 = vpop.permute.xlu0 %4048
        %4050 = vrot.lane.b32.xlu0 %v3737, 127
        %v4051 = vpop.permute.xlu0 %4050
        %4052 = vrot.lane.b32.xlu0 %v3738, 127
        %v4053 = vpop.permute.xlu0 %4052
        %4054 = vrot.lane.b32.xlu0 %v3739, 127
        %v4055 = vpop.permute.xlu0 %4054
        %4056 = vrot.lane.b32.xlu0 %v3740, 127
        %v4057 = vpop.permute.xlu0 %4056
        %4058 = vrot.lane.b32.xlu0 %v3741, 127
        %v4059 = vpop.permute.xlu0 %4058
        %4060 = vrot.lane.b32.xlu0 %v3742, 127
        %v4061 = vpop.permute.xlu0 %4060
        %4062 = vrot.lane.b32.xlu0 %v3743, 127
        %v4063 = vpop.permute.xlu0 %4062
        %4064 = vrot.lane.b32.xlu0 %v3680, 122
        %v4065 = vpop.permute.xlu0 %4064
        %4066 = vrot.lane.b32.xlu0 %v3681, 122
        %v4067 = vpop.permute.xlu0 %4066
        %4068 = vrot.lane.b32.xlu0 %v3682, 122
        %v4069 = vpop.permute.xlu0 %4068
        %4070 = vrot.lane.b32.xlu0 %v3683, 122
        %v4071 = vpop.permute.xlu0 %4070
        %4072 = vrot.lane.b32.xlu0 %v3684, 122
        %v4073 = vpop.permute.xlu0 %4072
        %4074 = vrot.lane.b32.xlu0 %v3685, 122
        %v4075 = vpop.permute.xlu0 %4074
        %4076 = vrot.lane.b32.xlu0 %v3686, 122
        %v4077 = vpop.permute.xlu0 %4076
        %4078 = vrot.lane.b32.xlu0 %v3687, 122
        %v4079 = vpop.permute.xlu0 %4078
        %4080 = vrot.lane.b32.xlu0 %v3688, 122
        %v4081 = vpop.permute.xlu0 %4080
        %4082 = vrot.lane.b32.xlu0 %v3689, 122
        %v4083 = vpop.permute.xlu0 %4082
        %4084 = vrot.lane.b32.xlu0 %v3690, 122
        %v4085 = vpop.permute.xlu0 %4084
        %4086 = vrot.lane.b32.xlu0 %v3691, 122
        %v4087 = vpop.permute.xlu0 %4086
        %4088 = vrot.lane.b32.xlu0 %v3692, 122
        %v4089 = vpop.permute.xlu0 %4088
        %4090 = vrot.lane.b32.xlu0 %v3693, 122
        %v4091 = vpop.permute.xlu0 %4090
        %4092 = vrot.lane.b32.xlu0 %v3694, 122
        %v4093 = vpop.permute.xlu0 %4092
        %4094 = vrot.lane.b32.xlu0 %v3695, 122
        %v4095 = vpop.permute.xlu0 %4094
        %4096 = vrot.lane.b32.xlu0 %v3696, 122
        %v4097 = vpop.permute.xlu0 %4096
        %4098 = vrot.lane.b32.xlu0 %v3697, 122
        %v4099 = vpop.permute.xlu0 %4098
        %4100 = vrot.lane.b32.xlu0 %v3698, 122
        %v4101 = vpop.permute.xlu0 %4100
        %4102 = vrot.lane.b32.xlu0 %v3699, 122
        %v4103 = vpop.permute.xlu0 %4102
        %4104 = vrot.lane.b32.xlu0 %v3700, 122
        %v4105 = vpop.permute.xlu0 %4104
        %4106 = vrot.lane.b32.xlu0 %v3701, 122
        %v4107 = vpop.permute.xlu0 %4106
        %4108 = vrot.lane.b32.xlu0 %v3702, 122
        %v4109 = vpop.permute.xlu0 %4108
        %4110 = vrot.lane.b32.xlu0 %v3703, 122
        %v4111 = vpop.permute.xlu0 %4110
        %4112 = vrot.lane.b32.xlu0 %v3704, 122
        %v4113 = vpop.permute.xlu0 %4112
        %4114 = vrot.lane.b32.xlu0 %v3705, 122
        %v4115 = vpop.permute.xlu0 %4114
        %4116 = vrot.lane.b32.xlu0 %v3706, 122
        %v4117 = vpop.permute.xlu0 %4116
        %4118 = vrot.lane.b32.xlu0 %v3707, 122
        %v4119 = vpop.permute.xlu0 %4118
        %4120 = vrot.lane.b32.xlu0 %v3708, 122
        %v4121 = vpop.permute.xlu0 %4120
        %4122 = vrot.lane.b32.xlu0 %v3709, 122
        %v4123 = vpop.permute.xlu0 %4122
        %4124 = vrot.lane.b32.xlu0 %v3710, 122
        %v4125 = vpop.permute.xlu0 %4124
        %4126 = vrot.lane.b32.xlu0 %v3711, 122
        %v4127 = vpop.permute.xlu0 %4126
        %4128 = vrot.lane.b32.xlu0 %v3648, 121
        %v4129 = vpop.permute.xlu0 %4128
        %4130 = vrot.lane.b32.xlu0 %v3649, 121
        %v4131 = vpop.permute.xlu0 %4130
        %4132 = vrot.lane.b32.xlu0 %v3650, 121
        %v4133 = vpop.permute.xlu0 %4132
        %4134 = vrot.lane.b32.xlu0 %v3651, 121
        %v4135 = vpop.permute.xlu0 %4134
        %4136 = vrot.lane.b32.xlu0 %v3652, 121
        %v4137 = vpop.permute.xlu0 %4136
        %4138 = vrot.lane.b32.xlu0 %v3653, 121
        %v4139 = vpop.permute.xlu0 %4138
        %4140 = vrot.lane.b32.xlu0 %v3654, 121
        %v4141 = vpop.permute.xlu0 %4140
        %4142 = vrot.lane.b32.xlu0 %v3655, 121
        %v4143 = vpop.permute.xlu0 %4142
        %4144 = vrot.lane.b32.xlu0 %v3656, 121
        %v4145 = vpop.permute.xlu0 %4144
        %4146 = vrot.lane.b32.xlu0 %v3657, 121
        %v4147 = vpop.permute.xlu0 %4146
        %4148 = vrot.lane.b32.xlu0 %v3658, 121
        %v4149 = vpop.permute.xlu0 %4148
        %4150 = vrot.lane.b32.xlu0 %v3659, 121
        %v4151 = vpop.permute.xlu0 %4150
        %4152 = vrot.lane.b32.xlu0 %v3660, 121
        %v4153 = vpop.permute.xlu0 %4152
        %4154 = vrot.lane.b32.xlu0 %v3661, 121
        %v4155 = vpop.permute.xlu0 %4154
        %4156 = vrot.lane.b32.xlu0 %v3662, 121
        %v4157 = vpop.permute.xlu0 %4156
        %4158 = vrot.lane.b32.xlu0 %v3663, 121
        %v4159 = vpop.permute.xlu0 %4158
        %4160 = vrot.lane.b32.xlu0 %v3664, 121
        %v4161 = vpop.permute.xlu0 %4160
        %4162 = vrot.lane.b32.xlu0 %v3665, 121
        %v4163 = vpop.permute.xlu0 %4162
        %4164 = vrot.lane.b32.xlu0 %v3666, 121
        %v4165 = vpop.permute.xlu0 %4164
        %4166 = vrot.lane.b32.xlu0 %v3667, 121
        %v4167 = vpop.permute.xlu0 %4166
        %4168 = vrot.lane.b32.xlu0 %v3668, 121
        %v4169 = vpop.permute.xlu0 %4168
        %4170 = vrot.lane.b32.xlu0 %v3669, 121
        %v4171 = vpop.permute.xlu0 %4170
        %4172 = vrot.lane.b32.xlu0 %v3670, 121
        %v4173 = vpop.permute.xlu0 %4172
        %4174 = vrot.lane.b32.xlu0 %v3671, 121
        %v4175 = vpop.permute.xlu0 %4174
        %4176 = vrot.lane.b32.xlu0 %v3672, 121
        %v4177 = vpop.permute.xlu0 %4176
        %4178 = vrot.lane.b32.xlu0 %v3673, 121
        %v4179 = vpop.permute.xlu0 %4178
        %4180 = vrot.lane.b32.xlu0 %v3674, 121
        %v4181 = vpop.permute.xlu0 %4180
        %4182 = vrot.lane.b32.xlu0 %v3675, 121
        %v4183 = vpop.permute.xlu0 %4182
        %4184 = vrot.lane.b32.xlu0 %v3676, 121
        %v4185 = vpop.permute.xlu0 %4184
        %4186 = vrot.lane.b32.xlu0 %v3677, 121
        %v4187 = vpop.permute.xlu0 %4186
        %4188 = vrot.lane.b32.xlu0 %v3678, 121
        %v4189 = vpop.permute.xlu0 %4188
        %4190 = vrot.lane.b32.xlu0 %v3679, 121
        %v4191 = vpop.permute.xlu0 %4190
        %4192 = vrot.lane.b32.xlu0 %v3712, 120
        %v4193 = vpop.permute.xlu0 %4192
        %4194 = vrot.lane.b32.xlu0 %v3713, 120
        %v4195 = vpop.permute.xlu0 %4194
        %4196 = vrot.lane.b32.xlu0 %v3714, 120
        %v4197 = vpop.permute.xlu0 %4196
        %4198 = vrot.lane.b32.xlu0 %v3715, 120
        %v4199 = vpop.permute.xlu0 %4198
        %4200 = vrot.lane.b32.xlu0 %v3716, 120
        %v4201 = vpop.permute.xlu0 %4200
        %4202 = vrot.lane.b32.xlu0 %v3717, 120
        %v4203 = vpop.permute.xlu0 %4202
        %4204 = vrot.lane.b32.xlu0 %v3718, 120
        %v4205 = vpop.permute.xlu0 %4204
        %4206 = vrot.lane.b32.xlu0 %v3719, 120
        %v4207 = vpop.permute.xlu0 %4206
        %4208 = vrot.lane.b32.xlu0 %v3720, 120
        %v4209 = vpop.permute.xlu0 %4208
        %4210 = vrot.lane.b32.xlu0 %v3721, 120
        %v4211 = vpop.permute.xlu0 %4210
        %4212 = vrot.lane.b32.xlu0 %v3722, 120
        %v4213 = vpop.permute.xlu0 %4212
        %4214 = vrot.lane.b32.xlu0 %v3723, 120
        %v4215 = vpop.permute.xlu0 %4214
        %4216 = vrot.lane.b32.xlu0 %v3724, 120
        %v4217 = vpop.permute.xlu0 %4216
        %4218 = vrot.lane.b32.xlu0 %v3725, 120
        %v4219 = vpop.permute.xlu0 %4218
        %4220 = vrot.lane.b32.xlu0 %v3726, 120
        %v4221 = vpop.permute.xlu0 %4220
        %4222 = vrot.lane.b32.xlu0 %v3727, 120
        %v4223 = vpop.permute.xlu0 %4222
        %4224 = vrot.lane.b32.xlu0 %v3728, 120
        %v4225 = vpop.permute.xlu0 %4224
        %4226 = vrot.lane.b32.xlu0 %v3729, 120
        %v4227 = vpop.permute.xlu0 %4226
        %4228 = vrot.lane.b32.xlu0 %v3730, 120
        %v4229 = vpop.permute.xlu0 %4228
        %4230 = vrot.lane.b32.xlu0 %v3731, 120
        %v4231 = vpop.permute.xlu0 %4230
        %4232 = vrot.lane.b32.xlu0 %v3732, 120
        %v4233 = vpop.permute.xlu0 %4232
        %4234 = vrot.lane.b32.xlu0 %v3733, 120
        %v4235 = vpop.permute.xlu0 %4234
        %4236 = vrot.lane.b32.xlu0 %v3734, 120
        %v4237 = vpop.permute.xlu0 %4236
        %4238 = vrot.lane.b32.xlu0 %v3735, 120
        %v4239 = vpop.permute.xlu0 %4238
        %4240 = vrot.lane.b32.xlu0 %v3736, 120
        %v4241 = vpop.permute.xlu0 %4240
        %4242 = vrot.lane.b32.xlu0 %v3737, 120
        %v4243 = vpop.permute.xlu0 %4242
        %4244 = vrot.lane.b32.xlu0 %v3738, 120
        %v4245 = vpop.permute.xlu0 %4244
        %4246 = vrot.lane.b32.xlu0 %v3739, 120
        %v4247 = vpop.permute.xlu0 %4246
        %4248 = vrot.lane.b32.xlu0 %v3740, 120
        %v4249 = vpop.permute.xlu0 %4248
        %4250 = vrot.lane.b32.xlu0 %v3741, 120
        %v4251 = vpop.permute.xlu0 %4250
        %4252 = vrot.lane.b32.xlu0 %v3742, 120
        %v4253 = vpop.permute.xlu0 %4252
        %4254 = vrot.lane.b32.xlu0 %v3743, 120
        %v4255 = vpop.permute.xlu0 %4254
        %v4256 = vld [vmem:[#allocation6] sm:$0xff]
        %v4257 = vld [vmem:[#allocation6 + $0x8] sm:$0xff]
        %v4258 = vld [vmem:[#allocation6 + $0x10] sm:$0xff]
        %v4259 = vld [vmem:[#allocation6 + $0x18] sm:$0xff]
        %v4260 = vld [vmem:[#allocation6 + $0x20] sm:$0xff]
        %v4261 = vld [vmem:[#allocation6 + $0x28] sm:$0xff]
        %v4262 = vld [vmem:[#allocation6 + $0x30] sm:$0xff]
        %v4263 = vld [vmem:[#allocation6 + $0x38] sm:$0xff]
        %v4264 = vld [vmem:[#allocation6 + $0x40] sm:$0xff]
        %v4265 = vld [vmem:[#allocation6 + $0x48] sm:$0xff]
        %v4266 = vld [vmem:[#allocation6 + $0x50] sm:$0xff]
        %v4267 = vld [vmem:[#allocation6 + $0x58] sm:$0xff]
        %v4268 = vld [vmem:[#allocation6 + $0x60] sm:$0xff]
        %v4269 = vld [vmem:[#allocation6 + $0x68] sm:$0xff]
        %v4270 = vld [vmem:[#allocation6 + $0x70] sm:$0xff]
        %v4271 = vld [vmem:[#allocation6 + $0x78] sm:$0xff]
        %v4272 = vld [vmem:[#allocation6 + $0x80] sm:$0xff]
        %v4273 = vld [vmem:[#allocation6 + $0x88] sm:$0xff]
        %v4274 = vld [vmem:[#allocation6 + $0x90] sm:$0xff]
        %v4275 = vld [vmem:[#allocation6 + $0x98] sm:$0xff]
        %v4276 = vld [vmem:[#allocation6 + $0xa0] sm:$0xff]
        %v4277 = vld [vmem:[#allocation6 + $0xa8] sm:$0xff]
        %v4278 = vld [vmem:[#allocation6 + $0xb0] sm:$0xff]
        %v4279 = vld [vmem:[#allocation6 + $0xb8] sm:$0xff]
        %v4280 = vld [vmem:[#allocation6 + $0xc0] sm:$0xff]
        %v4281 = vld [vmem:[#allocation6 + $0xc8] sm:$0xff]
        %v4282 = vld [vmem:[#allocation6 + $0xd0] sm:$0xff]
        %v4283 = vld [vmem:[#allocation6 + $0xd8] sm:$0xff]
        %v4284 = vld [vmem:[#allocation6 + $0xe0] sm:$0xff]
        %v4285 = vld [vmem:[#allocation6 + $0xe8] sm:$0xff]
        %v4286 = vld [vmem:[#allocation6 + $0xf0] sm:$0xff]
        %v4287 = vld [vmem:[#allocation6 + $0xf8] sm:$0xff]
        %v4288 = vld [vmem:[#allocation6 + $0x100] sm:$0xff]
        %v4289 = vld [vmem:[#allocation6 + $0x108] sm:$0xff]
        %v4290 = vld [vmem:[#allocation6 + $0x110] sm:$0xff]
        %v4291 = vld [vmem:[#allocation6 + $0x118] sm:$0xff]
        %4292 = vmatprep.subr.mxu0 0.0
        %4293 = vmatpush1.msra.mxu0 %v3745
        %4294 = vmatprep.subr.mxu0 0.0
        %4295 = vmatpush1.msra.mxu0 %v3747
        %4296 = vmatprep.subr.mxu0 0.0
        %4297 = vmatpush1.msra.mxu0 %v3749
        %4298 = vmatprep.subr.mxu0 0.0
        %4299 = vmatpush1.msra.mxu0 %v3751
        %4300 = vmatprep.subr.mxu0 0.0
        %4301 = vmatpush1.msra.mxu0 %v3753
        %4302 = vmatprep.subr.mxu0 0.0
        %4303 = vmatpush1.msra.mxu0 %v3755
        %4304 = vmatprep.subr.mxu0 0.0
        %4305 = vmatpush1.msra.mxu0 %v3757
        %4306 = vmatprep.subr.mxu0 0.0
        %4307 = vmatpush1.msra.mxu0 %v3759
        %4308 = vmatprep.subr.mxu0 0.0
        %4309 = vmatpush1.msra.mxu0 %v3761
        %4310 = vmatprep.subr.mxu0 0.0
        %4311 = vmatpush1.msra.mxu0 %v3763
        %4312 = vmatprep.subr.mxu0 0.0
        %4313 = vmatpush1.msra.mxu0 %v3765
        %4314 = vmatprep.subr.mxu0 0.0
        %4315 = vmatpush1.msra.mxu0 %v3767
        %4316 = vmatprep.subr.mxu0 0.0
        %4317 = vmatpush1.msra.mxu0 %v3769
        %4318 = vmatprep.subr.mxu0 0.0
        %4319 = vmatpush1.msra.mxu0 %v3771
        %4320 = vmatprep.subr.mxu0 0.0
        %4321 = vmatpush1.msra.mxu0 %v3773
        %4322 = vmatprep.subr.mxu0 0.0
        %4323 = vmatpush1.msra.mxu0 %v3775
        %4324 = vmatprep.subr.mxu0 0.0
        %4325 = vmatpush1.msra.mxu0 %v3777
        %4326 = vmatprep.subr.mxu0 0.0
        %4327 = vmatpush1.msra.mxu0 %v3779
        %4328 = vmatprep.subr.mxu0 0.0
        %4329 = vmatpush1.msra.mxu0 %v3781
        %4330 = vmatprep.subr.mxu0 0.0
        %4331 = vmatpush1.msra.mxu0 %v3783
        %4332 = vmatprep.subr.mxu0 0.0
        %4333 = vmatpush1.msra.mxu0 %v3785
        %4334 = vmatprep.subr.mxu0 0.0
        %4335 = vmatpush1.msra.mxu0 %v3787
        %4336 = vmatprep.subr.mxu0 0.0
        %4337 = vmatpush1.msra.mxu0 %v3789
        %4338 = vmatprep.subr.mxu0 0.0
        %4339 = vmatpush1.msra.mxu0 %v3791
        %4340 = vmatprep.subr.mxu0 0.0
        %4341 = vmatpush1.msra.mxu0 %v3793
        %4342 = vmatprep.subr.mxu0 0.0
        %4343 = vmatpush1.msra.mxu0 %v3795
        %4344 = vmatprep.subr.mxu0 0.0
        %4345 = vmatpush1.msra.mxu0 %v3797
        %4346 = vmatprep.subr.mxu0 0.0
        %4347 = vmatpush1.msra.mxu0 %v3799
        %4348 = vmatprep.subr.mxu0 0.0
        %4349 = vmatpush1.msra.mxu0 %v3801
        %4350 = vmatprep.subr.mxu0 0.0
        %4351 = vmatpush1.msra.mxu0 %v3803
        %4352 = vmatprep.subr.mxu0 0.0
        %4353 = vmatpush1.msra.mxu0 %v3805
        %4354 = vmatprep.subr.mxu0 0.0
        %4355 = vmatpush1.msra.mxu0 %v3807
        %4356 = vmatprep.mubr.f32.mxu0 %v4257
        %4357 = vmatmul.mubr.f32.gmra.mrb[0].mxu0 %v4256
        %v4358 = vpop.f32.mrb[0].mxu0
        %v4359 = vadd.f32 0.0, %v4358
        %v4360 = vpop.f32.mrb[0].mxu0
        %4361 = vmatprep.mubr.f32.mxu0 %v4275
        %4362 = vmatmul.mubr.f32.gmra.mrb[0].mxu0 %v4274
        %v4363 = vpop.f32.mrb[0].mxu0
        %v4364 = vadd.f32 0.0, %v4363
        %v4365 = vpop.f32.mrb[0].mxu0
        %4366 = vdwg.mxu0
        %4367 = vmatprep.subr.mxu0 0.0
        %4368 = vmatpush1.msra.mxu0 %v3809
        %4369 = vmatprep.subr.mxu0 0.0
        %4370 = vmatpush1.msra.mxu0 %v3811
        %4371 = vmatprep.subr.mxu0 0.0
        %4372 = vmatpush1.msra.mxu0 %v3813
        %4373 = vmatprep.subr.mxu0 0.0
        %4374 = vmatpush1.msra.mxu0 %v3815
        %4375 = vmatprep.subr.mxu0 0.0
        %4376 = vmatpush1.msra.mxu0 %v3817
        %4377 = vmatprep.subr.mxu0 0.0
        %4378 = vmatpush1.msra.mxu0 %v3819
        %4379 = vmatprep.subr.mxu0 0.0
        %4380 = vmatpush1.msra.mxu0 %v3821
        %4381 = vmatprep.subr.mxu0 0.0
        %4382 = vmatpush1.msra.mxu0 %v3823
        %4383 = vmatprep.subr.mxu0 0.0
        %4384 = vmatpush1.msra.mxu0 %v3825
        %4385 = vmatprep.subr.mxu0 0.0
        %4386 = vmatpush1.msra.mxu0 %v3827
        %4387 = vmatprep.subr.mxu0 0.0
        %4388 = vmatpush1.msra.mxu0 %v3829
        %4389 = vmatprep.subr.mxu0 0.0
        %4390 = vmatpush1.msra.mxu0 %v3831
        %4391 = vmatprep.subr.mxu0 0.0
        %4392 = vmatpush1.msra.mxu0 %v3833
        %4393 = vmatprep.subr.mxu0 0.0
        %4394 = vmatpush1.msra.mxu0 %v3835
        %4395 = vmatprep.subr.mxu0 0.0
        %4396 = vmatpush1.msra.mxu0 %v3837
        %4397 = vmatprep.subr.mxu0 0.0
        %4398 = vmatpush1.msra.mxu0 %v3839
        %4399 = vmatprep.subr.mxu0 0.0
        %4400 = vmatpush1.msra.mxu0 %v3841
        %4401 = vmatprep.subr.mxu0 0.0
        %4402 = vmatpush1.msra.mxu0 %v3843
        %4403 = vmatprep.subr.mxu0 0.0
        %4404 = vmatpush1.msra.mxu0 %v3845
        %4405 = vmatprep.subr.mxu0 0.0
        %4406 = vmatpush1.msra.mxu0 %v3847
        %4407 = vmatprep.subr.mxu0 0.0
        %4408 = vmatpush1.msra.mxu0 %v3849
        %4409 = vmatprep.subr.mxu0 0.0
        %4410 = vmatpush1.msra.mxu0 %v3851
        %4411 = vmatprep.subr.mxu0 0.0
        %4412 = vmatpush1.msra.mxu0 %v3853
        %4413 = vmatprep.subr.mxu0 0.0
        %4414 = vmatpush1.msra.mxu0 %v3855
        %4415 = vmatprep.subr.mxu0 0.0
        %4416 = vmatpush1.msra.mxu0 %v3857
        %4417 = vmatprep.subr.mxu0 0.0
        %4418 = vmatpush1.msra.mxu0 %v3859
        %4419 = vmatprep.subr.mxu0 0.0
        %4420 = vmatpush1.msra.mxu0 %v3861
        %4421 = vmatprep.subr.mxu0 0.0
        %4422 = vmatpush1.msra.mxu0 %v3863
        %4423 = vmatprep.subr.mxu0 0.0
        %4424 = vmatpush1.msra.mxu0 %v3865
        %4425 = vmatprep.subr.mxu0 0.0
        %4426 = vmatpush1.msra.mxu0 %v3867
        %4427 = vmatprep.subr.mxu0 0.0
        %4428 = vmatpush1.msra.mxu0 %v3869
        %4429 = vmatprep.subr.mxu0 0.0
        %4430 = vmatpush1.msra.mxu0 %v3871
        %4431 = vmatprep.mubr.f32.mxu0 %v4259
        %4432 = vmatmul.mubr.f32.gmra.mrb[0].mxu0 %v4258
        %v4433 = vpop.f32.mrb[0].mxu0
        %v4434 = vadd.f32 %v4359, %v4433
        %v4435 = vpop.f32.mrb[0].mxu0
        %4436 = vmatprep.mubr.f32.mxu0 %v4277
        %4437 = vmatmul.mubr.f32.gmra.mrb[0].mxu0 %v4276
        %v4438 = vpop.f32.mrb[0].mxu0
        %v4439 = vadd.f32 %v4364, %v4438
        %v4440 = vpop.f32.mrb[0].mxu0
        %4441 = vdwg.mxu0
        %4442 = vmatprep.subr.mxu0 0.0
        %4443 = vmatpush1.msra.mxu0 %v3873
        %4444 = vmatprep.subr.mxu0 0.0
        %4445 = vmatpush1.msra.mxu0 %v3875
        %4446 = vmatprep.subr.mxu0 0.0
        %4447 = vmatpush1.msra.mxu0 %v3877
        %4448 = vmatprep.subr.mxu0 0.0
        %4449 = vmatpush1.msra.mxu0 %v3879
        %4450 = vmatprep.subr.mxu0 0.0
        %4451 = vmatpush1.msra.mxu0 %v3881
        %4452 = vmatprep.subr.mxu0 0.0
        %4453 = vmatpush1.msra.mxu0 %v3883
        %4454 = vmatprep.subr.mxu0 0.0
        %4455 = vmatpush1.msra.mxu0 %v3885
        %4456 = vmatprep.subr.mxu0 0.0
        %4457 = vmatpush1.msra.mxu0 %v3887
        %4458 = vmatprep.subr.mxu0 0.0
        %4459 = vmatpush1.msra.mxu0 %v3889
        %4460 = vmatprep.subr.mxu0 0.0
        %4461 = vmatpush1.msra.mxu0 %v3891
        %4462 = vmatprep.subr.mxu0 0.0
        %4463 = vmatpush1.msra.mxu0 %v3893
        %4464 = vmatprep.subr.mxu0 0.0
        %4465 = vmatpush1.msra.mxu0 %v3895
        %4466 = vmatprep.subr.mxu0 0.0
        %4467 = vmatpush1.msra.mxu0 %v3897
        %4468 = vmatprep.subr.mxu0 0.0
        %4469 = vmatpush1.msra.mxu0 %v3899
        %4470 = vmatprep.subr.mxu0 0.0
        %4471 = vmatpush1.msra.mxu0 %v3901
        %4472 = vmatprep.subr.mxu0 0.0
        %4473 = vmatpush1.msra.mxu0 %v3903
        %4474 = vmatprep.subr.mxu0 0.0
        %4475 = vmatpush1.msra.mxu0 %v3905
        %4476 = vmatprep.subr.mxu0 0.0
        %4477 = vmatpush1.msra.mxu0 %v3907
        %4478 = vmatprep.subr.mxu0 0.0
        %4479 = vmatpush1.msra.mxu0 %v3909
        %4480 = vmatprep.subr.mxu0 0.0
        %4481 = vmatpush1.msra.mxu0 %v3911
        %4482 = vmatprep.subr.mxu0 0.0
        %4483 = vmatpush1.msra.mxu0 %v3913
        %4484 = vmatprep.subr.mxu0 0.0
        %4485 = vmatpush1.msra.mxu0 %v3915
        %4486 = vmatprep.subr.mxu0 0.0
        %4487 = vmatpush1.msra.mxu0 %v3917
        %4488 = vmatprep.subr.mxu0 0.0
        %4489 = vmatpush1.msra.mxu0 %v3919
        %4490 = vmatprep.subr.mxu0 0.0
        %4491 = vmatpush1.msra.mxu0 %v3921
        %4492 = vmatprep.subr.mxu0 0.0
        %4493 = vmatpush1.msra.mxu0 %v3923
        %4494 = vmatprep.subr.mxu0 0.0
        %4495 = vmatpush1.msra.mxu0 %v3925
        %4496 = vmatprep.subr.mxu0 0.0
        %4497 = vmatpush1.msra.mxu0 %v3927
        %4498 = vmatprep.subr.mxu0 0.0
        %4499 = vmatpush1.msra.mxu0 %v3929
        %4500 = vmatprep.subr.mxu0 0.0
        %4501 = vmatpush1.msra.mxu0 %v3931
        %4502 = vmatprep.subr.mxu0 0.0
        %4503 = vmatpush1.msra.mxu0 %v3933
        %4504 = vmatprep.subr.mxu0 0.0
        %4505 = vmatpush1.msra.mxu0 %v3935
        %4506 = vmatprep.mubr.f32.mxu0 %v4261
        %4507 = vmatmul.mubr.f32.gmra.mrb[0].mxu0 %v4260
        %v4508 = vpop.f32.mrb[0].mxu0
        %v4509 = vadd.f32 %v4434, %v4508
        %v4510 = vpop.f32.mrb[0].mxu0
        %4511 = vmatprep.mubr.f32.mxu0 %v4279
        %4512 = vmatmul.mubr.f32.gmra.mrb[0].mxu0 %v4278
        %v4513 = vpop.f32.mrb[0].mxu0
        %v4514 = vadd.f32 %v4439, %v4513
        %v4515 = vpop.f32.mrb[0].mxu0
        %4516 = vdwg.mxu0
        %4517 = vmatprep.subr.mxu0 0.0
        %4518 = vmatpush1.msra.mxu0 %v3937
        %4519 = vmatprep.subr.mxu0 0.0
        %4520 = vmatpush1.msra.mxu0 %v3939
        %4521 = vmatprep.subr.mxu0 0.0
        %4522 = vmatpush1.msra.mxu0 %v3941
        %4523 = vmatprep.subr.mxu0 0.0
        %4524 = vmatpush1.msra.mxu0 %v3943
        %4525 = vmatprep.subr.mxu0 0.0
        %4526 = vmatpush1.msra.mxu0 %v3945
        %4527 = vmatprep.subr.mxu0 0.0
        %4528 = vmatpush1.msra.mxu0 %v3947
        %4529 = vmatprep.subr.mxu0 0.0
        %4530 = vmatpush1.msra.mxu0 %v3949
        %4531 = vmatprep.subr.mxu0 0.0
        %4532 = vmatpush1.msra.mxu0 %v3951
        %4533 = vmatprep.subr.mxu0 0.0
        %4534 = vmatpush1.msra.mxu0 %v3953
        %4535 = vmatprep.subr.mxu0 0.0
        %4536 = vmatpush1.msra.mxu0 %v3955
        %4537 = vmatprep.subr.mxu0 0.0
        %4538 = vmatpush1.msra.mxu0 %v3957
        %4539 = vmatprep.subr.mxu0 0.0
        %4540 = vmatpush1.msra.mxu0 %v3959
        %4541 = vmatprep.subr.mxu0 0.0
        %4542 = vmatpush1.msra.mxu0 %v3961
        %4543 = vmatprep.subr.mxu0 0.0
        %4544 = vmatpush1.msra.mxu0 %v3963
        %4545 = vmatprep.subr.mxu0 0.0
        %4546 = vmatpush1.msra.mxu0 %v3965
        %4547 = vmatprep.subr.mxu0 0.0
        %4548 = vmatpush1.msra.mxu0 %v3967
        %4549 = vmatprep.subr.mxu0 0.0
        %4550 = vmatpush1.msra.mxu0 %v3969
        %4551 = vmatprep.subr.mxu0 0.0
        %4552 = vmatpush1.msra.mxu0 %v3971
        %4553 = vmatprep.subr.mxu0 0.0
        %4554 = vmatpush1.msra.mxu0 %v3973
        %4555 = vmatprep.subr.mxu0 0.0
        %4556 = vmatpush1.msra.mxu0 %v3975
        %4557 = vmatprep.subr.mxu0 0.0
        %4558 = vmatpush1.msra.mxu0 %v3977
        %4559 = vmatprep.subr.mxu0 0.0
        %4560 = vmatpush1.msra.mxu0 %v3979
        %4561 = vmatprep.subr.mxu0 0.0
        %4562 = vmatpush1.msra.mxu0 %v3981
        %4563 = vmatprep.subr.mxu0 0.0
        %4564 = vmatpush1.msra.mxu0 %v3983
        %4565 = vmatprep.subr.mxu0 0.0
        %4566 = vmatpush1.msra.mxu0 %v3985
        %4567 = vmatprep.subr.mxu0 0.0
        %4568 = vmatpush1.msra.mxu0 %v3987
        %4569 = vmatprep.subr.mxu0 0.0
        %4570 = vmatpush1.msra.mxu0 %v3989
        %4571 = vmatprep.subr.mxu0 0.0
        %4572 = vmatpush1.msra.mxu0 %v3991
        %4573 = vmatprep.subr.mxu0 0.0
        %4574 = vmatpush1.msra.mxu0 %v3993
        %4575 = vmatprep.subr.mxu0 0.0
        %4576 = vmatpush1.msra.mxu0 %v3995
        %4577 = vmatprep.subr.mxu0 0.0
        %4578 = vmatpush1.msra.mxu0 %v3997
        %4579 = vmatprep.subr.mxu0 0.0
        %4580 = vmatpush1.msra.mxu0 %v3999
        %4581 = vmatprep.mubr.f32.mxu0 %v4263
        %4582 = vmatmul.mubr.f32.gmra.mrb[0].mxu0 %v4262
        %v4583 = vpop.f32.mrb[0].mxu0
        %v4584 = vadd.f32 %v4509, %v4583
        %v4585 = vpop.f32.mrb[0].mxu0
        %4586 = vmatprep.mubr.f32.mxu0 %v4281
        %4587 = vmatmul.mubr.f32.gmra.mrb[0].mxu0 %v4280
        %v4588 = vpop.f32.mrb[0].mxu0
        %v4589 = vadd.f32 %v4514, %v4588
        %v4590 = vpop.f32.mrb[0].mxu0
        %4591 = vdwg.mxu0
        %4592 = vmatprep.subr.mxu0 0.0
        %4593 = vmatpush1.msra.mxu0 %v3648
        %4594 = vmatprep.subr.mxu0 0.0
        %4595 = vmatpush1.msra.mxu0 %v3649
        %4596 = vmatprep.subr.mxu0 0.0
        %4597 = vmatpush1.msra.mxu0 %v3650
        %4598 = vmatprep.subr.mxu0 0.0
        %4599 = vmatpush1.msra.mxu0 %v3651
        %4600 = vmatprep.subr.mxu0 0.0
        %4601 = vmatpush1.msra.mxu0 %v3652
        %4602 = vmatprep.subr.mxu0 0.0
        %4603 = vmatpush1.msra.mxu0 %v3653
        %4604 = vmatprep.subr.mxu0 0.0
        %4605 = vmatpush1.msra.mxu0 %v3654
        %4606 = vmatprep.subr.mxu0 0.0
        %4607 = vmatpush1.msra.mxu0 %v3655
        %4608 = vmatprep.subr.mxu0 0.0
        %4609 = vmatpush1.msra.mxu0 %v3656
        %4610 = vmatprep.subr.mxu0 0.0
        %4611 = vmatpush1.msra.mxu0 %v3657
        %4612 = vmatprep.subr.mxu0 0.0
        %4613 = vmatpush1.msra.mxu0 %v3658
        %4614 = vmatprep.subr.mxu0 0.0
        %4615 = vmatpush1.msra.mxu0 %v3659
        %4616 = vmatprep.subr.mxu0 0.0
        %4617 = vmatpush1.msra.mxu0 %v3660
        %4618 = vmatprep.subr.mxu0 0.0
        %4619 = vmatpush1.msra.mxu0 %v3661
        %4620 = vmatprep.subr.mxu0 0.0
        %4621 = vmatpush1.msra.mxu0 %v3662
        %4622 = vmatprep.subr.mxu0 0.0
        %4623 = vmatpush1.msra.mxu0 %v3663
        %4624 = vmatprep.subr.mxu0 0.0
        %4625 = vmatpush1.msra.mxu0 %v3664
        %4626 = vmatprep.subr.mxu0 0.0
        %4627 = vmatpush1.msra.mxu0 %v3665
        %4628 = vmatprep.subr.mxu0 0.0
        %4629 = vmatpush1.msra.mxu0 %v3666
        %4630 = vmatprep.subr.mxu0 0.0
        %4631 = vmatpush1.msra.mxu0 %v3667
        %4632 = vmatprep.subr.mxu0 0.0
        %4633 = vmatpush1.msra.mxu0 %v3668
        %4634 = vmatprep.subr.mxu0 0.0
        %4635 = vmatpush1.msra.mxu0 %v3669
        %4636 = vmatprep.subr.mxu0 0.0
        %4637 = vmatpush1.msra.mxu0 %v3670
        %4638 = vmatprep.subr.mxu0 0.0
        %4639 = vmatpush1.msra.mxu0 %v3671
        %4640 = vmatprep.subr.mxu0 0.0
        %4641 = vmatpush1.msra.mxu0 %v3672
        %4642 = vmatprep.subr.mxu0 0.0
        %4643 = vmatpush1.msra.mxu0 %v3673
        %4644 = vmatprep.subr.mxu0 0.0
        %4645 = vmatpush1.msra.mxu0 %v3674
        %4646 = vmatprep.subr.mxu0 0.0
        %4647 = vmatpush1.msra.mxu0 %v3675
        %4648 = vmatprep.subr.mxu0 0.0
        %4649 = vmatpush1.msra.mxu0 %v3676
        %4650 = vmatprep.subr.mxu0 0.0
        %4651 = vmatpush1.msra.mxu0 %v3677
        %4652 = vmatprep.subr.mxu0 0.0
        %4653 = vmatpush1.msra.mxu0 %v3678
        %4654 = vmatprep.subr.mxu0 0.0
        %4655 = vmatpush1.msra.mxu0 %v3679
        %4656 = vmatprep.mubr.f32.mxu0 %v4265
        %4657 = vmatmul.mubr.f32.gmra.mrb[0].mxu0 %v4264
        %v4658 = vpop.f32.mrb[0].mxu0
        %v4659 = vadd.f32 %v4584, %v4658
        %v4660 = vpop.f32.mrb[0].mxu0
        %4661 = vmatprep.mubr.f32.mxu0 %v4283
        %4662 = vmatmul.mubr.f32.gmra.mrb[0].mxu0 %v4282
        %v4663 = vpop.f32.mrb[0].mxu0
        %v4664 = vadd.f32 %v4589, %v4663
        %v4665 = vpop.f32.mrb[0].mxu0
        %4666 = vdwg.mxu0
        %4667 = vmatprep.subr.mxu0 0.0
        %4668 = vmatpush1.msra.mxu0 %v4001
        %4669 = vmatprep.subr.mxu0 0.0
        %4670 = vmatpush1.msra.mxu0 %v4003
        %4671 = vmatprep.subr.mxu0 0.0
        %4672 = vmatpush1.msra.mxu0 %v4005
        %4673 = vmatprep.subr.mxu0 0.0
        %4674 = vmatpush1.msra.mxu0 %v4007
        %4675 = vmatprep.subr.mxu0 0.0
        %4676 = vmatpush1.msra.mxu0 %v4009
        %4677 = vmatprep.subr.mxu0 0.0
        %4678 = vmatpush1.msra.mxu0 %v4011
        %4679 = vmatprep.subr.mxu0 0.0
        %4680 = vmatpush1.msra.mxu0 %v4013
        %4681 = vmatprep.subr.mxu0 0.0
        %4682 = vmatpush1.msra.mxu0 %v4015
        %4683 = vmatprep.subr.mxu0 0.0
        %4684 = vmatpush1.msra.mxu0 %v4017
        %4685 = vmatprep.subr.mxu0 0.0
        %4686 = vmatpush1.msra.mxu0 %v4019
        %4687 = vmatprep.subr.mxu0 0.0
        %4688 = vmatpush1.msra.mxu0 %v4021
        %4689 = vmatprep.subr.mxu0 0.0
        %4690 = vmatpush1.msra.mxu0 %v4023
        %4691 = vmatprep.subr.mxu0 0.0
        %4692 = vmatpush1.msra.mxu0 %v4025
        %4693 = vmatprep.subr.mxu0 0.0
        %4694 = vmatpush1.msra.mxu0 %v4027
        %4695 = vmatprep.subr.mxu0 0.0
        %4696 = vmatpush1.msra.mxu0 %v4029
        %4697 = vmatprep.subr.mxu0 0.0
        %4698 = vmatpush1.msra.mxu0 %v4031
        %4699 = vmatprep.subr.mxu0 0.0
        %4700 = vmatpush1.msra.mxu0 %v4033
        %4701 = vmatprep.subr.mxu0 0.0
        %4702 = vmatpush1.msra.mxu0 %v4035
        %4703 = vmatprep.subr.mxu0 0.0
        %4704 = vmatpush1.msra.mxu0 %v4037
        %4705 = vmatprep.subr.mxu0 0.0
        %4706 = vmatpush1.msra.mxu0 %v4039
        %4707 = vmatprep.subr.mxu0 0.0
        %4708 = vmatpush1.msra.mxu0 %v4041
        %4709 = vmatprep.subr.mxu0 0.0
        %4710 = vmatpush1.msra.mxu0 %v4043
        %4711 = vmatprep.subr.mxu0 0.0
        %4712 = vmatpush1.msra.mxu0 %v4045
        %4713 = vmatprep.subr.mxu0 0.0
        %4714 = vmatpush1.msra.mxu0 %v4047
        %4715 = vmatprep.subr.mxu0 0.0
        %4716 = vmatpush1.msra.mxu0 %v4049
        %4717 = vmatprep.subr.mxu0 0.0
        %4718 = vmatpush1.msra.mxu0 %v4051
        %4719 = vmatprep.subr.mxu0 0.0
        %4720 = vmatpush1.msra.mxu0 %v4053
        %4721 = vmatprep.subr.mxu0 0.0
        %4722 = vmatpush1.msra.mxu0 %v4055
        %4723 = vmatprep.subr.mxu0 0.0
        %4724 = vmatpush1.msra.mxu0 %v4057
        %4725 = vmatprep.subr.mxu0 0.0
        %4726 = vmatpush1.msra.mxu0 %v4059
        %4727 = vmatprep.subr.mxu0 0.0
        %4728 = vmatpush1.msra.mxu0 %v4061
        %4729 = vmatprep.subr.mxu0 0.0
        %4730 = vmatpush1.msra.mxu0 %v4063
        %4731 = vmatprep.mubr.f32.mxu0 %v4267
        %4732 = vmatmul.mubr.f32.gmra.mrb[0].mxu0 %v4266
        %v4733 = vpop.f32.mrb[0].mxu0
        %v4734 = vadd.f32 %v4659, %v4733
        %v4735 = vpop.f32.mrb[0].mxu0
        %4736 = vmatprep.mubr.f32.mxu0 %v4285
        %4737 = vmatmul.mubr.f32.gmra.mrb[0].mxu0 %v4284
        %v4738 = vpop.f32.mrb[0].mxu0
        %v4739 = vadd.f32 %v4664, %v4738
        %v4740 = vpop.f32.mrb[0].mxu0
        %4741 = vdwg.mxu0
        %4742 = vmatprep.subr.mxu0 0.0
        %4743 = vmatpush1.msra.mxu0 %v4065
        %4744 = vmatprep.subr.mxu0 0.0
        %4745 = vmatpush1.msra.mxu0 %v4067
        %4746 = vmatprep.subr.mxu0 0.0
        %4747 = vmatpush1.msra.mxu0 %v4069
        %4748 = vmatprep.subr.mxu0 0.0
        %4749 = vmatpush1.msra.mxu0 %v4071
        %4750 = vmatprep.subr.mxu0 0.0
        %4751 = vmatpush1.msra.mxu0 %v4073
        %4752 = vmatprep.subr.mxu0 0.0
        %4753 = vmatpush1.msra.mxu0 %v4075
        %4754 = vmatprep.subr.mxu0 0.0
        %4755 = vmatpush1.msra.mxu0 %v4077
        %4756 = vmatprep.subr.mxu0 0.0
        %4757 = vmatpush1.msra.mxu0 %v4079
        %4758 = vmatprep.subr.mxu0 0.0
        %4759 = vmatpush1.msra.mxu0 %v4081
        %4760 = vmatprep.subr.mxu0 0.0
        %4761 = vmatpush1.msra.mxu0 %v4083
        %4762 = vmatprep.subr.mxu0 0.0
        %4763 = vmatpush1.msra.mxu0 %v4085
        %4764 = vmatprep.subr.mxu0 0.0
        %4765 = vmatpush1.msra.mxu0 %v4087
        %4766 = vmatprep.subr.mxu0 0.0
        %4767 = vmatpush1.msra.mxu0 %v4089
        %4768 = vmatprep.subr.mxu0 0.0
        %4769 = vmatpush1.msra.mxu0 %v4091
        %4770 = vmatprep.subr.mxu0 0.0
        %4771 = vmatpush1.msra.mxu0 %v4093
        %4772 = vmatprep.subr.mxu0 0.0
        %4773 = vmatpush1.msra.mxu0 %v4095
        %4774 = vmatprep.subr.mxu0 0.0
        %4775 = vmatpush1.msra.mxu0 %v4097
        %4776 = vmatprep.subr.mxu0 0.0
        %4777 = vmatpush1.msra.mxu0 %v4099
        %4778 = vmatprep.subr.mxu0 0.0
        %4779 = vmatpush1.msra.mxu0 %v4101
        %4780 = vmatprep.subr.mxu0 0.0
        %4781 = vmatpush1.msra.mxu0 %v4103
        %4782 = vmatprep.subr.mxu0 0.0
        %4783 = vmatpush1.msra.mxu0 %v4105
        %4784 = vmatprep.subr.mxu0 0.0
        %4785 = vmatpush1.msra.mxu0 %v4107
        %4786 = vmatprep.subr.mxu0 0.0
        %4787 = vmatpush1.msra.mxu0 %v4109
        %4788 = vmatprep.subr.mxu0 0.0
        %4789 = vmatpush1.msra.mxu0 %v4111
        %4790 = vmatprep.subr.mxu0 0.0
        %4791 = vmatpush1.msra.mxu0 %v4113
        %4792 = vmatprep.subr.mxu0 0.0
        %4793 = vmatpush1.msra.mxu0 %v4115
        %4794 = vmatprep.subr.mxu0 0.0
        %4795 = vmatpush1.msra.mxu0 %v4117
        %4796 = vmatprep.subr.mxu0 0.0
        %4797 = vmatpush1.msra.mxu0 %v4119
        %4798 = vmatprep.subr.mxu0 0.0
        %4799 = vmatpush1.msra.mxu0 %v4121
        %4800 = vmatprep.subr.mxu0 0.0
        %4801 = vmatpush1.msra.mxu0 %v4123
        %4802 = vmatprep.subr.mxu0 0.0
        %4803 = vmatpush1.msra.mxu0 %v4125
        %4804 = vmatprep.subr.mxu0 0.0
        %4805 = vmatpush1.msra.mxu0 %v4127
        %4806 = vmatprep.mubr.f32.mxu0 %v4269
        %4807 = vmatmul.mubr.f32.gmra.mrb[0].mxu0 %v4268
        %v4808 = vpop.f32.mrb[0].mxu0
        %v4809 = vadd.f32 %v4734, %v4808
        %v4810 = vpop.f32.mrb[0].mxu0
        %4811 = vmatprep.mubr.f32.mxu0 %v4287
        %4812 = vmatmul.mubr.f32.gmra.mrb[0].mxu0 %v4286
        %v4813 = vpop.f32.mrb[0].mxu0
        %v4814 = vadd.f32 %v4739, %v4813
        %v4815 = vpop.f32.mrb[0].mxu0
        %4816 = vdwg.mxu0
        %4817 = vmatprep.subr.mxu0 0.0
        %4818 = vmatpush1.msra.mxu0 %v4129
        %4819 = vmatprep.subr.mxu0 0.0
        %4820 = vmatpush1.msra.mxu0 %v4131
        %4821 = vmatprep.subr.mxu0 0.0
        %4822 = vmatpush1.msra.mxu0 %v4133
        %4823 = vmatprep.subr.mxu0 0.0
        %4824 = vmatpush1.msra.mxu0 %v4135
        %4825 = vmatprep.subr.mxu0 0.0
        %4826 = vmatpush1.msra.mxu0 %v4137
        %4827 = vmatprep.subr.mxu0 0.0
        %4828 = vmatpush1.msra.mxu0 %v4139
        %4829 = vmatprep.subr.mxu0 0.0
        %4830 = vmatpush1.msra.mxu0 %v4141
        %4831 = vmatprep.subr.mxu0 0.0
        %4832 = vmatpush1.msra.mxu0 %v4143
        %4833 = vmatprep.subr.mxu0 0.0
        %4834 = vmatpush1.msra.mxu0 %v4145
        %4835 = vmatprep.subr.mxu0 0.0
        %4836 = vmatpush1.msra.mxu0 %v4147
        %4837 = vmatprep.subr.mxu0 0.0
        %4838 = vmatpush1.msra.mxu0 %v4149
        %4839 = vmatprep.subr.mxu0 0.0
        %4840 = vmatpush1.msra.mxu0 %v4151
        %4841 = vmatprep.subr.mxu0 0.0
        %4842 = vmatpush1.msra.mxu0 %v4153
        %4843 = vmatprep.subr.mxu0 0.0
        %4844 = vmatpush1.msra.mxu0 %v4155
        %4845 = vmatprep.subr.mxu0 0.0
        %4846 = vmatpush1.msra.mxu0 %v4157
        %4847 = vmatprep.subr.mxu0 0.0
        %4848 = vmatpush1.msra.mxu0 %v4159
        %4849 = vmatprep.subr.mxu0 0.0
        %4850 = vmatpush1.msra.mxu0 %v4161
        %4851 = vmatprep.subr.mxu0 0.0
        %4852 = vmatpush1.msra.mxu0 %v4163
        %4853 = vmatprep.subr.mxu0 0.0
        %4854 = vmatpush1.msra.mxu0 %v4165
        %4855 = vmatprep.subr.mxu0 0.0
        %4856 = vmatpush1.msra.mxu0 %v4167
        %4857 = vmatprep.subr.mxu0 0.0
        %4858 = vmatpush1.msra.mxu0 %v4169
        %4859 = vmatprep.subr.mxu0 0.0
        %4860 = vmatpush1.msra.mxu0 %v4171
        %4861 = vmatprep.subr.mxu0 0.0
        %4862 = vmatpush1.msra.mxu0 %v4173
        %4863 = vmatprep.subr.mxu0 0.0
        %4864 = vmatpush1.msra.mxu0 %v4175
        %4865 = vmatprep.subr.mxu0 0.0
        %4866 = vmatpush1.msra.mxu0 %v4177
        %4867 = vmatprep.subr.mxu0 0.0
        %4868 = vmatpush1.msra.mxu0 %v4179
        %4869 = vmatprep.subr.mxu0 0.0
        %4870 = vmatpush1.msra.mxu0 %v4181
        %4871 = vmatprep.subr.mxu0 0.0
        %4872 = vmatpush1.msra.mxu0 %v4183
        %4873 = vmatprep.subr.mxu0 0.0
        %4874 = vmatpush1.msra.mxu0 %v4185
        %4875 = vmatprep.subr.mxu0 0.0
        %4876 = vmatpush1.msra.mxu0 %v4187
        %4877 = vmatprep.subr.mxu0 0.0
        %4878 = vmatpush1.msra.mxu0 %v4189
        %4879 = vmatprep.subr.mxu0 0.0
        %4880 = vmatpush1.msra.mxu0 %v4191
        %4881 = vmatprep.mubr.f32.mxu0 %v4271
        %4882 = vmatmul.mubr.f32.gmra.mrb[0].mxu0 %v4270
        %v4883 = vpop.f32.mrb[0].mxu0
        %v4884 = vadd.f32 %v4809, %v4883
        %v4885 = vpop.f32.mrb[0].mxu0
        %4886 = vmatprep.mubr.f32.mxu0 %v4289
        %4887 = vmatmul.mubr.f32.gmra.mrb[0].mxu0 %v4288
        %v4888 = vpop.f32.mrb[0].mxu0
        %v4889 = vadd.f32 %v4814, %v4888
        %v4890 = vpop.f32.mrb[0].mxu0
        %4891 = vdwg.mxu0
        %4892 = vmatprep.subr.mxu0 0.0
        %4893 = vmatpush1.msra.mxu0 %v4193
        %4894 = vmatprep.subr.mxu0 0.0
        %4895 = vmatpush1.msra.mxu0 %v4195
        %4896 = vmatprep.subr.mxu0 0.0
        %4897 = vmatpush1.msra.mxu0 %v4197
        %4898 = vmatprep.subr.mxu0 0.0
        %4899 = vmatpush1.msra.mxu0 %v4199
        %4900 = vmatprep.subr.mxu0 0.0
        %4901 = vmatpush1.msra.mxu0 %v4201
        %4902 = vmatprep.subr.mxu0 0.0
        %4903 = vmatpush1.msra.mxu0 %v4203
        %4904 = vmatprep.subr.mxu0 0.0
        %4905 = vmatpush1.msra.mxu0 %v4205
        %4906 = vmatprep.subr.mxu0 0.0
        %4907 = vmatpush1.msra.mxu0 %v4207
        %4908 = vmatprep.subr.mxu0 0.0
        %4909 = vmatpush1.msra.mxu0 %v4209
        %4910 = vmatprep.subr.mxu0 0.0
        %4911 = vmatpush1.msra.mxu0 %v4211
        %4912 = vmatprep.subr.mxu0 0.0
        %4913 = vmatpush1.msra.mxu0 %v4213
        %4914 = vmatprep.subr.mxu0 0.0
        %4915 = vmatpush1.msra.mxu0 %v4215
        %4916 = vmatprep.subr.mxu0 0.0
        %4917 = vmatpush1.msra.mxu0 %v4217
        %4918 = vmatprep.subr.mxu0 0.0
        %4919 = vmatpush1.msra.mxu0 %v4219
        %4920 = vmatprep.subr.mxu0 0.0
        %4921 = vmatpush1.msra.mxu0 %v4221
        %4922 = vmatprep.subr.mxu0 0.0
        %4923 = vmatpush1.msra.mxu0 %v4223
        %4924 = vmatprep.subr.mxu0 0.0
        %4925 = vmatpush1.msra.mxu0 %v4225
        %4926 = vmatprep.subr.mxu0 0.0
        %4927 = vmatpush1.msra.mxu0 %v4227
        %4928 = vmatprep.subr.mxu0 0.0
        %4929 = vmatpush1.msra.mxu0 %v4229
        %4930 = vmatprep.subr.mxu0 0.0
        %4931 = vmatpush1.msra.mxu0 %v4231
        %4932 = vmatprep.subr.mxu0 0.0
        %4933 = vmatpush1.msra.mxu0 %v4233
        %4934 = vmatprep.subr.mxu0 0.0
        %4935 = vmatpush1.msra.mxu0 %v4235
        %4936 = vmatprep.subr.mxu0 0.0
        %4937 = vmatpush1.msra.mxu0 %v4237
        %4938 = vmatprep.subr.mxu0 0.0
        %4939 = vmatpush1.msra.mxu0 %v4239
        %4940 = vmatprep.subr.mxu0 0.0
        %4941 = vmatpush1.msra.mxu0 %v4241
        %4942 = vmatprep.subr.mxu0 0.0
        %4943 = vmatpush1.msra.mxu0 %v4243
        %4944 = vmatprep.subr.mxu0 0.0
        %4945 = vmatpush1.msra.mxu0 %v4245
        %4946 = vmatprep.subr.mxu0 0.0
        %4947 = vmatpush1.msra.mxu0 %v4247
        %4948 = vmatprep.subr.mxu0 0.0
        %4949 = vmatpush1.msra.mxu0 %v4249
        %4950 = vmatprep.subr.mxu0 0.0
        %4951 = vmatpush1.msra.mxu0 %v4251
        %4952 = vmatprep.subr.mxu0 0.0
        %4953 = vmatpush1.msra.mxu0 %v4253
        %4954 = vmatprep.subr.mxu0 0.0
        %4955 = vmatpush1.msra.mxu0 %v4255
        %4956 = vmatprep.mubr.f32.mxu0 %v4273
        %4957 = vmatmul.mubr.f32.gmra.mrb[0].mxu0 %v4272
        %v4958 = vpop.f32.mrb[0].mxu0
        %v4959 = vadd.f32 %v4884, %v4958
        %v4960 = vpop.f32.mrb[0].mxu0
        %4961 = vmatprep.mubr.f32.mxu0 %v4291
        %4962 = vmatmul.mubr.f32.gmra.mrb[0].mxu0 %v4290
        %v4963 = vpop.f32.mrb[0].mxu0
        %v4964 = vadd.f32 %v4889, %v4963
        %v4965 = vpop.f32.mrb[0].mxu0
        %4966 = vdwg.mxu0
        %4967 = vst [vmem:[%s342] sm:$0xff] %v4959
        %4968 = vst [vmem:[%s342 + $0x8] sm:$0xff] %v4964
        %v4969 = vld [vmem:[%s337] sm:$0xff]
        %v4970 = vld [vmem:[%s337 + $0x8] sm:$0xff]
        %v4971 = vsub.f32 %v4969, %v4959
        %v4972 = vsub.f32 %v4970, %v4964
        %v4973 = vsel %vm3647, %v4971, 0.0
        %v4974 = vsel %vm3647, %v4972, 0.0
        %v4975 = vmul.f32 %v4973, %v4973
        %v4976 = vmul.f32 %v4974, %v4974
        %4977 = vadd.xlane.f32.xlu0 %v4975
        %v4978 = vpop.xlane.xlu0 %4977
        %4979 = vadd.xlane.f32.xlu0 %v4976
        %v4980 = vpop.xlane.xlu0 %4979
        %v4981 = vadd.f32 %v4978, %v4980
        %v4982 = vrot.slane %v4981, 4
        %v4983 = vadd.f32 %v4981, %v4982
        %v4984 = vrot.slane %v4983, 2
        %v4985 = vadd.f32 %v4983, %v4984
        %v4986 = vrot.slane %v4985, 1
        %v4987 = vadd.f32 %v4985, %v4986
        %vm4988 = vcmask 0
        %4989 = vst.msk [vmem:[%s345] sm:$0x1] %vm4988, %v4987
        %p4990 = scmp.lt.s32.totalorder %s21, 1
        %s4991 = scalar_select %p4990, %s21, 1
        %s4992 = smul.addr %s4991, 2
        %s4993 = smul.addr %s4992, 8
        %s4994 = scalar_lea.vmem %s6, %s4993
        %p4995 = scmp.lt.s32.totalorder %s21, 1
        %s4996 = scalar_select %p4995, %s21, 1
        %s4997 = scalar_lea.vmem %s7, %s4996
        // Predicated region
        $region57: #{decoder_a_forward.1} parent=43 // pred_check
          %p4998 = pneg %p175
        $region58: #{decoder_a_forward.1} parent=43 // pred_check_branch
          %5000 = sbr.rel (%p4998) target = $region60
        $region59: #{decoder_a_forward.1} parent=43 // pred_region
          _
        $region60: #{decoder_a_forward.1} parent=43 // pred_fallthru
          _
        // Predicated region
        $region61: #{decoder_a_forward.1} parent=43 // pred_check
          %p5001 = pneg %p201
        $region62: #{decoder_a_forward.1} parent=43 // pred_check_branch
          %5003 = sbr.rel (%p5001) target = $region64
        $region63: #{decoder_a_forward.1} parent=43 // pred_region
          _
        $region64: #{decoder_a_forward.1} parent=43 // pred_fallthru
          _
      $region44: #{decoder_a_forward.1} parent=5 // pred_fallthru
        _
      %p5004 = scmp.le.s32.totalorder 2, %s16
      // Predicated region
      $region65: #{decoder_a_forward.1} parent=5 // pred_check
        %p5005 = pneg %p5004
      $region66: #{decoder_a_forward.1} parent=5 // pred_check_branch
        %5007 = sbr.rel (%p5005) target = $region68
      $region67: #{decoder_a_forward.1} parent=5 // pred_region
        %s5008 = ssub.s32 %s16, 2
        // Predicated region
        $region69: #{decoder_a_forward.1} parent=67 // pred_check
          %p5009 = pneg %p181
        $region70: #{decoder_a_forward.1} parent=67 // pred_check_branch
          %5011 = sbr.rel (%p5009) target = $region72
        $region71: #{decoder_a_forward.1} parent=67 // pred_region
          %p5012 = scmp.lt.s32.totalorder %s22, 1
          %s5013 = scalar_select %p5012, %s22, 1
          %s5014 = smul.addr %s5013, 2
          %s5015 = smul.addr %s5014, 8
          %s5016 = scalar_lea.vmem %s6, %s5015
        $region72: #{decoder_a_forward.1} parent=67 // pred_fallthru
          _
        // Predicated region
        $region73: #{decoder_a_forward.1} parent=67 // pred_check
          %p5017 = pneg %p207
        $region74: #{decoder_a_forward.1} parent=67 // pred_check_branch
          %5019 = sbr.rel (%p5017) target = $region76
        $region75: #{decoder_a_forward.1} parent=67 // pred_region
          %p5020 = scmp.lt.s32.totalorder %s22, 1
          %s5021 = scalar_select %p5020, %s22, 1
          %s5022 = scalar_lea.vmem %s7, %s5021
        $region76: #{decoder_a_forward.1} parent=67 // pred_fallthru
          _
      $region68: #{decoder_a_forward.1} parent=5 // pred_fallthru
        _
    $region6: #{decoder_a_forward.1} parent=1 // loop_footer
      %s20 = sadd.s32 1, %s16
    $region7: #{decoder_a_forward.1} parent=1 // loop_footer_branch
      %15 = sbr.rel target = $region3
    $region8: #{decoder_a_forward.1} parent=1 // loop_exit
      _
    %5023 = vsyncpa [#allocation3], 1
    %s5024 = scalar_lea.sflag [#allocation3], 1
    %5025 = vsyncpa %s5024, 1
    %5026 = vsyncpa [#allocation5], 1

</llo_original>
